<compile_context>
chip_gen: v7x
topology: tpu7x:2x2x1
jax: 0.10.0
libtpu: 0.0.40
codegen_flags: <defaults>
</compile_context>

<pallas_src>
import functools

import jax
import jax.numpy as jnp
from jax import lax
from jax.experimental import pallas as pl
from jax.experimental.pallas import tpu as pltpu

# Set to jnp.bfloat16 on v6e/v7x to halve conv HBM bytes and use the wide bf16
# MXU (accumulation stays f32, BN math stays f32).  Kept f32 for parity with
# the fp32 PyTorch reference.
CONV_INPUT_DTYPE = jnp.float32

ROW_TILE_CAP = 512  # row tile for the purely mem-bound elementwise kernel


# --------------------------------------------------------------------------- #
# Conv3d(3x3x3, pad=1) with fused BatchNorm batch-statistics epilogue
# --------------------------------------------------------------------------- #

def _conv3x3x3_tap_kernel(x_ref, w_ref, y_ref, sum_ref, ssq_ref, acc_ref):
    """One padded depth slice x one depth-tap of a 3x3x3 convolution.

    x_ref  : (1, 1, H+2, W+2, Cin)  padded input depth-slice d + kd
    w_ref  : (1, 9, Cin, Cout)      weights of depth-tap kd, (kh, kw)-major
    y_ref  : (1, 1, H*W, Cout)      conv output of slice d (written at last kd)
    sum/ssq: (1, 1, 1, Cout)        per-(n, d) BN partial statistics
    acc_ref: (H*W, Cout) f32        VMEM accumulator across the kd axis
    """
    kd = pl.program_id(2)

    @pl.when(kd == 0)
    def _():
        acc_ref[...] = jnp.zeros_like(acc_ref)

    xs = x_ref[0, 0]                         # (H+2, W+2, Cin)
    hp, wp, cin = xs.shape
    h, w = hp - 2, wp - 2

    contrib = None
    for kh in range(3):
        for kw in range(3):
            patch = xs[kh:kh + h, kw:kw + w, :].reshape(h * w, cin)
            tap = jnp.dot(patch, w_ref[0, kh * 3 + kw],
                          preferred_element_type=jnp.float32)
            contrib = tap if contrib is None else contrib + tap
    acc_ref[...] += contrib

    @pl.when(kd == pl.num_programs(2) - 1)
    def _():
        acc = acc_ref[...]                                   # (H*W, Cout) f32
        y_ref[...] = acc.reshape(1, 1, *acc.shape)
        s = jnp.sum(acc, axis=0, keepdims=True)              # (1, Cout)
        sq = jnp.sum(acc * acc, axis=0, keepdims=True)
        sum_ref[...] = s.reshape(1, 1, 1, -1)
        ssq_ref[...] = sq.reshape(1, 1, 1, -1)


def conv3d_3x3x3_with_bn_stats(x_ndhwc, w):
    """Conv3d(k=3, pad=1, no bias) + fused per-channel sum / sum-of-squares.

    x: (N, D, H, W, Cin); w: (3, 3, 3, Cin, Cout).
    Returns y (N, D, H, W, Cout) f32 and partial stats shaped (N, D, 1, Cout).
    """
    N, D, H, W, Cin = x_ndhwc.shape
    Cout = w.shape[-1]
    HW = H * W
    xp = jnp.pad(x_ndhwc, ((0, 0), (1, 1), (1, 1), (1, 1), (0, 0)))
    xp = xp.astype(CONV_INPUT_DTYPE)
    wt = w.reshape(3, 9, Cin, Cout).astype(CONV_INPUT_DTYPE)

    y, psum, pssq = pl.pallas_call(
        _conv3x3x3_tap_kernel,
        out_shape=(jax.ShapeDtypeStruct((N, D, HW, Cout), jnp.float32),
                   jax.ShapeDtypeStruct((N, D, 1, Cout), jnp.float32),
                   jax.ShapeDtypeStruct((N, D, 1, Cout), jnp.float32)),
        grid_spec=pltpu.PrefetchScalarGridSpec(
            num_scalar_prefetch=0,
            grid=(N, D, 3),
            in_specs=[
                pl.BlockSpec((1, 1, H + 2, W + 2, Cin),
                             lambda n, d, kd: (n, d + kd, 0, 0, 0)),
                pl.BlockSpec((1, 9, Cin, Cout),
                             lambda n, d, kd: (kd, 0, 0, 0)),
            ],
            out_specs=(
                pl.BlockSpec((1, 1, HW, Cout), lambda n, d, kd: (n, d, 0, 0)),
                pl.BlockSpec((1, 1, 1, Cout), lambda n, d, kd: (n, d, 0, 0)),
                pl.BlockSpec((1, 1, 1, Cout), lambda n, d, kd: (n, d, 0, 0)),
            ),
            scratch_shapes=[pltpu.VMEM((HW, Cout), jnp.float32)],
        ),
        compiler_params=pltpu.CompilerParams(
            dimension_semantics=("parallel", "parallel", "arbitrary")),
    )(xp, wt)
    return y.reshape(N, D, H, W, Cout), psum, pssq


# --------------------------------------------------------------------------- #
# BatchNorm finalize (tiny C-sized math, plain JAX)
# --------------------------------------------------------------------------- #

def bn_scale_shift(psum, pssq, count, gamma, beta, eps=1e-5):
    """Training-mode BatchNorm: batch mean / biased var -> per-channel scale/shift.

    Variance via E[x^2] - E[x]^2; everything was accumulated in f32 on-chip so
    the cancellation error is negligible at these magnitudes (clamped at 0)."""
    C = psum.shape[-1]
    s = jnp.sum(psum.reshape(-1, C), axis=0)
    sq = jnp.sum(pssq.reshape(-1, C), axis=0)
    mean = s / count
    var = jnp.maximum(sq / count - mean * mean, 0.0)
    scale = gamma / jnp.sqrt(var + eps)
    shift = beta - mean * scale
    return scale, shift


# --------------------------------------------------------------------------- #
# Fused normalize + ReLU (lane-dense)
# --------------------------------------------------------------------------- #

def _bn_act_kernel(y_ref, sc_ref, sh_ref, o_ref):
    o_ref[...] = jnp.maximum(y_ref[...] * sc_ref[...] + sh_ref[...], 0.0)


def _pick_row_tile(rows, cap=ROW_TILE_CAP):
    if rows <= cap:
        return rows
    for t in range(cap, 0, -1):
        if rows % t == 0 and t % 8 == 0:
            return t
    return rows  # single full block (always legal)


def bn_act(y2d, scale, shift):
    """Fused (y * scale + shift) -> ReLU on an (M, C) view.  When C < 128 the
    data is re-viewed as (M*C/128, 128) so stores are unmasked full-lane vst."""
    M, C = y2d.shape
    scale = scale.reshape(1, C).astype(jnp.float32)
    shift = shift.reshape(1, C).astype(jnp.float32)
    if C < 128 and 128 % C == 0 and M % (128 // C) == 0:
        rep = 128 // C
        yv = y2d.reshape(M // rep, 128)
        sc = jnp.tile(scale, (1, rep))
        sh = jnp.tile(shift, (1, rep))
    else:
        yv, sc, sh = y2d, scale, shift
    R, L = yv.shape
    tm = _pick_row_tile(R)
    out = pl.pallas_call(
        _bn_act_kernel,
        out_shape=jax.ShapeDtypeStruct((R, L), jnp.float32),
        grid_spec=pltpu.PrefetchScalarGridSpec(
            num_scalar_prefetch=0,
            grid=(R // tm,),
            in_specs=[
                pl.BlockSpec((tm, L), lambda i: (i, 0)),
                pl.BlockSpec((1, L), lambda i: (0, 0)),
                pl.BlockSpec((1, L), lambda i: (0, 0)),
            ],
            out_specs=pl.BlockSpec((tm, L), lambda i: (i, 0)),
        ),
        compiler_params=pltpu.CompilerParams(dimension_semantics=("parallel",)),
    )(yv, sc, sh)
    return out.reshape(M, C)


# --------------------------------------------------------------------------- #
# Fused normalize + ReLU + MaxPool3d(2)
# --------------------------------------------------------------------------- #

def _bn_act_pool_kernel(y_ref, sc_ref, sh_ref, obp_ref, op_ref):
    """Normalize+ReLU a (2, H, Wo, 2C) slab, write it, and 2x2x2 max-pool it.

    W is pre-merged with channels (last dim = 2*C) so out_before_pool stores
    are lane-dense and W-pooling is a static lane-slice max."""
    _, _, H, Wo, C2 = y_ref.shape
    C = C2 // 2
    Ho = H // 2
    y = y_ref[0]                                        # (2, H, Wo, 2C)
    a = jnp.maximum(y * sc_ref[...] + sh_ref[...], 0.0)
    obp_ref[...] = a.reshape(1, 2, H, Wo, C2)
    m = jnp.maximum(a[0], a[1])                         # depth pairs -> (H, Wo, 2C)
    m = jnp.max(m.reshape(Ho, 2, Wo, C2), axis=1)       # H pairs     -> (Ho, Wo, 2C)
    m = jnp.maximum(m[:, :, :C], m[:, :, C:])           # W pairs     -> (Ho, Wo, C)
    op_ref[...] = m.reshape(1, 1, Ho, Wo, C)


def bn_act_maxpool(y, scale, shift):
    """Fused BN-normalize + ReLU + nn.MaxPool3d(2).  y: (N, D, H, W, C).

    Returns (out_before_pool (N,D,H,W,C), pooled (N,D/2,H/2,W/2,C))."""
    N, D, H, W, C = y.shape
    # TODO(synk): odd D/H/W (floor pooling like nn.MaxPool3d(2)) is not handled.
    assert D % 2 == 0 and H % 2 == 0 and W % 2 == 0, "MaxPool3d(2) needs even dims"
    Do, Ho, Wo = D // 2, H // 2, W // 2
    C2 = 2 * C
    y_l = y.reshape(N, D, H, Wo, C2)                    # contiguous, free
    sc2 = jnp.tile(scale.reshape(1, C).astype(jnp.float32), (1, 2))
    sh2 = jnp.tile(shift.reshape(1, C).astype(jnp.float32), (1, 2))
    obp_l, pooled = pl.pallas_call(
        _bn_act_pool_kernel,
        out_shape=(jax.ShapeDtypeStruct((N, D, H, Wo, C2), jnp.float32),
                   jax.ShapeDtypeStruct((N, Do, Ho, Wo, C), jnp.float32)),
        grid_spec=pltpu.PrefetchScalarGridSpec(
            num_scalar_prefetch=0,
            grid=(N, Do),
            in_specs=[
                pl.BlockSpec((1, 2, H, Wo, C2), lambda n, p: (n, p, 0, 0, 0)),
                pl.BlockSpec((1, C2), lambda n, p: (0, 0)),
                pl.BlockSpec((1, C2), lambda n, p: (0, 0)),
            ],
            out_specs=(
                pl.BlockSpec((1, 2, H, Wo, C2), lambda n, p: (n, p, 0, 0, 0)),
                pl.BlockSpec((1, 1, Ho, Wo, C), lambda n, p: (n, p, 0, 0, 0)),
            ),
        ),
        compiler_params=pltpu.CompilerParams(
            dimension_semantics=("parallel", "parallel")),
    )(y_l, sc2, sh2)
    return obp_l.reshape(N, D, H, W, C), pooled


# --------------------------------------------------------------------------- #
# Module-level forward
# --------------------------------------------------------------------------- #

def luconv(x_ndhwc, w, b, gamma, beta, eps=1e-5):
    """Conv3d(3, pad=1) + BatchNorm3d (training-mode batch stats) + ReLU.
    The conv bias `b` cancels exactly under batch-stat BN and is never added."""
    del b
    y, psum, pssq = conv3d_3x3x3_with_bn_stats(x_ndhwc, w)
    N, D, H, W, C = y.shape
    count = jnp.float32(N * D * H * W)
    scale, shift = bn_scale_shift(psum, pssq, count, gamma, beta, eps)
    out = bn_act(y.reshape(N * D * H * W, C), scale, shift)
    return out.reshape(N, D, H, W, C)


def luconv_pool(x_ndhwc, w, b, gamma, beta, eps=1e-5):
    """LUConv followed by MaxPool3d(2) with normalize+ReLU+pool fused."""
    del b
    y, psum, pssq = conv3d_3x3x3_with_bn_stats(x_ndhwc, w)
    N, D, H, W, C = y.shape
    count = jnp.float32(N * D * H * W)
    scale, shift = bn_scale_shift(psum, pssq, count, gamma, beta, eps)
    return bn_act_maxpool(y, scale, shift)      # (out_before_pool, pooled)


def down_transition_forward_ndhwc(x_ndhwc, params, depth):
    h1 = luconv(x_ndhwc, *params["conv1"])
    if depth == 3:
        h2 = luconv(h1, *params["conv2"])
        return h2, h2
    out_before_pool, pooled = luconv_pool(h1, *params["conv2"])
    return pooled, out_before_pool


def down_transition_forward(x_ncdhw, params, depth):
    """PyTorch-layout wrapper: NCDHW in, (out, out_before_pool) NCDHW out.
    Callers that can consume NDHWC should call down_transition_forward_ndhwc
    directly and skip these boundary transposes (two full HBM passes each)."""
    x = jnp.transpose(x_ncdhw, (0, 2, 3, 4, 1))     # NCDHW -> NDHWC
    out, obp = down_transition_forward_ndhwc(x, params, depth)
    to_ncdhw = lambda a: jnp.transpose(a, (0, 4, 1, 2, 3))
    return to_ncdhw(out), to_ncdhw(obp)


def init_params(key, in_channel, depth):
    c1 = 32 * (2 ** depth)
    c2 = c1 * 2

    def conv_params(k, cin, cout):
        k1, k2 = jax.random.split(k)
        fan_in = cin * 27
        w = jax.random.normal(k1, (3, 3, 3, cin, cout), jnp.float32) / jnp.sqrt(fan_in)
        b = jax.random.uniform(k2, (cout,), jnp.float32, -0.1, 0.1)  # folded into BN
        gamma = jnp.ones((cout,), jnp.float32)       # BatchNorm weight init
        beta = jnp.zeros((cout,), jnp.float32)       # BatchNorm bias init
        return (w, b, gamma, beta)

    k1, k2 = jax.random.split(key)
    return {"conv1": conv_params(k1, in_channel, c1),
            "conv2": conv_params(k2, c1, c2)}


# --------------------------------------------------------------------------- #
# Pure-JAX reference (for in-script verification only)
# --------------------------------------------------------------------------- #

def _ref_luconv(x_ndhwc, w, b, gamma, beta, eps=1e-5):
    y = lax.conv_general_dilated(
        x_ndhwc, w, window_strides=(1, 1, 1), padding="SAME",
        dimension_numbers=("NDHWC", "DHWIO", "NDHWC"),
        precision=lax.Precision.HIGHEST) + b
    mean = jnp.mean(y, axis=(0, 1, 2, 3))
    var = jnp.var(y, axis=(0, 1, 2, 3))                     # biased, as PyTorch BN
    yhat = (y - mean) / jnp.sqrt(var + eps)
    return jnp.maximum(gamma * yhat + beta, 0.0)


def _ref_forward(x_ncdhw, params, depth):
    x = jnp.transpose(x_ncdhw, (0, 2, 3, 4, 1))
    h1 = _ref_luconv(x, *params["conv1"])
    h2 = _ref_luconv(h1, *params["conv2"])
    if depth == 3:
        out = h2
    else:
        N, D, H, W, C = h2.shape
        out = h2.reshape(N, D // 2, 2, H // 2, 2, W // 2, 2, C).max(axis=(2, 4, 6))
    to_ncdhw = lambda a: jnp.transpose(a, (0, 4, 1, 2, 3))
    return to_ncdhw(out), to_ncdhw(h2)


if __name__ == "__main__":
    key = jax.random.PRNGKey(0)
    kx, kp = jax.random.split(key)

    # DownTransition(in_channel=3, depth=0, act='relu'): channels 3 -> 32 -> 64,
    # then MaxPool3d(2) (depth != 3 path).
    N, Cin, D, H, W = 2, 3, 8, 8, 8
    depth = 0

    x = jax.random.normal(kx, (N, Cin, D, H, W), jnp.float32)
    params = init_params(kp, Cin, depth)

    fwd = jax.jit(functools.partial(down_transition_forward, depth=depth))
    out, out_before_pool = fwd(x, params)
    jax.block_until_ready((out, out_before_pool))

    assert out.shape == (N, 64, D // 2, H // 2, W // 2), out.shape
    assert out_before_pool.shape == (N, 64, D, H, W), out_before_pool.shape
    assert bool(jnp.all(jnp.isfinite(out))) and bool(jnp.all(jnp.isfinite(out_before_pool)))

    # Numerical check vs. a pure-JAX reference of the PyTorch module.
    ref_out, ref_obp = _ref_forward(x, params, depth)
    err_out = float(jnp.max(jnp.abs(out - ref_out)))
    err_obp = float(jnp.max(jnp.abs(out_before_pool - ref_obp)))
    assert err_out < 1e-3 and err_obp < 1e-3, (err_out, err_obp)

    print("KERNEL_OK")
</pallas_src>

<mosaic_0001>
module attributes {stable_mosaic.version = 11 : i64} {
  func.func @_conv3x3x3_tap_kernel(%arg0: i32, %arg1: i32, %arg2: i32, %arg3: memref<1x1x10x10x3xf32, #tpu.memory_space<vmem>>, %arg4: memref<1x9x3x32xf32, #tpu.memory_space<vmem>>, %arg5: memref<1x1x64x32xf32, #tpu.memory_space<vmem>>, %arg6: memref<1x1x1x32xf32, #tpu.memory_space<vmem>>, %arg7: memref<1x1x1x32xf32, #tpu.memory_space<vmem>>, %arg8: memref<64x32xf32, #tpu.memory_space<vmem>>) attributes {dimension_semantics = [#tpu.dimension_semantics<parallel>, #tpu.dimension_semantics<parallel>, #tpu.dimension_semantics<arbitrary>], iteration_bounds = array<i64: 2, 8, 3>, scalar_prefetch = 0 : i64, scratch_operands = 1 : i64, tpu.core_type = #tpu.core_type<tc>, window_params = [{transform_indices = @transform_0, window_bounds = array<i64: 1, 1, 10, 10, 3>}, {transform_indices = @transform_1, window_bounds = array<i64: 1, 9, 3, 32>}, {transform_indices = @transform_2, window_bounds = array<i64: 1, 1, 64, 32>}, {transform_indices = @transform_3, window_bounds = array<i64: 1, 1, 1, 32>}, {transform_indices = @transform_4, window_bounds = array<i64: 1, 1, 1, 32>}]} {
    %c0_i32 = arith.constant 0 : i32
    %0 = arith.cmpi eq, %arg2, %c0_i32 : i32
    %1 = arith.extui %0 : i1 to i32
    %c0_i32_0 = arith.constant 0 : i32
    %2 = arith.cmpi ne, %1, %c0_i32_0 : i32
    scf.if %2 {
      %cst_46 = arith.constant 0.000000e+00 : f32
      %64 = vector.broadcast %cst_46 : f32 to vector<64x32xf32>
      %c0_47 = arith.constant 0 : index
      %c0_48 = arith.constant 0 : index
      %65 = vector.load %arg8[%c0_47, %c0_48] : memref<64x32xf32, #tpu.memory_space<vmem>>, vector<64x32xf32>
      tpu.vector_store %arg8[%c0_47, %c0_48], %64 {strides = array<i32>} : memref<64x32xf32, #tpu.memory_space<vmem>>, vector<64x32xf32>,
    } else {
    }
    %c0 = arith.constant 0 : index
    %c0_1 = arith.constant 0 : index
    %c0_2 = arith.constant 0 : index
    %c0_3 = arith.constant 0 : index
    %c0_4 = arith.constant 0 : index
    %3 = vector.load %arg3[%c0, %c0_1, %c0_2, %c0_3, %c0_4] : memref<1x1x10x10x3xf32, #tpu.memory_space<vmem>>, vector<1x1x10x10x3xf32>
    %4 = vector.shape_cast %3 : vector<1x1x10x10x3xf32> to vector<10x10x3xf32>
    %5 = vector.extract_strided_slice %4 {offsets = [0, 0, 0], sizes = [8, 8, 3], strides = [1, 1, 1]} : vector<10x10x3xf32> to vector<8x8x3xf32>
    %6 = vector.shape_cast %5 : vector<8x8x3xf32> to vector<64x3xf32>
    %c0_5 = arith.constant 0 : index
    %c0_6 = arith.constant 0 : index
    %c0_7 = arith.constant 0 : index
    %c0_8 = arith.constant 0 : index
    %7 = vector.load %arg4[%c0_5, %c0_6, %c0_7, %c0_8] : memref<1x9x3x32xf32, #tpu.memory_space<vmem>>, vector<1x1x3x32xf32>
    %8 = vector.shape_cast %7 : vector<1x1x3x32xf32> to vector<3x32xf32>
    %cst = arith.constant dense<0.000000e+00> : vector<64x32xf32>
    %9 = tpu.matmul %6, %8, %cst {dimension_numbers = #tpu.dot_dimension_numbers<[1], [0], [0], [1], [0, 0, 1, 1], [], []>} : vector<64x3xf32>, vector<3x32xf32>, vector<64x32xf32> -> vector<64x32xf32>
    %10 = vector.extract_strided_slice %4 {offsets = [0, 1, 0], sizes = [8, 8, 3], strides = [1, 1, 1]} : vector<10x10x3xf32> to vector<8x8x3xf32>
    %11 = vector.shape_cast %10 : vector<8x8x3xf32> to vector<64x3xf32>
    %c0_9 = arith.constant 0 : index
    %c1 = arith.constant 1 : index
    %c0_10 = arith.constant 0 : index
    %c0_11 = arith.constant 0 : index
    %12 = vector.load %arg4[%c0_9, %c1, %c0_10, %c0_11] : memref<1x9x3x32xf32, #tpu.memory_space<vmem>>, vector<1x1x3x32xf32>
    %13 = vector.shape_cast %12 : vector<1x1x3x32xf32> to vector<3x32xf32>
    %cst_12 = arith.constant dense<0.000000e+00> : vector<64x32xf32>
    %14 = tpu.matmul %11, %13, %cst_12 {dimension_numbers = #tpu.dot_dimension_numbers<[1], [0], [0], [1], [0, 0, 1, 1], [], []>} : vector<64x3xf32>, vector<3x32xf32>, vector<64x32xf32> -> vector<64x32xf32>
    %15 = arith.addf %9, %14 : vector<64x32xf32>
    %16 = vector.extract_strided_slice %4 {offsets = [0, 2, 0], sizes = [8, 8, 3], strides = [1, 1, 1]} : vector<10x10x3xf32> to vector<8x8x3xf32>
    %17 = vector.shape_cast %16 : vector<8x8x3xf32> to vector<64x3xf32>
    %c0_13 = arith.constant 0 : index
    %c2 = arith.constant 2 : index
    %c0_14 = arith.constant 0 : index
    %c0_15 = arith.constant 0 : index
    %18 = vector.load %arg4[%c0_13, %c2, %c0_14, %c0_15] : memref<1x9x3x32xf32, #tpu.memory_space<vmem>>, vector<1x1x3x32xf32>
    %19 = vector.shape_cast %18 : vector<1x1x3x32xf32> to vector<3x32xf32>
    %cst_16 = arith.constant dense<0.000000e+00> : vector<64x32xf32>
    %20 = tpu.matmul %17, %19, %cst_16 {dimension_numbers = #tpu.dot_dimension_numbers<[1], [0], [0], [1], [0, 0, 1, 1], [], []>} : vector<64x3xf32>, vector<3x32xf32>, vector<64x32xf32> -> vector<64x32xf32>
    %21 = arith.addf %15, %20 : vector<64x32xf32>
    %22 = vector.extract_strided_slice %4 {offsets = [1, 0, 0], sizes = [8, 8, 3], strides = [1, 1, 1]} : vector<10x10x3xf32> to vector<8x8x3xf32>
    %23 = vector.shape_cast %22 : vector<8x8x3xf32> to vector<64x3xf32>
    %c0_17 = arith.constant 0 : index
    %c3 = arith.constant 3 : index
    %c0_18 = arith.constant 0 : index
    %c0_19 = arith.constant 0 : index
    %24 = vector.load %arg4[%c0_17, %c3, %c0_18, %c0_19] : memref<1x9x3x32xf32, #tpu.memory_space<vmem>>, vector<1x1x3x32xf32>
    %25 = vector.shape_cast %24 : vector<1x1x3x32xf32> to vector<3x32xf32>
    %cst_20 = arith.constant dense<0.000000e+00> : vector<64x32xf32>
    %26 = tpu.matmul %23, %25, %cst_20 {dimension_numbers = #tpu.dot_dimension_numbers<[1], [0], [0], [1], [0, 0, 1, 1], [], []>} : vector<64x3xf32>, vector<3x32xf32>, vector<64x32xf32> -> vector<64x32xf32>
    %27 = arith.addf %21, %26 : vector<64x32xf32>
    %28 = vector.extract_strided_slice %4 {offsets = [1, 1, 0], sizes = [8, 8, 3], strides = [1, 1, 1]} : vector<10x10x3xf32> to vector<8x8x3xf32>
    %29 = vector.shape_cast %28 : vector<8x8x3xf32> to vector<64x3xf32>
    %c0_21 = arith.constant 0 : index
    %c4 = arith.constant 4 : index
    %c0_22 = arith.constant 0 : index
    %c0_23 = arith.constant 0 : index
    %30 = vector.load %arg4[%c0_21, %c4, %c0_22, %c0_23] : memref<1x9x3x32xf32, #tpu.memory_space<vmem>>, vector<1x1x3x32xf32>
    %31 = vector.shape_cast %30 : vector<1x1x3x32xf32> to vector<3x32xf32>
    %cst_24 = arith.constant dense<0.000000e+00> : vector<64x32xf32>
    %32 = tpu.matmul %29, %31, %cst_24 {dimension_numbers = #tpu.dot_dimension_numbers<[1], [0], [0], [1], [0, 0, 1, 1], [], []>} : vector<64x3xf32>, vector<3x32xf32>, vector<64x32xf32> -> vector<64x32xf32>
    %33 = arith.addf %27, %32 : vector<64x32xf32>
    %34 = vector.extract_strided_slice %4 {offsets = [1, 2, 0], sizes = [8, 8, 3], strides = [1, 1, 1]} : vector<10x10x3xf32> to vector<8x8x3xf32>
    %35 = vector.shape_cast %34 : vector<8x8x3xf32> to vector<64x3xf32>
    %c0_25 = arith.constant 0 : index
    %c5 = arith.constant 5 : index
    %c0_26 = arith.constant 0 : index
    %c0_27 = arith.constant 0 : index
    %36 = vector.load %arg4[%c0_25, %c5, %c0_26, %c0_27] : memref<1x9x3x32xf32, #tpu.memory_space<vmem>>, vector<1x1x3x32xf32>
    %37 = vector.shape_cast %36 : vector<1x1x3x32xf32> to vector<3x32xf32>
    %cst_28 = arith.constant dense<0.000000e+00> : vector<64x32xf32>
    %38 = tpu.matmul %35, %37, %cst_28 {dimension_numbers = #tpu.dot_dimension_numbers<[1], [0], [0], [1], [0, 0, 1, 1], [], []>} : vector<64x3xf32>, vector<3x32xf32>, vector<64x32xf32> -> vector<64x32xf32>
    %39 = arith.addf %33, %38 : vector<64x32xf32>
    %40 = vector.extract_strided_slice %4 {offsets = [2, 0, 0], sizes = [8, 8, 3], strides = [1, 1, 1]} : vector<10x10x3xf32> to vector<8x8x3xf32>
    %41 = vector.shape_cast %40 : vector<8x8x3xf32> to vector<64x3xf32>
    %c0_29 = arith.constant 0 : index
    %c6 = arith.constant 6 : index
    %c0_30 = arith.constant 0 : index
    %c0_31 = arith.constant 0 : index
    %42 = vector.load %arg4[%c0_29, %c6, %c0_30, %c0_31] : memref<1x9x3x32xf32, #tpu.memory_space<vmem>>, vector<1x1x3x32xf32>
    %43 = vector.shape_cast %42 : vector<1x1x3x32xf32> to vector<3x32xf32>
    %cst_32 = arith.constant dense<0.000000e+00> : vector<64x32xf32>
    %44 = tpu.matmul %41, %43, %cst_32 {dimension_numbers = #tpu.dot_dimension_numbers<[1], [0], [0], [1], [0, 0, 1, 1], [], []>} : vector<64x3xf32>, vector<3x32xf32>, vector<64x32xf32> -> vector<64x32xf32>
    %45 = arith.addf %39, %44 : vector<64x32xf32>
    %46 = vector.extract_strided_slice %4 {offsets = [2, 1, 0], sizes = [8, 8, 3], strides = [1, 1, 1]} : vector<10x10x3xf32> to vector<8x8x3xf32>
    %47 = vector.shape_cast %46 : vector<8x8x3xf32> to vector<64x3xf32>
    %c0_33 = arith.constant 0 : index
    %c7 = arith.constant 7 : index
    %c0_34 = arith.constant 0 : index
    %c0_35 = arith.constant 0 : index
    %48 = vector.load %arg4[%c0_33, %c7, %c0_34, %c0_35] : memref<1x9x3x32xf32, #tpu.memory_space<vmem>>, vector<1x1x3x32xf32>
    %49 = vector.shape_cast %48 : vector<1x1x3x32xf32> to vector<3x32xf32>
    %cst_36 = arith.constant dense<0.000000e+00> : vector<64x32xf32>
    %50 = tpu.matmul %47, %49, %cst_36 {dimension_numbers = #tpu.dot_dimension_numbers<[1], [0], [0], [1], [0, 0, 1, 1], [], []>} : vector<64x3xf32>, vector<3x32xf32>, vector<64x32xf32> -> vector<64x32xf32>
    %51 = arith.addf %45, %50 : vector<64x32xf32>
    %52 = vector.extract_strided_slice %4 {offsets = [2, 2, 0], sizes = [8, 8, 3], strides = [1, 1, 1]} : vector<10x10x3xf32> to vector<8x8x3xf32>
    %53 = vector.shape_cast %52 : vector<8x8x3xf32> to vector<64x3xf32>
    %c0_37 = arith.constant 0 : index
    %c8 = arith.constant 8 : index
    %c0_38 = arith.constant 0 : index
    %c0_39 = arith.constant 0 : index
    %54 = vector.load %arg4[%c0_37, %c8, %c0_38, %c0_39] : memref<1x9x3x32xf32, #tpu.memory_space<vmem>>, vector<1x1x3x32xf32>
    %55 = vector.shape_cast %54 : vector<1x1x3x32xf32> to vector<3x32xf32>
    %cst_40 = arith.constant dense<0.000000e+00> : vector<64x32xf32>
    %56 = tpu.matmul %53, %55, %cst_40 {dimension_numbers = #tpu.dot_dimension_numbers<[1], [0], [0], [1], [0, 0, 1, 1], [], []>} : vector<64x3xf32>, vector<3x32xf32>, vector<64x32xf32> -> vector<64x32xf32>
    %57 = arith.addf %51, %56 : vector<64x32xf32>
    %c0_41 = arith.constant 0 : index
    %c0_42 = arith.constant 0 : index
    %58 = vector.load %arg8[%c0_41, %c0_42] : memref<64x32xf32, #tpu.memory_space<vmem>>, vector<64x32xf32>
    %59 = arith.addf %58, %57 : vector<64x32xf32>
    %c0_43 = arith.constant 0 : index
    %c0_44 = arith.constant 0 : index
    %60 = vector.load %arg8[%c0_43, %c0_44] : memref<64x32xf32, #tpu.memory_space<vmem>>, vector<64x32xf32>
    tpu.vector_store %arg8[%c0_43, %c0_44], %59 {strides = array<i32>} : memref<64x32xf32, #tpu.memory_space<vmem>>, vector<64x32xf32>,
    %c2_i32 = arith.constant 2 : i32
    %61 = arith.cmpi eq, %arg2, %c2_i32 : i32
    %62 = arith.extui %61 : i1 to i32
    %c0_i32_45 = arith.constant 0 : i32
    %63 = arith.cmpi ne, %62, %c0_i32_45 : i32
    scf.if %63 {
      %c0_46 = arith.constant 0 : index
      %c0_47 = arith.constant 0 : index
      %64 = vector.load %arg8[%c0_46, %c0_47] : memref<64x32xf32, #tpu.memory_space<vmem>>, vector<64x32xf32>
      %65 = vector.shape_cast %64 : vector<64x32xf32> to vector<1x1x64x32xf32>
      %c0_48 = arith.constant 0 : index
      %c0_49 = arith.constant 0 : index
      %c0_50 = arith.constant 0 : index
      %c0_51 = arith.constant 0 : index
      %66 = vector.load %arg5[%c0_48, %c0_49, %c0_50, %c0_51] : memref<1x1x64x32xf32, #tpu.memory_space<vmem>>, vector<1x1x64x32xf32>
      tpu.vector_store %arg5[%c0_48, %c0_49, %c0_50, %c0_51], %65 {strides = array<i32>} : memref<1x1x64x32xf32, #tpu.memory_space<vmem>>, vector<1x1x64x32xf32>,
      %cst_52 = arith.constant dense<0.000000e+00> : vector<32xf32>
      %67 = vector.multi_reduction <add>, %64, %cst_52 [0] : vector<64x32xf32> to vector<32xf32>
      %68 = vector.shape_cast %67 : vector<32xf32> to vector<1x32xf32>
      %69 = arith.mulf %64, %64 : vector<64x32xf32>
      %cst_53 = arith.constant dense<0.000000e+00> : vector<32xf32>
      %70 = vector.multi_reduction <add>, %69, %cst_53 [0] : vector<64x32xf32> to vector<32xf32>
      %71 = vector.shape_cast %70 : vector<32xf32> to vector<1x32xf32>
      %72 = vector.shape_cast %68 : vector<1x32xf32> to vector<1x1x1x32xf32>
      %c0_54 = arith.constant 0 : index
      %c0_55 = arith.constant 0 : index
      %c0_56 = arith.constant 0 : index
      %c0_57 = arith.constant 0 : index
      %73 = vector.load %arg6[%c0_54, %c0_55, %c0_56, %c0_57] : memref<1x1x1x32xf32, #tpu.memory_space<vmem>>, vector<1x1x1x32xf32>
      tpu.vector_store %arg6[%c0_54, %c0_55, %c0_56, %c0_57], %72 {strides = array<i32>} : memref<1x1x1x32xf32, #tpu.memory_space<vmem>>, vector<1x1x1x32xf32>,
      %74 = vector.shape_cast %71 : vector<1x32xf32> to vector<1x1x1x32xf32>
      %c0_58 = arith.constant 0 : index
      %c0_59 = arith.constant 0 : index
      %c0_60 = arith.constant 0 : index
      %c0_61 = arith.constant 0 : index
      %75 = vector.load %arg7[%c0_58, %c0_59, %c0_60, %c0_61] : memref<1x1x1x32xf32, #tpu.memory_space<vmem>>, vector<1x1x1x32xf32>
      tpu.vector_store %arg7[%c0_58, %c0_59, %c0_60, %c0_61], %74 {strides = array<i32>} : memref<1x1x1x32xf32, #tpu.memory_space<vmem>>, vector<1x1x1x32xf32>,
    } else {
    }
    return
  }
  func.func @transform_0(%arg0: i32, %arg1: i32, %arg2: i32) -> (i32, i32, i32, i32, i32) {
    %0 = arith.addi %arg1, %arg2 : i32
    %c0_i32 = arith.constant 0 : i32
    %c0_i32_0 = arith.constant 0 : i32
    %c0_i32_1 = arith.constant 0 : i32
    %c0_i32_2 = arith.constant 0 : i32
    return %arg0, %0, %c0_i32, %c0_i32_0, %c0_i32_1 : i32, i32, i32, i32, i32
  }
  func.func @transform_1(%arg0: i32, %arg1: i32, %arg2: i32) -> (i32, i32, i32, i32) {
    %c0_i32 = arith.constant 0 : i32
    %c0_i32_0 = arith.constant 0 : i32
    %c0_i32_1 = arith.constant 0 : i32
    %c0_i32_2 = arith.constant 0 : i32
    return %arg2, %c0_i32, %c0_i32_0, %c0_i32_1 : i32, i32, i32, i32
  }
  func.func @transform_2(%arg0: i32, %arg1: i32, %arg2: i32) -> (i32, i32, i32, i32) {
    %c0_i32 = arith.constant 0 : i32
    %c0_i32_0 = arith.constant 0 : i32
    %c0_i32_1 = arith.constant 0 : i32
    return %arg0, %arg1, %c0_i32, %c0_i32_0 : i32, i32, i32, i32
  }
  func.func @transform_3(%arg0: i32, %arg1: i32, %arg2: i32) -> (i32, i32, i32, i32) {
    %c0_i32 = arith.constant 0 : i32
    %c0_i32_0 = arith.constant 0 : i32
    %c0_i32_1 = arith.constant 0 : i32
    return %arg0, %arg1, %c0_i32, %c0_i32_0 : i32, i32, i32, i32
  }
  func.func @transform_4(%arg0: i32, %arg1: i32, %arg2: i32) -> (i32, i32, i32, i32) {
    %c0_i32 = arith.constant 0 : i32
    %c0_i32_0 = arith.constant 0 : i32
    %c0_i32_1 = arith.constant 0 : i32
    return %arg0, %arg1, %c0_i32, %c0_i32_0 : i32, i32, i32, i32
  }
}

module attributes {stable_mosaic.version = 11 : i64} {
  func.func @_bn_act_kernel(%arg0: i32, %arg1: memref<256x128xf32, #tpu.memory_space<vmem>>, %arg2: memref<1x128xf32, #tpu.memory_space<vmem>>, %arg3: memref<1x128xf32, #tpu.memory_space<vmem>>, %arg4: memref<256x128xf32, #tpu.memory_space<vmem>>) attributes {dimension_semantics = [#tpu.dimension_semantics<parallel>], iteration_bounds = array<i64: 1>, scalar_prefetch = 0 : i64, scratch_operands = 0 : i64, tpu.core_type = #tpu.core_type<tc>, window_params = [{transform_indices = @transform_0, window_bounds = array<i64: 256, 128>}, {pipeline_mode = #tpu.pipeline_mode<synchronous>, transform_indices = @transform_1, window_bounds = array<i64: 1, 128>}, {pipeline_mode = #tpu.pipeline_mode<synchronous>, transform_indices = @transform_2, window_bounds = array<i64: 1, 128>}, {transform_indices = @transform_3, window_bounds = array<i64: 256, 128>}]} {
    %c0 = arith.constant 0 : index
    %c0_0 = arith.constant 0 : index
    %0 = vector.load %arg1[%c0, %c0_0] : memref<256x128xf32, #tpu.memory_space<vmem>>, vector<256x128xf32>
    %c0_1 = arith.constant 0 : index
    %c0_2 = arith.constant 0 : index
    %1 = vector.load %arg2[%c0_1, %c0_2] : memref<1x128xf32, #tpu.memory_space<vmem>>, vector<1x128xf32>
    %2 = vector.broadcast %1 : vector<1x128xf32> to vector<256x128xf32>
    %3 = arith.mulf %0, %2 : vector<256x128xf32>
    %c0_3 = arith.constant 0 : index
    %c0_4 = arith.constant 0 : index
    %4 = vector.load %arg3[%c0_3, %c0_4] : memref<1x128xf32, #tpu.memory_space<vmem>>, vector<1x128xf32>
    %5 = vector.broadcast %4 : vector<1x128xf32> to vector<256x128xf32>
    %6 = arith.addf %3, %5 : vector<256x128xf32>
    %cst = arith.constant 0.000000e+00 : f32
    %7 = vector.broadcast %cst : f32 to vector<256x128xf32>
    %8 = arith.maximumf %6, %7 : vector<256x128xf32>
    %c0_5 = arith.constant 0 : index
    %c0_6 = arith.constant 0 : index
    %9 = vector.load %arg4[%c0_5, %c0_6] : memref<256x128xf32, #tpu.memory_space<vmem>>, vector<256x128xf32>
    tpu.vector_store %arg4[%c0_5, %c0_6], %8 {strides = array<i32>} : memref<256x128xf32, #tpu.memory_space<vmem>>, vector<256x128xf32>,
    return
  }
  func.func @transform_0(%arg0: i32) -> (i32, i32) {
    %c0_i32 = arith.constant 0 : i32
    %c0_i32_0 = arith.constant 0 : i32
    return %arg0, %c0_i32 : i32, i32
  }
  func.func @transform_1(%arg0: i32) -> (i32, i32) {
    %c0_i32 = arith.constant 0 : i32
    %c0_i32_0 = arith.constant 0 : i32
    %c0_i32_1 = arith.constant 0 : i32
    return %c0_i32, %c0_i32_0 : i32, i32
  }
  func.func @transform_2(%arg0: i32) -> (i32, i32) {
    %c0_i32 = arith.constant 0 : i32
    %c0_i32_0 = arith.constant 0 : i32
    %c0_i32_1 = arith.constant 0 : i32
    return %c0_i32, %c0_i32_0 : i32, i32
  }
  func.func @transform_3(%arg0: i32) -> (i32, i32) {
    %c0_i32 = arith.constant 0 : i32
    %c0_i32_0 = arith.constant 0 : i32
    return %arg0, %c0_i32 : i32, i32
  }
}

module attributes {stable_mosaic.version = 11 : i64} {
  func.func @_conv3x3x3_tap_kernel(%arg0: i32, %arg1: i32, %arg2: i32, %arg3: memref<1x1x10x10x32xf32, #tpu.memory_space<vmem>>, %arg4: memref<1x9x32x64xf32, #tpu.memory_space<vmem>>, %arg5: memref<1x1x64x64xf32, #tpu.memory_space<vmem>>, %arg6: memref<1x1x1x64xf32, #tpu.memory_space<vmem>>, %arg7: memref<1x1x1x64xf32, #tpu.memory_space<vmem>>, %arg8: memref<64x64xf32, #tpu.memory_space<vmem>>) attributes {dimension_semantics = [#tpu.dimension_semantics<parallel>, #tpu.dimension_semantics<parallel>, #tpu.dimension_semantics<arbitrary>], iteration_bounds = array<i64: 2, 8, 3>, scalar_prefetch = 0 : i64, scratch_operands = 1 : i64, tpu.core_type = #tpu.core_type<tc>, window_params = [{transform_indices = @transform_0, window_bounds = array<i64: 1, 1, 10, 10, 32>}, {transform_indices = @transform_1, window_bounds = array<i64: 1, 9, 32, 64>}, {transform_indices = @transform_2, window_bounds = array<i64: 1, 1, 64, 64>}, {transform_indices = @transform_3, window_bounds = array<i64: 1, 1, 1, 64>}, {transform_indices = @transform_4, window_bounds = array<i64: 1, 1, 1, 64>}]} {
    %c0_i32 = arith.constant 0 : i32
    %0 = arith.cmpi eq, %arg2, %c0_i32 : i32
    %1 = arith.extui %0 : i1 to i32
    %c0_i32_0 = arith.constant 0 : i32
    %2 = arith.cmpi ne, %1, %c0_i32_0 : i32
    scf.if %2 {
      %cst_46 = arith.constant 0.000000e+00 : f32
      %64 = vector.broadcast %cst_46 : f32 to vector<64x64xf32>
      %c0_47 = arith.constant 0 : index
      %c0_48 = arith.constant 0 : index
      %65 = vector.load %arg8[%c0_47, %c0_48] : memref<64x64xf32, #tpu.memory_space<vmem>>, vector<64x64xf32>
      tpu.vector_store %arg8[%c0_47, %c0_48], %64 {strides = array<i32>} : memref<64x64xf32, #tpu.memory_space<vmem>>, vector<64x64xf32>,
    } else {
    }
    %c0 = arith.constant 0 : index
    %c0_1 = arith.constant 0 : index
    %c0_2 = arith.constant 0 : index
    %c0_3 = arith.constant 0 : index
    %c0_4 = arith.constant 0 : index
    %3 = vector.load %arg3[%c0, %c0_1, %c0_2, %c0_3, %c0_4] : memref<1x1x10x10x32xf32, #tpu.memory_space<vmem>>, vector<1x1x10x10x32xf32>
    %4 = vector.shape_cast %3 : vector<1x1x10x10x32xf32> to vector<10x10x32xf32>
    %5 = vector.extract_strided_slice %4 {offsets = [0, 0, 0], sizes = [8, 8, 32], strides = [1, 1, 1]} : vector<10x10x32xf32> to vector<8x8x32xf32>
    %6 = vector.shape_cast %5 : vector<8x8x32xf32> to vector<64x32xf32>
    %c0_5 = arith.constant 0 : index
    %c0_6 = arith.constant 0 : index
    %c0_7 = arith.constant 0 : index
    %c0_8 = arith.constant 0 : index
    %7 = vector.load %arg4[%c0_5, %c0_6, %c0_7, %c0_8] : memref<1x9x32x64xf32, #tpu.memory_space<vmem>>, vector<1x1x32x64xf32>
    %8 = vector.shape_cast %7 : vector<1x1x32x64xf32> to vector<32x64xf32>
    %cst = arith.constant dense<0.000000e+00> : vector<64x64xf32>
    %9 = tpu.matmul %6, %8, %cst {dimension_numbers = #tpu.dot_dimension_numbers<[1], [0], [0], [1], [0, 0, 1, 1], [], []>} : vector<64x32xf32>, vector<32x64xf32>, vector<64x64xf32> -> vector<64x64xf32>
    %10 = vector.extract_strided_slice %4 {offsets = [0, 1, 0], sizes = [8, 8, 32], strides = [1, 1, 1]} : vector<10x10x32xf32> to vector<8x8x32xf32>
    %11 = vector.shape_cast %10 : vector<8x8x32xf32> to vector<64x32xf32>
    %c0_9 = arith.constant 0 : index
    %c1 = arith.constant 1 : index
    %c0_10 = arith.constant 0 : index
    %c0_11 = arith.constant 0 : index
    %12 = vector.load %arg4[%c0_9, %c1, %c0_10, %c0_11] : memref<1x9x32x64xf32, #tpu.memory_space<vmem>>, vector<1x1x32x64xf32>
    %13 = vector.shape_cast %12 : vector<1x1x32x64xf32> to vector<32x64xf32>
    %cst_12 = arith.constant dense<0.000000e+00> : vector<64x64xf32>
    %14 = tpu.matmul %11, %13, %cst_12 {dimension_numbers = #tpu.dot_dimension_numbers<[1], [0], [0], [1], [0, 0, 1, 1], [], []>} : vector<64x32xf32>, vector<32x64xf32>, vector<64x64xf32> -> vector<64x64xf32>
    %15 = arith.addf %9, %14 : vector<64x64xf32>
    %16 = vector.extract_strided_slice %4 {offsets = [0, 2, 0], sizes = [8, 8, 32], strides = [1, 1, 1]} : vector<10x10x32xf32> to vector<8x8x32xf32>
    %17 = vector.shape_cast %16 : vector<8x8x32xf32> to vector<64x32xf32>
    %c0_13 = arith.constant 0 : index
    %c2 = arith.constant 2 : index
    %c0_14 = arith.constant 0 : index
    %c0_15 = arith.constant 0 : index
    %18 = vector.load %arg4[%c0_13, %c2, %c0_14, %c0_15] : memref<1x9x32x64xf32, #tpu.memory_space<vmem>>, vector<1x1x32x64xf32>
    %19 = vector.shape_cast %18 : vector<1x1x32x64xf32> to vector<32x64xf32>
    %cst_16 = arith.constant dense<0.000000e+00> : vector<64x64xf32>
    %20 = tpu.matmul %17, %19, %cst_16 {dimension_numbers = #tpu.dot_dimension_numbers<[1], [0], [0], [1], [0, 0, 1, 1], [], []>} : vector<64x32xf32>, vector<32x64xf32>, vector<64x64xf32> -> vector<64x64xf32>
    %21 = arith.addf %15, %20 : vector<64x64xf32>
    %22 = vector.extract_strided_slice %4 {offsets = [1, 0, 0], sizes = [8, 8, 32], strides = [1, 1, 1]} : vector<10x10x32xf32> to vector<8x8x32xf32>
    %23 = vector.shape_cast %22 : vector<8x8x32xf32> to vector<64x32xf32>
    %c0_17 = arith.constant 0 : index
    %c3 = arith.constant 3 : index
    %c0_18 = arith.constant 0 : index
    %c0_19 = arith.constant 0 : index
    %24 = vector.load %arg4[%c0_17, %c3, %c0_18, %c0_19] : memref<1x9x32x64xf32, #tpu.memory_space<vmem>>, vector<1x1x32x64xf32>
    %25 = vector.shape_cast %24 : vector<1x1x32x64xf32> to vector<32x64xf32>
    %cst_20 = arith.constant dense<0.000000e+00> : vector<64x64xf32>
    %26 = tpu.matmul %23, %25, %cst_20 {dimension_numbers = #tpu.dot_dimension_numbers<[1], [0], [0], [1], [0, 0, 1, 1], [], []>} : vector<64x32xf32>, vector<32x64xf32>, vector<64x64xf32> -> vector<64x64xf32>
    %27 = arith.addf %21, %26 : vector<64x64xf32>
    %28 = vector.extract_strided_slice %4 {offsets = [1, 1, 0], sizes = [8, 8, 32], strides = [1, 1, 1]} : vector<10x10x32xf32> to vector<8x8x32xf32>
    %29 = vector.shape_cast %28 : vector<8x8x32xf32> to vector<64x32xf32>
    %c0_21 = arith.constant 0 : index
    %c4 = arith.constant 4 : index
    %c0_22 = arith.constant 0 : index
    %c0_23 = arith.constant 0 : index
    %30 = vector.load %arg4[%c0_21, %c4, %c0_22, %c0_23] : memref<1x9x32x64xf32, #tpu.memory_space<vmem>>, vector<1x1x32x64xf32>
    %31 = vector.shape_cast %30 : vector<1x1x32x64xf32> to vector<32x64xf32>
    %cst_24 = arith.constant dense<0.000000e+00> : vector<64x64xf32>
    %32 = tpu.matmul %29, %31, %cst_24 {dimension_numbers = #tpu.dot_dimension_numbers<[1], [0], [0], [1], [0, 0, 1, 1], [], []>} : vector<64x32xf32>, vector<32x64xf32>, vector<64x64xf32> -> vector<64x64xf32>
    %33 = arith.addf %27, %32 : vector<64x64xf32>
    %34 = vector.extract_strided_slice %4 {offsets = [1, 2, 0], sizes = [8, 8, 32], strides = [1, 1, 1]} : vector<10x10x32xf32> to vector<8x8x32xf32>
    %35 = vector.shape_cast %34 : vector<8x8x32xf32> to vector<64x32xf32>
    %c0_25 = arith.constant 0 : index
    %c5 = arith.constant 5 : index
    %c0_26 = arith.constant 0 : index
    %c0_27 = arith.constant 0 : index
    %36 = vector.load %arg4[%c0_25, %c5, %c0_26, %c0_27] : memref<1x9x32x64xf32, #tpu.memory_space<vmem>>, vector<1x1x32x64xf32>
    %37 = vector.shape_cast %36 : vector<1x1x32x64xf32> to vector<32x64xf32>
    %cst_28 = arith.constant dense<0.000000e+00> : vector<64x64xf32>
    %38 = tpu.matmul %35, %37, %cst_28 {dimension_numbers = #tpu.dot_dimension_numbers<[1], [0], [0], [1], [0, 0, 1, 1], [], []>} : vector<64x32xf32>, vector<32x64xf32>, vector<64x64xf32> -> vector<64x64xf32>
    %39 = arith.addf %33, %38 : vector<64x64xf32>
    %40 = vector.extract_strided_slice %4 {offsets = [2, 0, 0], sizes = [8, 8, 32], strides = [1, 1, 1]} : vector<10x10x32xf32> to vector<8x8x32xf32>
    %41 = vector.shape_cast %40 : vector<8x8x32xf32> to vector<64x32xf32>
    %c0_29 = arith.constant 0 : index
    %c6 = arith.constant 6 : index
    %c0_30 = arith.constant 0 : index
    %c0_31 = arith.constant 0 : index
    %42 = vector.load %arg4[%c0_29, %c6, %c0_30, %c0_31] : memref<1x9x32x64xf32, #tpu.memory_space<vmem>>, vector<1x1x32x64xf32>
    %43 = vector.shape_cast %42 : vector<1x1x32x64xf32> to vector<32x64xf32>
    %cst_32 = arith.constant dense<0.000000e+00> : vector<64x64xf32>
    %44 = tpu.matmul %41, %43, %cst_32 {dimension_numbers = #tpu.dot_dimension_numbers<[1], [0], [0], [1], [0, 0, 1, 1], [], []>} : vector<64x32xf32>, vector<32x64xf32>, vector<64x64xf32> -> vector<64x64xf32>
    %45 = arith.addf %39, %44 : vector<64x64xf32>
    %46 = vector.extract_strided_slice %4 {offsets = [2, 1, 0], sizes = [8, 8, 32], strides = [1, 1, 1]} : vector<10x10x32xf32> to vector<8x8x32xf32>
    %47 = vector.shape_cast %46 : vector<8x8x32xf32> to vector<64x32xf32>
    %c0_33 = arith.constant 0 : index
    %c7 = arith.constant 7 : index
    %c0_34 = arith.constant 0 : index
    %c0_35 = arith.constant 0 : index
    %48 = vector.load %arg4[%c0_33, %c7, %c0_34, %c0_35] : memref<1x9x32x64xf32, #tpu.memory_space<vmem>>, vector<1x1x32x64xf32>
    %49 = vector.shape_cast %48 : vector<1x1x32x64xf32> to vector<32x64xf32>
    %cst_36 = arith.constant dense<0.000000e+00> : vector<64x64xf32>
    %50 = tpu.matmul %47, %49, %cst_36 {dimension_numbers = #tpu.dot_dimension_numbers<[1], [0], [0], [1], [0, 0, 1, 1], [], []>} : vector<64x32xf32>, vector<32x64xf32>, vector<64x64xf32> -> vector<64x64xf32>
    %51 = arith.addf %45, %50 : vector<64x64xf32>
    %52 = vector.extract_strided_slice %4 {offsets = [2, 2, 0], sizes = [8, 8, 32], strides = [1, 1, 1]} : vector<10x10x32xf32> to vector<8x8x32xf32>
    %53 = vector.shape_cast %52 : vector<8x8x32xf32> to vector<64x32xf32>
    %c0_37 = arith.constant 0 : index
    %c8 = arith.constant 8 : index
    %c0_38 = arith.constant 0 : index
    %c0_39 = arith.constant 0 : index
    %54 = vector.load %arg4[%c0_37, %c8, %c0_38, %c0_39] : memref<1x9x32x64xf32, #tpu.memory_space<vmem>>, vector<1x1x32x64xf32>
    %55 = vector.shape_cast %54 : vector<1x1x32x64xf32> to vector<32x64xf32>
    %cst_40 = arith.constant dense<0.000000e+00> : vector<64x64xf32>
    %56 = tpu.matmul %53, %55, %cst_40 {dimension_numbers = #tpu.dot_dimension_numbers<[1], [0], [0], [1], [0, 0, 1, 1], [], []>} : vector<64x32xf32>, vector<32x64xf32>, vector<64x64xf32> -> vector<64x64xf32>
    %57 = arith.addf %51, %56 : vector<64x64xf32>
    %c0_41 = arith.constant 0 : index
    %c0_42 = arith.constant 0 : index
    %58 = vector.load %arg8[%c0_41, %c0_42] : memref<64x64xf32, #tpu.memory_space<vmem>>, vector<64x64xf32>
    %59 = arith.addf %58, %57 : vector<64x64xf32>
    %c0_43 = arith.constant 0 : index
    %c0_44 = arith.constant 0 : index
    %60 = vector.load %arg8[%c0_43, %c0_44] : memref<64x64xf32, #tpu.memory_space<vmem>>, vector<64x64xf32>
    tpu.vector_store %arg8[%c0_43, %c0_44], %59 {strides = array<i32>} : memref<64x64xf32, #tpu.memory_space<vmem>>, vector<64x64xf32>,
    %c2_i32 = arith.constant 2 : i32
    %61 = arith.cmpi eq, %arg2, %c2_i32 : i32
    %62 = arith.extui %61 : i1 to i32
    %c0_i32_45 = arith.constant 0 : i32
    %63 = arith.cmpi ne, %62, %c0_i32_45 : i32
    scf.if %63 {
      %c0_46 = arith.constant 0 : index
      %c0_47 = arith.constant 0 : index
      %64 = vector.load %arg8[%c0_46, %c0_47] : memref<64x64xf32, #tpu.memory_space<vmem>>, vector<64x64xf32>
      %65 = vector.shape_cast %64 : vector<64x64xf32> to vector<1x1x64x64xf32>
      %c0_48 = arith.constant 0 : index
      %c0_49 = arith.constant 0 : index
      %c0_50 = arith.constant 0 : index
      %c0_51 = arith.constant 0 : index
      %66 = vector.load %arg5[%c0_48, %c0_49, %c0_50, %c0_51] : memref<1x1x64x64xf32, #tpu.memory_space<vmem>>, vector<1x1x64x64xf32>
      tpu.vector_store %arg5[%c0_48, %c0_49, %c0_50, %c0_51], %65 {strides = array<i32>} : memref<1x1x64x64xf32, #tpu.memory_space<vmem>>, vector<1x1x64x64xf32>,
      %cst_52 = arith.constant dense<0.000000e+00> : vector<64xf32>
      %67 = vector.multi_reduction <add>, %64, %cst_52 [0] : vector<64x64xf32> to vector<64xf32>
      %68 = vector.shape_cast %67 : vector<64xf32> to vector<1x64xf32>
      %69 = arith.mulf %64, %64 : vector<64x64xf32>
      %cst_53 = arith.constant dense<0.000000e+00> : vector<64xf32>
      %70 = vector.multi_reduction <add>, %69, %cst_53 [0] : vector<64x64xf32> to vector<64xf32>
      %71 = vector.shape_cast %70 : vector<64xf32> to vector<1x64xf32>
      %72 = vector.shape_cast %68 : vector<1x64xf32> to vector<1x1x1x64xf32>
      %c0_54 = arith.constant 0 : index
      %c0_55 = arith.constant 0 : index
      %c0_56 = arith.constant 0 : index
      %c0_57 = arith.constant 0 : index
      %73 = vector.load %arg6[%c0_54, %c0_55, %c0_56, %c0_57] : memref<1x1x1x64xf32, #tpu.memory_space<vmem>>, vector<1x1x1x64xf32>
      tpu.vector_store %arg6[%c0_54, %c0_55, %c0_56, %c0_57], %72 {strides = array<i32>} : memref<1x1x1x64xf32, #tpu.memory_space<vmem>>, vector<1x1x1x64xf32>,
      %74 = vector.shape_cast %71 : vector<1x64xf32> to vector<1x1x1x64xf32>
      %c0_58 = arith.constant 0 : index
      %c0_59 = arith.constant 0 : index
      %c0_60 = arith.constant 0 : index
      %c0_61 = arith.constant 0 : index
      %75 = vector.load %arg7[%c0_58, %c0_59, %c0_60, %c0_61] : memref<1x1x1x64xf32, #tpu.memory_space<vmem>>, vector<1x1x1x64xf32>
      tpu.vector_store %arg7[%c0_58, %c0_59, %c0_60, %c0_61], %74 {strides = array<i32>} : memref<1x1x1x64xf32, #tpu.memory_space<vmem>>, vector<1x1x1x64xf32>,
    } else {
    }
    return
  }
  func.func @transform_0(%arg0: i32, %arg1: i32, %arg2: i32) -> (i32, i32, i32, i32, i32) {
    %0 = arith.addi %arg1, %arg2 : i32
    %c0_i32 = arith.constant 0 : i32
    %c0_i32_0 = arith.constant 0 : i32
    %c0_i32_1 = arith.constant 0 : i32
    %c0_i32_2 = arith.constant 0 : i32
    return %arg0, %0, %c0_i32, %c0_i32_0, %c0_i32_1 : i32, i32, i32, i32, i32
  }
  func.func @transform_1(%arg0: i32, %arg1: i32, %arg2: i32) -> (i32, i32, i32, i32) {
    %c0_i32 = arith.constant 0 : i32
    %c0_i32_0 = arith.constant 0 : i32
    %c0_i32_1 = arith.constant 0 : i32
    %c0_i32_2 = arith.constant 0 : i32
    return %arg2, %c0_i32, %c0_i32_0, %c0_i32_1 : i32, i32, i32, i32
  }
  func.func @transform_2(%arg0: i32, %arg1: i32, %arg2: i32) -> (i32, i32, i32, i32) {
    %c0_i32 = arith.constant 0 : i32
    %c0_i32_0 = arith.constant 0 : i32
    %c0_i32_1 = arith.constant 0 : i32
    return %arg0, %arg1, %c0_i32, %c0_i32_0 : i32, i32, i32, i32
  }
  func.func @transform_3(%arg0: i32, %arg1: i32, %arg2: i32) -> (i32, i32, i32, i32) {
    %c0_i32 = arith.constant 0 : i32
    %c0_i32_0 = arith.constant 0 : i32
    %c0_i32_1 = arith.constant 0 : i32
    return %arg0, %arg1, %c0_i32, %c0_i32_0 : i32, i32, i32, i32
  }
  func.func @transform_4(%arg0: i32, %arg1: i32, %arg2: i32) -> (i32, i32, i32, i32) {
    %c0_i32 = arith.constant 0 : i32
    %c0_i32_0 = arith.constant 0 : i32
    %c0_i32_1 = arith.constant 0 : i32
    return %arg0, %arg1, %c0_i32, %c0_i32_0 : i32, i32, i32, i32
  }
}

module attributes {stable_mosaic.version = 11 : i64} {
  func.func @_bn_act_pool_kernel(%arg0: i32, %arg1: i32, %arg2: memref<1x2x8x4x128xf32, #tpu.memory_space<vmem>>, %arg3: memref<1x128xf32, #tpu.memory_space<vmem>>, %arg4: memref<1x128xf32, #tpu.memory_space<vmem>>, %arg5: memref<1x2x8x4x128xf32, #tpu.memory_space<vmem>>, %arg6: memref<1x1x4x4x64xf32, #tpu.memory_space<vmem>>) attributes {dimension_semantics = [#tpu.dimension_semantics<parallel>, #tpu.dimension_semantics<parallel>], iteration_bounds = array<i64: 2, 4>, scalar_prefetch = 0 : i64, scratch_operands = 0 : i64, tpu.core_type = #tpu.core_type<tc>, window_params = [{transform_indices = @transform_0, window_bounds = array<i64: 1, 2, 8, 4, 128>}, {pipeline_mode = #tpu.pipeline_mode<synchronous>, transform_indices = @transform_1, window_bounds = array<i64: 1, 128>}, {pipeline_mode = #tpu.pipeline_mode<synchronous>, transform_indices = @transform_2, window_bounds = array<i64: 1, 128>}, {transform_indices = @transform_3, window_bounds = array<i64: 1, 2, 8, 4, 128>}, {transform_indices = @transform_4, window_bounds = array<i64: 1, 1, 4, 4, 64>}]} {
    %c0 = arith.constant 0 : index
    %c0_0 = arith.constant 0 : index
    %c0_1 = arith.constant 0 : index
    %c0_2 = arith.constant 0 : index
    %c0_3 = arith.constant 0 : index
    %0 = vector.load %arg2[%c0, %c0_0, %c0_1, %c0_2, %c0_3] : memref<1x2x8x4x128xf32, #tpu.memory_space<vmem>>, vector<1x2x8x4x128xf32>
    %1 = vector.shape_cast %0 : vector<1x2x8x4x128xf32> to vector<2x8x4x128xf32>
    %c0_4 = arith.constant 0 : index
    %c0_5 = arith.constant 0 : index
    %2 = vector.load %arg3[%c0_4, %c0_5] : memref<1x128xf32, #tpu.memory_space<vmem>>, vector<1x128xf32>
    %3 = vector.shape_cast %2 : vector<1x128xf32> to vector<1x1x1x128xf32>
    %4 = vector.broadcast %3 : vector<1x1x1x128xf32> to vector<2x8x4x128xf32>
    %5 = arith.mulf %1, %4 : vector<2x8x4x128xf32>
    %c0_6 = arith.constant 0 : index
    %c0_7 = arith.constant 0 : index
    %6 = vector.load %arg4[%c0_6, %c0_7] : memref<1x128xf32, #tpu.memory_space<vmem>>, vector<1x128xf32>
    %7 = vector.shape_cast %6 : vector<1x128xf32> to vector<1x1x1x128xf32>
    %8 = vector.broadcast %7 : vector<1x1x1x128xf32> to vector<2x8x4x128xf32>
    %9 = arith.addf %5, %8 : vector<2x8x4x128xf32>
    %cst = arith.constant 0.000000e+00 : f32
    %10 = vector.broadcast %cst : f32 to vector<2x8x4x128xf32>
    %11 = arith.maximumf %9, %10 : vector<2x8x4x128xf32>
    %12 = vector.shape_cast %11 : vector<2x8x4x128xf32> to vector<1x2x8x4x128xf32>
    %c0_8 = arith.constant 0 : index
    %c0_9 = arith.constant 0 : index
    %c0_10 = arith.constant 0 : index
    %c0_11 = arith.constant 0 : index
    %c0_12 = arith.constant 0 : index
    %13 = vector.load %arg5[%c0_8, %c0_9, %c0_10, %c0_11, %c0_12] : memref<1x2x8x4x128xf32, #tpu.memory_space<vmem>>, vector<1x2x8x4x128xf32>
    tpu.vector_store %arg5[%c0_8, %c0_9, %c0_10, %c0_11, %c0_12], %12 {strides = array<i32>} : memref<1x2x8x4x128xf32, #tpu.memory_space<vmem>>, vector<1x2x8x4x128xf32>,
    %14 = vector.extract_strided_slice %11 {offsets = [0, 0, 0, 0], sizes = [1, 8, 4, 128], strides = [1, 1, 1, 1]} : vector<2x8x4x128xf32> to vector<1x8x4x128xf32>
    %15 = vector.shape_cast %14 : vector<1x8x4x128xf32> to vector<8x4x128xf32>
    %16 = vector.extract_strided_slice %11 {offsets = [1, 0, 0, 0], sizes = [1, 8, 4, 128], strides = [1, 1, 1, 1]} : vector<2x8x4x128xf32> to vector<1x8x4x128xf32>
    %17 = vector.shape_cast %16 : vector<1x8x4x128xf32> to vector<8x4x128xf32>
    %18 = arith.maximumf %15, %17 : vector<8x4x128xf32>
    %19 = vector.shape_cast %18 : vector<8x4x128xf32> to vector<4x2x4x128xf32>
    %cst_13 = arith.constant dense<0xFF800000> : vector<4x4x128xf32>
    %20 = vector.multi_reduction <maximumf>, %19, %cst_13 [1] : vector<4x2x4x128xf32> to vector<4x4x128xf32>
    %21 = vector.extract_strided_slice %20 {offsets = [0, 0, 0], sizes = [4, 4, 64], strides = [1, 1, 1]} : vector<4x4x128xf32> to vector<4x4x64xf32>
    %22 = vector.extract_strided_slice %20 {offsets = [0, 0, 64], sizes = [4, 4, 64], strides = [1, 1, 1]} : vector<4x4x128xf32> to vector<4x4x64xf32>
    %23 = arith.maximumf %21, %22 : vector<4x4x64xf32>
    %24 = vector.shape_cast %23 : vector<4x4x64xf32> to vector<1x1x4x4x64xf32>
    %c0_14 = arith.constant 0 : index
    %c0_15 = arith.constant 0 : index
    %c0_16 = arith.constant 0 : index
    %c0_17 = arith.constant 0 : index
    %c0_18 = arith.constant 0 : index
    %25 = vector.load %arg6[%c0_14, %c0_15, %c0_16, %c0_17, %c0_18] : memref<1x1x4x4x64xf32, #tpu.memory_space<vmem>>, vector<1x1x4x4x64xf32>
    tpu.vector_store %arg6[%c0_14, %c0_15, %c0_16, %c0_17, %c0_18], %24 {strides = array<i32>} : memref<1x1x4x4x64xf32, #tpu.memory_space<vmem>>, vector<1x1x4x4x64xf32>,
    return
  }
  func.func @transform_0(%arg0: i32, %arg1: i32) -> (i32, i32, i32, i32, i32) {
    %c0_i32 = arith.constant 0 : i32
    %c0_i32_0 = arith.constant 0 : i32
    %c0_i32_1 = arith.constant 0 : i32
    %c0_i32_2 = arith.constant 0 : i32
    return %arg0, %arg1, %c0_i32, %c0_i32_0, %c0_i32_1 : i32, i32, i32, i32, i32
  }
  func.func @transform_1(%arg0: i32, %arg1: i32) -> (i32, i32) {
    %c0_i32 = arith.constant 0 : i32
    %c0_i32_0 = arith.constant 0 : i32
    %c0_i32_1 = arith.constant 0 : i32
    return %c0_i32, %c0_i32_0 : i32, i32
  }
  func.func @transform_2(%arg0: i32, %arg1: i32) -> (i32, i32) {
    %c0_i32 = arith.constant 0 : i32
    %c0_i32_0 = arith.constant 0 : i32
    %c0_i32_1 = arith.constant 0 : i32
    return %c0_i32, %c0_i32_0 : i32, i32
  }
  func.func @transform_3(%arg0: i32, %arg1: i32) -> (i32, i32, i32, i32, i32) {
    %c0_i32 = arith.constant 0 : i32
    %c0_i32_0 = arith.constant 0 : i32
    %c0_i32_1 = arith.constant 0 : i32
    %c0_i32_2 = arith.constant 0 : i32
    return %arg0, %arg1, %c0_i32, %c0_i32_0, %c0_i32_1 : i32, i32, i32, i32, i32
  }
  func.func @transform_4(%arg0: i32, %arg1: i32) -> (i32, i32, i32, i32, i32) {
    %c0_i32 = arith.constant 0 : i32
    %c0_i32_0 = arith.constant 0 : i32
    %c0_i32_1 = arith.constant 0 : i32
    %c0_i32_2 = arith.constant 0 : i32
    return %arg0, %arg1, %c0_i32, %c0_i32_0, %c0_i32_1 : i32, i32, i32, i32, i32
  }
}

</mosaic_0001>

<llo_original>
// kernel: down_transition_forward.4
$region0: #{down_transition_forward.4}
  #allocation0 [shape = 'u32[]', space=smem, size = 0x4, offset = 0x4, fixed_abs, tag = 'smem constant byte address 0x4 - core index']
  #allocation1 [shape = 'u32[144,128]{1,0:T(1,128)}', space=vmem, size = 0x12000, scoped, tag = 'internal scratch']
  #allocation2 [shape = 'f32[64,32]{1,0:T(8,128)}', space=vmem, size = 0x8000, scoped, tag = 'scratch operand']
  %s0 = inlined_call_operand.vmem [shape: f32[2,10,10,10,3], index: 0, kind: input, shape index: {}]
  %s1 = inlined_call_operand.vmem [shape: f32[3,9,3,32], index: 1, kind: input, shape index: {}]
  %s2 = inlined_call_operand.vmem [shape: f32[2,8,64,32], index: 2, kind: output, shape index: {0}]
  %s3 = inlined_call_operand.vmem [shape: f32[2,8,1,32], index: 3, kind: output, shape index: {1}]
  %s4 = inlined_call_operand.vmem [shape: f32[2,8,1,32], index: 4, kind: output, shape index: {2}]
  %5 = xla_tuple %s2, %s3, %s4
  %s6 = sld [smem:[#allocation0]]
  $region65: #{down_transition_forward.4} parent=0
    _
  %s8 = ssub.s32 1, %s6
  %s9 = scalar_select 0, %s8, %s6
  loop: start=0, step=1, limit=50
  $region2: #{down_transition_forward.4} parent=0 // loop_pre_header
    _
  $region3: #{down_transition_forward.4} parent=0 // loop_header
    %s11 = sphi 0, %s15
    %p12 = scmp.ge.s32.totalorder %s11, 50
    %s18 = sphi 0, %s37
    %s19 = sphi 0, %s33
    %s20 = sphi 0, %s29
    %s21 = sphi 0, %s18
    %s22 = sphi 0, %s19
    %s23 = sphi 0, %s20
    %s24 = sphi 0, %s21
    %s25 = sphi 0, %s22
    %s26 = sphi 0, %s23
    %s44 = sphi 0, %s46
    %s47 = sphi 0, %s44
    %s48 = sphi 0, %s47
    %s64 = sphi 0, %s48
    %s70 = sphi 0, %s72
    %s73 = sphi 0, %s70
    %s74 = sphi 0, %s73
    %s90 = sphi 0, %s74
    %s98 = sphi 0, %s100
    %s101 = sphi 0, %s98
    %s102 = sphi 0, %s101
    %s118 = sphi 0, %s102
    %s126 = sphi 0, %s128
    %s129 = sphi 0, %s126
    %s130 = sphi 0, %s129
    %s146 = sphi 0, %s130
    %s154 = sphi 0, %s156
    %s157 = sphi 0, %s154
    %s158 = sphi 0, %s157
    %s174 = sphi 0, %s158
  $region4: #{down_transition_forward.4} parent=0 // loop_header_branch
    %14 = sbr.rel (%p12) target = $region8
  $region5: #{down_transition_forward.4} parent=0 // loop_body
    %s16 = ssub.s32 %s11, 1
    %s17 = ssub.s32 %s11, 2
    %s27 = sadd.s32 1, %s20
    %p28 = scmp.ge.s32.totalorder %s27, 3
    %s29 = scalar_select %p28, 0, %s27
    %s30 = sadd.s32 1, %s19
    %s31 = scalar_select %p28, %s30, %s19
    %p32 = scmp.ge.s32.totalorder %s31, 8
    %s33 = scalar_select %p32, 0, %s31
    %s34 = sadd.s32 1, %s18
    %s35 = scalar_select %p32, %s34, %s18
    %p36 = scmp.ge.s32.totalorder %s35, 2
    %s37 = scalar_select %p36, 0, %s35
    %s38 = sadd.s32 %s19, %s20
    %s39 = sadd.s32 %s33, %s29
    %s40 = ssub.s32 %s18, %s37
    %s41 = ssub.s32 %s38, %s39
    %s42 = sor.u32 %s40, %s41
    %p43 = scmp.eq.s32.totalorder %s42, 0
    %s45 = sadd.s32 %s44, 1
    %s46 = scalar_select %p43, %s44, %s45
    %p49 = pneg %p43
    %p50 = scmp.eq.s32.totalorder %s11, 47
    %p51 = por %p49, %p50
    %p52 = scmp.ne.s32.totalorder %s44, %s47
    %p53 = scmp.eq.s32.totalorder %s11, 0
    %p54 = por %p52, %p53
    %p55 = scmp.ne.s32.totalorder %s44, %s47
    %p56 = scmp.eq.s32.totalorder %s16, 47
    %p57 = por %p55, %p56
    %p58 = scmp.ne.s32.totalorder %s47, %s48
    %p59 = scmp.eq.s32.totalorder %s16, 0
    %p60 = por %p58, %p59
    %p61 = scmp.ne.s32.totalorder %s47, %s48
    %p62 = scmp.eq.s32.totalorder %s17, 47
    %p63 = por %p61, %p62
    %p65 = scmp.ne.s32.totalorder %s48, %s64
    %p66 = scmp.eq.s32.totalorder %s17, 0
    %p67 = por %p65, %p66
    %s68 = ssub.s32 %s20, %s29
    %p69 = scmp.eq.s32.totalorder %s68, 0
    %s71 = sadd.s32 %s70, 1
    %s72 = scalar_select %p69, %s70, %s71
    %p75 = pneg %p69
    %p76 = scmp.eq.s32.totalorder %s11, 47
    %p77 = por %p75, %p76
    %p78 = scmp.ne.s32.totalorder %s70, %s73
    %p79 = scmp.eq.s32.totalorder %s11, 0
    %p80 = por %p78, %p79
    %p81 = scmp.ne.s32.totalorder %s70, %s73
    %p82 = scmp.eq.s32.totalorder %s16, 47
    %p83 = por %p81, %p82
    %p84 = scmp.ne.s32.totalorder %s73, %s74
    %p85 = scmp.eq.s32.totalorder %s16, 0
    %p86 = por %p84, %p85
    %p87 = scmp.ne.s32.totalorder %s73, %s74
    %p88 = scmp.eq.s32.totalorder %s17, 47
    %p89 = por %p87, %p88
    %p91 = scmp.ne.s32.totalorder %s74, %s90
    %p92 = scmp.eq.s32.totalorder %s17, 0
    %p93 = por %p91, %p92
    %s94 = ssub.s32 %s18, %s37
    %s95 = ssub.s32 %s19, %s33
    %s96 = sor.u32 %s94, %s95
    %p97 = scmp.eq.s32.totalorder %s96, 0
    %s99 = sadd.s32 %s98, 1
    %s100 = scalar_select %p97, %s98, %s99
    %p103 = pneg %p97
    %p104 = scmp.eq.s32.totalorder %s11, 47
    %p105 = por %p103, %p104
    %p106 = scmp.ne.s32.totalorder %s98, %s101
    %p107 = scmp.eq.s32.totalorder %s11, 0
    %p108 = por %p106, %p107
    %p109 = scmp.ne.s32.totalorder %s98, %s101
    %p110 = scmp.eq.s32.totalorder %s16, 47
    %p111 = por %p109, %p110
    %p112 = scmp.ne.s32.totalorder %s101, %s102
    %p113 = scmp.eq.s32.totalorder %s16, 0
    %p114 = por %p112, %p113
    %p115 = scmp.ne.s32.totalorder %s101, %s102
    %p116 = scmp.eq.s32.totalorder %s17, 47
    %p117 = por %p115, %p116
    %p119 = scmp.ne.s32.totalorder %s102, %s118
    %p120 = scmp.eq.s32.totalorder %s17, 0
    %p121 = por %p119, %p120
    %s122 = ssub.s32 %s18, %s37
    %s123 = ssub.s32 %s19, %s33
    %s124 = sor.u32 %s122, %s123
    %p125 = scmp.eq.s32.totalorder %s124, 0
    %s127 = sadd.s32 %s126, 1
    %s128 = scalar_select %p125, %s126, %s127
    %p131 = pneg %p125
    %p132 = scmp.eq.s32.totalorder %s11, 47
    %p133 = por %p131, %p132
    %p134 = scmp.ne.s32.totalorder %s126, %s129
    %p135 = scmp.eq.s32.totalorder %s11, 0
    %p136 = por %p134, %p135
    %p137 = scmp.ne.s32.totalorder %s126, %s129
    %p138 = scmp.eq.s32.totalorder %s16, 47
    %p139 = por %p137, %p138
    %p140 = scmp.ne.s32.totalorder %s129, %s130
    %p141 = scmp.eq.s32.totalorder %s16, 0
    %p142 = por %p140, %p141
    %p143 = scmp.ne.s32.totalorder %s129, %s130
    %p144 = scmp.eq.s32.totalorder %s17, 47
    %p145 = por %p143, %p144
    %p147 = scmp.ne.s32.totalorder %s130, %s146
    %p148 = scmp.eq.s32.totalorder %s17, 0
    %p149 = por %p147, %p148
    %s150 = ssub.s32 %s18, %s37
    %s151 = ssub.s32 %s19, %s33
    %s152 = sor.u32 %s150, %s151
    %p153 = scmp.eq.s32.totalorder %s152, 0
    %s155 = sadd.s32 %s154, 1
    %s156 = scalar_select %p153, %s154, %s155
    %p159 = pneg %p153
    %p160 = scmp.eq.s32.totalorder %s11, 47
    %p161 = por %p159, %p160
    %p162 = scmp.ne.s32.totalorder %s154, %s157
    %p163 = scmp.eq.s32.totalorder %s11, 0
    %p164 = por %p162, %p163
    %p165 = scmp.ne.s32.totalorder %s154, %s157
    %p166 = scmp.eq.s32.totalorder %s16, 47
    %p167 = por %p165, %p166
    %p168 = scmp.ne.s32.totalorder %s157, %s158
    %p169 = scmp.eq.s32.totalorder %s16, 0
    %p170 = por %p168, %p169
    %p171 = scmp.ne.s32.totalorder %s157, %s158
    %p172 = scmp.eq.s32.totalorder %s17, 47
    %p173 = por %p171, %p172
    %p175 = scmp.ne.s32.totalorder %s158, %s174
    %p176 = scmp.eq.s32.totalorder %s17, 0
    %p177 = por %p175, %p176
    %p178 = scmp.le.s32.totalorder 1, %s11
    %p179 = scmp.lt.s32.totalorder %s11, 49
    %p180 = pnand %p178, %p179
    %p181 = pneg %p180
    // Predicated region
    $region9: #{down_transition_forward.4} parent=5 // pred_check
      _
    $region10: #{down_transition_forward.4} parent=5 // pred_check_branch
      %183 = sbr.rel (%p180) target = $region12
    $region11: #{down_transition_forward.4} parent=5 // pred_region
      %s184 = ssub.s32 %s11, 1
    $region12: #{down_transition_forward.4} parent=5 // pred_fallthru
      _
    %p185 = scmp.lt.s32.totalorder %s11, 48
    // Predicated region
    $region13: #{down_transition_forward.4} parent=5 // pred_check
      %p186 = pneg %p185
    $region14: #{down_transition_forward.4} parent=5 // pred_check_branch
      %188 = sbr.rel (%p186) target = $region16
    $region15: #{down_transition_forward.4} parent=5 // pred_region
      // Predicated region
      $region17: #{down_transition_forward.4} parent=15 // pred_check
        %p189 = pneg %p54
      $region18: #{down_transition_forward.4} parent=15 // pred_check_branch
        %191 = sbr.rel (%p189) target = $region20
      $region19: #{down_transition_forward.4} parent=15 // pred_region
        %s192 = sadd.s32 %s19, %s20
        %p193 = scmp.lt.s32.totalorder %s18, 1
        %s194 = scalar_select %p193, %s18, 1
        %p195 = scmp.lt.s32.totalorder %s192, 9
        %s196 = scalar_select %p195, %s192, 9
        %s197 = smul.addr %s196, 20
        %s198 = smul.addr %s194, 200
        %s199 = sadd.s32 %s197, %s198
        %s200 = smul.addr %s199, 8
        %s201 = scalar_lea.vmem %s0, %s200
        %s202 = sadd.s32 %s19, %s20
      $region20: #{down_transition_forward.4} parent=15 // pred_fallthru
        _
      // Predicated region
      $region21: #{down_transition_forward.4} parent=15 // pred_check
        %p203 = pneg %p80
      $region22: #{down_transition_forward.4} parent=15 // pred_check_branch
        %205 = sbr.rel (%p203) target = $region24
      $region23: #{down_transition_forward.4} parent=15 // pred_region
        %p206 = scmp.lt.s32.totalorder %s20, 2
        %s207 = scalar_select %p206, %s20, 2
        %s208 = smul.addr %s207, 9
        %s209 = smul.addr %s208, 4
        %s210 = scalar_lea.vmem %s1, %s209
      $region24: #{down_transition_forward.4} parent=15 // pred_fallthru
        _
    $region16: #{down_transition_forward.4} parent=5 // pred_fallthru
      _
    %p211 = scmp.le.s32.totalorder 1, %s11
    %p212 = scmp.lt.s32.totalorder %s11, 49
    %p213 = pnand %p211, %p212
    %p214 = pneg %p213
    // Predicated region
    $region25: #{down_transition_forward.4} parent=5 // pred_check
      _
    $region26: #{down_transition_forward.4} parent=5 // pred_check_branch
      %216 = sbr.rel (%p213) target = $region28
    $region27: #{down_transition_forward.4} parent=5 // pred_region
      %s217 = ssub.s32 %s11, 1
      %s218 = sadd.s32 %s22, %s23
      %p219 = scmp.lt.s32.totalorder %s21, 1
      %s220 = scalar_select %p219, %s21, 1
      %p221 = scmp.lt.s32.totalorder %s218, 9
      %s222 = scalar_select %p221, %s218, 9
      %s223 = smul.addr %s222, 20
      %s224 = smul.addr %s220, 200
      %s225 = sadd.s32 %s223, %s224
      %s226 = smul.addr %s225, 8
      %s227 = scalar_lea.vmem %s0, %s226
      %p228 = pneg %p60
      %p229 = pneg %p57
      %p230 = scmp.lt.s32.totalorder %s23, 2
      %s231 = scalar_select %p230, %s23, 2
      %s232 = smul.addr %s231, 9
      %s233 = smul.addr %s232, 4
      %s234 = scalar_lea.vmem %s1, %s233
      %p235 = pneg %p86
      %p236 = pneg %p83
      %p237 = pneg %p114
      %p238 = pneg %p111
      %p239 = scmp.lt.s32.totalorder %s21, 1
      %s240 = scalar_select %p239, %s21, 1
      %p241 = scmp.lt.s32.totalorder %s22, 7
      %s242 = scalar_select %p241, %s22, 7
      %s243 = smul.addr %s242, 8
      %s244 = smul.addr %s240, 64
      %s245 = sadd.s32 %s243, %s244
      %s246 = smul.addr %s245, 8
      %s247 = scalar_lea.vmem %s2, %s246
      %p248 = pneg %p142
      %p249 = pneg %p139
      %p250 = scmp.lt.s32.totalorder %s21, 1
      %s251 = scalar_select %p250, %s21, 1
      %p252 = scmp.lt.s32.totalorder %s22, 7
      %s253 = scalar_select %p252, %s22, 7
      %s254 = smul.addr %s251, 8
      %s255 = sadd.s32 %s253, %s254
      %s256 = scalar_lea.vmem %s3, %s255
      %p257 = pneg %p170
      %p258 = pneg %p167
      %p259 = scmp.lt.s32.totalorder %s21, 1
      %s260 = scalar_select %p259, %s21, 1
      %p261 = scmp.lt.s32.totalorder %s22, 7
      %s262 = scalar_select %p261, %s22, 7
      %s263 = smul.addr %s260, 8
      %s264 = sadd.s32 %s262, %s263
      %s265 = scalar_lea.vmem %s4, %s264
      %s266 = sadd.s32 %s22, %s23
      %p267 = scmp.lt.s32.totalorder %s21, 1
      %s268 = scalar_select %p267, %s21, 1
      %p269 = scmp.lt.s32.totalorder %s266, 9
      %s270 = scalar_select %p269, %s266, 9
      %s271 = smul.addr %s270, 20
      %s272 = smul.addr %s268, 200
      %s273 = sadd.s32 %s271, %s272
      %s274 = smul.addr %s273, 8
      %s275 = scalar_lea.vmem %s0, %s274
      %s276 = sadd.s32 %s22, %s23
      %p277 = scmp.lt.s32.totalorder %s23, 2
      %s278 = scalar_select %p277, %s23, 2
      %s279 = smul.addr %s278, 9
      %s280 = smul.addr %s279, 4
      %s281 = scalar_lea.vmem %s1, %s280
      %p282 = scmp.lt.s32.totalorder %s21, 1
      %s283 = scalar_select %p282, %s21, 1
      %p284 = scmp.lt.s32.totalorder %s22, 7
      %s285 = scalar_select %p284, %s22, 7
      %s286 = smul.addr %s285, 8
      %s287 = smul.addr %s283, 64
      %s288 = sadd.s32 %s286, %s287
      %s289 = smul.addr %s288, 8
      %s290 = scalar_lea.vmem %s2, %s289
      %p291 = scmp.lt.s32.totalorder %s21, 1
      %s292 = scalar_select %p291, %s21, 1
      %p293 = scmp.lt.s32.totalorder %s22, 7
      %s294 = scalar_select %p293, %s22, 7
      %s295 = smul.addr %s292, 8
      %s296 = sadd.s32 %s294, %s295
      %s297 = scalar_lea.vmem %s3, %s296
      %p298 = scmp.lt.s32.totalorder %s21, 1
      %s299 = scalar_select %p298, %s21, 1
      %p300 = scmp.lt.s32.totalorder %s22, 7
      %s301 = scalar_select %p300, %s22, 7
      %s302 = smul.addr %s299, 8
      %s303 = sadd.s32 %s301, %s302
      %s304 = scalar_lea.vmem %s4, %s303
      %p305 = scmp.eq.s32.totalorder %s23, 0
      // Predicated region
      $region29: #{down_transition_forward.4} parent=27 // pred_check
        %p306 = pneg %p305
      $region30: #{down_transition_forward.4} parent=27 // pred_check_branch
        %308 = sbr.rel (%p306) target = $region32
      $region31: #{down_transition_forward.4} parent=27 // pred_region
        %vm309 = vcmask 261120
        %310 = vst.msk [vmem:[#allocation2] sm:$0xff] %vm309, 0.0
        %311 = vst.msk [vmem:[#allocation2 + $0x8] sm:$0xff] %vm309, 0.0
        %312 = vst.msk [vmem:[#allocation2 + $0x10] sm:$0xff] %vm309, 0.0
        %313 = vst.msk [vmem:[#allocation2 + $0x18] sm:$0xff] %vm309, 0.0
        %314 = vst.msk [vmem:[#allocation2 + $0x20] sm:$0xff] %vm309, 0.0
        %315 = vst.msk [vmem:[#allocation2 + $0x28] sm:$0xff] %vm309, 0.0
        %316 = vst.msk [vmem:[#allocation2 + $0x30] sm:$0xff] %vm309, 0.0
        %317 = vst.msk [vmem:[#allocation2 + $0x38] sm:$0xff] %vm309, 0.0
      $region32: #{down_transition_forward.4} parent=27 // pred_fallthru
        _
      %v318 = vld [vmem:[%s275] sm:$0xff]
      %v319 = vld [vmem:[%s275 + $0x8] sm:$0x3]
      %v320 = vld [vmem:[%s275 + $0x10] sm:$0xff]
      %v321 = vld [vmem:[%s275 + $0x18] sm:$0x3]
      %v322 = vld [vmem:[%s275 + $0x20] sm:$0xff]
      %v323 = vld [vmem:[%s275 + $0x28] sm:$0x3]
      %v324 = vld [vmem:[%s275 + $0x30] sm:$0xff]
      %v325 = vld [vmem:[%s275 + $0x38] sm:$0x3]
      %v326 = vld [vmem:[%s275 + $0x40] sm:$0xff]
      %v327 = vld [vmem:[%s275 + $0x48] sm:$0x3]
      %v328 = vld [vmem:[%s275 + $0x50] sm:$0xff]
      %v329 = vld [vmem:[%s275 + $0x58] sm:$0x3]
      %v330 = vld [vmem:[%s275 + $0x60] sm:$0xff]
      %v331 = vld [vmem:[%s275 + $0x68] sm:$0x3]
      %v332 = vld [vmem:[%s275 + $0x70] sm:$0xff]
      %v333 = vld [vmem:[%s275 + $0x78] sm:$0x3]
      %v334 = vld [vmem:[%s275 + $0x80] sm:$0xff]
      %v335 = vld [vmem:[%s275 + $0x88] sm:$0x3]
      %v336 = vld [vmem:[%s275 + $0x90] sm:$0xff]
      %v337 = vld [vmem:[%s275 + $0x98] sm:$0x3]
      %v338 = vld [vmem:[%s281] sm:$0x7]
      %vm355 = vcmask 1046528
      %v356 = vrot.slane %v318, 1
      %v357 = vrot.slane %v319, 1
      %v358 = vsel %vm355, %v356, %v357
      %v359 = vrot.slane %v320, 1
      %v360 = vrot.slane %v321, 1
      %v361 = vsel %vm355, %v359, %v360
      %v362 = vrot.slane %v322, 1
      %v363 = vrot.slane %v323, 1
      %v364 = vsel %vm355, %v362, %v363
      %v365 = vrot.slane %v324, 1
      %v366 = vrot.slane %v325, 1
      %v367 = vsel %vm355, %v365, %v366
      %v368 = vrot.slane %v326, 1
      %v369 = vrot.slane %v327, 1
      %v370 = vsel %vm355, %v368, %v369
      %v371 = vrot.slane %v328, 1
      %v372 = vrot.slane %v329, 1
      %v373 = vsel %vm355, %v371, %v372
      %v374 = vrot.slane %v330, 1
      %v375 = vrot.slane %v331, 1
      %v376 = vsel %vm355, %v374, %v375
      %v377 = vrot.slane %v332, 1
      %v378 = vrot.slane %v333, 1
      %v379 = vsel %vm355, %v377, %v378
      %s380 = scalar_lea.vmem %s281, 4
      %v381 = vld [vmem:[%s380] sm:$0x7]
      %vm382 = vcmask 23552
      %v383 = vsel %vm382, %v358, 0
      %v385 = vsel %vm382, %v361, 0
      %v387 = vsel %vm382, %v364, 0
      %v389 = vsel %vm382, %v367, 0
      %v391 = vsel %vm382, %v370, 0
      %v393 = vsel %vm382, %v373, 0
      %v395 = vsel %vm382, %v376, 0
      %v397 = vsel %vm382, %v379, 0
      %vm399 = vcmask 1042432
      %v401 = vsel %vm399, %v381, 0
      %403 = vmatprep.subr.mxu0 0.0
      %404 = vmatpush1.msra.mxu0 %v401
      %405 = vmatprep.subr.mxu0 0.0
      %406 = vmatpush1.msra.mxu0 0.0
      %407 = vmatprep.subr.mxu0 0.0
      %408 = vmatpush1.msra.mxu0 0.0
      %409 = vmatprep.subr.mxu0 0.0
      %410 = vmatpush1.msra.mxu0 0.0
      %411 = vmatprep.subr.mxu0 0.0
      %412 = vmatpush1.msra.mxu0 0.0
      %413 = vmatprep.subr.mxu0 0.0
      %414 = vmatpush1.msra.mxu0 0.0
      %415 = vmatprep.subr.mxu0 0.0
      %416 = vmatpush1.msra.mxu0 0.0
      %417 = vmatprep.subr.mxu0 0.0
      %418 = vmatpush1.msra.mxu0 0.0
      %419 = vmatprep.subr.mxu0 0.0
      %420 = vmatpush1.msra.mxu0 0.0
      %421 = vmatprep.subr.mxu0 0.0
      %422 = vmatpush1.msra.mxu0 0.0
      %423 = vmatprep.subr.mxu0 0.0
      %424 = vmatpush1.msra.mxu0 0.0
      %425 = vmatprep.subr.mxu0 0.0
      %426 = vmatpush1.msra.mxu0 0.0
      %427 = vmatprep.subr.mxu0 0.0
      %428 = vmatpush1.msra.mxu0 0.0
      %429 = vmatprep.subr.mxu0 0.0
      %430 = vmatpush1.msra.mxu0 0.0
      %431 = vmatprep.subr.mxu0 0.0
      %432 = vmatpush1.msra.mxu0 0.0
      %433 = vmatprep.subr.mxu0 0.0
      %434 = vmatpush1.msra.mxu0 0.0
      %435 = vmatprep.subr.mxu0 0.0
      %436 = vmatpush1.msra.mxu0 0.0
      %437 = vmatprep.subr.mxu0 0.0
      %438 = vmatpush1.msra.mxu0 0.0
      %439 = vmatprep.subr.mxu0 0.0
      %440 = vmatpush1.msra.mxu0 0.0
      %441 = vmatprep.subr.mxu0 0.0
      %442 = vmatpush1.msra.mxu0 0.0
      %443 = vmatprep.subr.mxu0 0.0
      %444 = vmatpush1.msra.mxu0 0.0
      %445 = vmatprep.subr.mxu0 0.0
      %446 = vmatpush1.msra.mxu0 0.0
      %447 = vmatprep.subr.mxu0 0.0
      %448 = vmatpush1.msra.mxu0 0.0
      %449 = vmatprep.subr.mxu0 0.0
      %450 = vmatpush1.msra.mxu0 0.0
      %451 = vmatprep.subr.mxu0 0.0
      %452 = vmatpush1.msra.mxu0 0.0
      %453 = vmatprep.subr.mxu0 0.0
      %454 = vmatpush1.msra.mxu0 0.0
      %455 = vmatprep.subr.mxu0 0.0
      %456 = vmatpush1.msra.mxu0 0.0
      %457 = vmatprep.subr.mxu0 0.0
      %458 = vmatpush1.msra.mxu0 0.0
      %459 = vmatprep.subr.mxu0 0.0
      %460 = vmatpush1.msra.mxu0 0.0
      %461 = vmatprep.subr.mxu0 0.0
      %462 = vmatpush1.msra.mxu0 0.0
      %463 = vmatprep.subr.mxu0 0.0
      %464 = vmatpush1.msra.mxu0 0.0
      %465 = vmatprep.subr.mxu0 0.0
      %466 = vmatpush1.msra.mxu0 0.0
      %467 = vmatprep.mubr.f32.mxu0 0.0
      %468 = vmatmul.mubr.f32.gmra.mrb[0].mxu0 %v383
      %v469 = vpop.f32.mrb[0].mxu0
      %v470 = vadd.f32 0.0, %v469
      %v471 = vpop.f32.mrb[0].mxu0
      %472 = vmatprep.mubr.f32.mxu0 0.0
      %473 = vmatmul.mubr.f32.gmra.mrb[0].mxu0 %v385
      %v474 = vpop.f32.mrb[0].mxu0
      %v475 = vadd.f32 0.0, %v474
      %v476 = vpop.f32.mrb[0].mxu0
      %477 = vmatprep.mubr.f32.mxu0 0.0
      %478 = vmatmul.mubr.f32.gmra.mrb[0].mxu0 %v387
      %v479 = vpop.f32.mrb[0].mxu0
      %v480 = vadd.f32 0.0, %v479
      %v481 = vpop.f32.mrb[0].mxu0
      %482 = vmatprep.mubr.f32.mxu0 0.0
      %483 = vmatmul.mubr.f32.gmra.mrb[0].mxu0 %v389
      %v484 = vpop.f32.mrb[0].mxu0
      %v485 = vadd.f32 0.0, %v484
      %v486 = vpop.f32.mrb[0].mxu0
      %487 = vmatprep.mubr.f32.mxu0 0.0
      %488 = vmatmul.mubr.f32.gmra.mrb[0].mxu0 %v391
      %v489 = vpop.f32.mrb[0].mxu0
      %v490 = vadd.f32 0.0, %v489
      %v491 = vpop.f32.mrb[0].mxu0
      %492 = vmatprep.mubr.f32.mxu0 0.0
      %493 = vmatmul.mubr.f32.gmra.mrb[0].mxu0 %v393
      %v494 = vpop.f32.mrb[0].mxu0
      %v495 = vadd.f32 0.0, %v494
      %v496 = vpop.f32.mrb[0].mxu0
      %497 = vmatprep.mubr.f32.mxu0 0.0
      %498 = vmatmul.mubr.f32.gmra.mrb[0].mxu0 %v395
      %v499 = vpop.f32.mrb[0].mxu0
      %v500 = vadd.f32 0.0, %v499
      %v501 = vpop.f32.mrb[0].mxu0
      %502 = vmatprep.mubr.f32.mxu0 0.0
      %503 = vmatmul.mubr.f32.gmra.mrb[0].mxu0 %v397
      %v504 = vpop.f32.mrb[0].mxu0
      %v505 = vadd.f32 0.0, %v504
      %v506 = vpop.f32.mrb[0].mxu0
      %507 = vdwg.mxu0
      %v508 = vsel %vm382, %v318, 0
      %v510 = vsel %vm382, %v320, 0
      %v512 = vsel %vm382, %v322, 0
      %v514 = vsel %vm382, %v324, 0
      %v516 = vsel %vm382, %v326, 0
      %v518 = vsel %vm382, %v328, 0
      %v520 = vsel %vm382, %v330, 0
      %v522 = vsel %vm382, %v332, 0
      %v525 = vsel %vm399, %v338, 0
      %527 = vmatprep.subr.mxu0 0.0
      %528 = vmatpush1.msra.mxu0 %v525
      %529 = vmatprep.subr.mxu0 0.0
      %530 = vmatpush1.msra.mxu0 0.0
      %531 = vmatprep.subr.mxu0 0.0
      %532 = vmatpush1.msra.mxu0 0.0
      %533 = vmatprep.subr.mxu0 0.0
      %534 = vmatpush1.msra.mxu0 0.0
      %535 = vmatprep.subr.mxu0 0.0
      %536 = vmatpush1.msra.mxu0 0.0
      %537 = vmatprep.subr.mxu0 0.0
      %538 = vmatpush1.msra.mxu0 0.0
      %539 = vmatprep.subr.mxu0 0.0
      %540 = vmatpush1.msra.mxu0 0.0
      %541 = vmatprep.subr.mxu0 0.0
      %542 = vmatpush1.msra.mxu0 0.0
      %543 = vmatprep.subr.mxu0 0.0
      %544 = vmatpush1.msra.mxu0 0.0
      %545 = vmatprep.subr.mxu0 0.0
      %546 = vmatpush1.msra.mxu0 0.0
      %547 = vmatprep.subr.mxu0 0.0
      %548 = vmatpush1.msra.mxu0 0.0
      %549 = vmatprep.subr.mxu0 0.0
      %550 = vmatpush1.msra.mxu0 0.0
      %551 = vmatprep.subr.mxu0 0.0
      %552 = vmatpush1.msra.mxu0 0.0
      %553 = vmatprep.subr.mxu0 0.0
      %554 = vmatpush1.msra.mxu0 0.0
      %555 = vmatprep.subr.mxu0 0.0
      %556 = vmatpush1.msra.mxu0 0.0
      %557 = vmatprep.subr.mxu0 0.0
      %558 = vmatpush1.msra.mxu0 0.0
      %559 = vmatprep.subr.mxu0 0.0
      %560 = vmatpush1.msra.mxu0 0.0
      %561 = vmatprep.subr.mxu0 0.0
      %562 = vmatpush1.msra.mxu0 0.0
      %563 = vmatprep.subr.mxu0 0.0
      %564 = vmatpush1.msra.mxu0 0.0
      %565 = vmatprep.subr.mxu0 0.0
      %566 = vmatpush1.msra.mxu0 0.0
      %567 = vmatprep.subr.mxu0 0.0
      %568 = vmatpush1.msra.mxu0 0.0
      %569 = vmatprep.subr.mxu0 0.0
      %570 = vmatpush1.msra.mxu0 0.0
      %571 = vmatprep.subr.mxu0 0.0
      %572 = vmatpush1.msra.mxu0 0.0
      %573 = vmatprep.subr.mxu0 0.0
      %574 = vmatpush1.msra.mxu0 0.0
      %575 = vmatprep.subr.mxu0 0.0
      %576 = vmatpush1.msra.mxu0 0.0
      %577 = vmatprep.subr.mxu0 0.0
      %578 = vmatpush1.msra.mxu0 0.0
      %579 = vmatprep.subr.mxu0 0.0
      %580 = vmatpush1.msra.mxu0 0.0
      %581 = vmatprep.subr.mxu0 0.0
      %582 = vmatpush1.msra.mxu0 0.0
      %583 = vmatprep.subr.mxu0 0.0
      %584 = vmatpush1.msra.mxu0 0.0
      %585 = vmatprep.subr.mxu0 0.0
      %586 = vmatpush1.msra.mxu0 0.0
      %587 = vmatprep.subr.mxu0 0.0
      %588 = vmatpush1.msra.mxu0 0.0
      %589 = vmatprep.subr.mxu0 0.0
      %590 = vmatpush1.msra.mxu0 0.0
      %591 = vmatprep.mubr.f32.mxu0 0.0
      %592 = vmatmul.mubr.f32.gmra.mrb[0].mxu0 %v508
      %v593 = vpop.f32.mrb[0].mxu0
      %v594 = vadd.f32 %v470, %v593
      %v595 = vpop.f32.mrb[0].mxu0
      %596 = vmatprep.mubr.f32.mxu0 0.0
      %597 = vmatmul.mubr.f32.gmra.mrb[0].mxu0 %v510
      %v598 = vpop.f32.mrb[0].mxu0
      %v599 = vadd.f32 %v475, %v598
      %v600 = vpop.f32.mrb[0].mxu0
      %601 = vmatprep.mubr.f32.mxu0 0.0
      %602 = vmatmul.mubr.f32.gmra.mrb[0].mxu0 %v512
      %v603 = vpop.f32.mrb[0].mxu0
      %v604 = vadd.f32 %v480, %v603
      %v605 = vpop.f32.mrb[0].mxu0
      %606 = vmatprep.mubr.f32.mxu0 0.0
      %607 = vmatmul.mubr.f32.gmra.mrb[0].mxu0 %v514
      %v608 = vpop.f32.mrb[0].mxu0
      %v609 = vadd.f32 %v485, %v608
      %v610 = vpop.f32.mrb[0].mxu0
      %611 = vmatprep.mubr.f32.mxu0 0.0
      %612 = vmatmul.mubr.f32.gmra.mrb[0].mxu0 %v516
      %v613 = vpop.f32.mrb[0].mxu0
      %v614 = vadd.f32 %v490, %v613
      %v615 = vpop.f32.mrb[0].mxu0
      %616 = vmatprep.mubr.f32.mxu0 0.0
      %617 = vmatmul.mubr.f32.gmra.mrb[0].mxu0 %v518
      %v618 = vpop.f32.mrb[0].mxu0
      %v619 = vadd.f32 %v495, %v618
      %v620 = vpop.f32.mrb[0].mxu0
      %621 = vmatprep.mubr.f32.mxu0 0.0
      %622 = vmatmul.mubr.f32.gmra.mrb[0].mxu0 %v520
      %v623 = vpop.f32.mrb[0].mxu0
      %v624 = vadd.f32 %v500, %v623
      %v625 = vpop.f32.mrb[0].mxu0
      %626 = vmatprep.mubr.f32.mxu0 0.0
      %627 = vmatmul.mubr.f32.gmra.mrb[0].mxu0 %v522
      %v628 = vpop.f32.mrb[0].mxu0
      %v629 = vadd.f32 %v505, %v628
      %v630 = vpop.f32.mrb[0].mxu0
      %631 = vdwg.mxu0
      %vm632 = vcmask 1045504
      %v633 = vrot.slane %v318, 2
      %v634 = vrot.slane %v319, 2
      %v635 = vsel %vm632, %v633, %v634
      %v636 = vrot.slane %v320, 2
      %v637 = vrot.slane %v321, 2
      %v638 = vsel %vm632, %v636, %v637
      %v639 = vrot.slane %v322, 2
      %v640 = vrot.slane %v323, 2
      %v641 = vsel %vm632, %v639, %v640
      %v642 = vrot.slane %v324, 2
      %v643 = vrot.slane %v325, 2
      %v644 = vsel %vm632, %v642, %v643
      %v645 = vrot.slane %v326, 2
      %v646 = vrot.slane %v327, 2
      %v647 = vsel %vm632, %v645, %v646
      %v648 = vrot.slane %v328, 2
      %v649 = vrot.slane %v329, 2
      %v650 = vsel %vm632, %v648, %v649
      %v651 = vrot.slane %v330, 2
      %v652 = vrot.slane %v331, 2
      %v653 = vsel %vm632, %v651, %v652
      %v654 = vrot.slane %v332, 2
      %v655 = vrot.slane %v333, 2
      %v656 = vsel %vm632, %v654, %v655
      %s657 = scalar_lea.vmem %s281, 8
      %v658 = vld [vmem:[%s657] sm:$0x7]
      %v659 = vsel %vm382, %v635, 0
      %v661 = vsel %vm382, %v638, 0
      %v663 = vsel %vm382, %v641, 0
      %v665 = vsel %vm382, %v644, 0
      %v667 = vsel %vm382, %v647, 0
      %v669 = vsel %vm382, %v650, 0
      %v671 = vsel %vm382, %v653, 0
      %v673 = vsel %vm382, %v656, 0
      %v676 = vsel %vm399, %v658, 0
      %678 = vmatprep.subr.mxu0 0.0
      %679 = vmatpush1.msra.mxu0 %v676
      %680 = vmatprep.subr.mxu0 0.0
      %681 = vmatpush1.msra.mxu0 0.0
      %682 = vmatprep.subr.mxu0 0.0
      %683 = vmatpush1.msra.mxu0 0.0
      %684 = vmatprep.subr.mxu0 0.0
      %685 = vmatpush1.msra.mxu0 0.0
      %686 = vmatprep.subr.mxu0 0.0
      %687 = vmatpush1.msra.mxu0 0.0
      %688 = vmatprep.subr.mxu0 0.0
      %689 = vmatpush1.msra.mxu0 0.0
      %690 = vmatprep.subr.mxu0 0.0
      %691 = vmatpush1.msra.mxu0 0.0
      %692 = vmatprep.subr.mxu0 0.0
      %693 = vmatpush1.msra.mxu0 0.0
      %694 = vmatprep.subr.mxu0 0.0
      %695 = vmatpush1.msra.mxu0 0.0
      %696 = vmatprep.subr.mxu0 0.0
      %697 = vmatpush1.msra.mxu0 0.0
      %698 = vmatprep.subr.mxu0 0.0
      %699 = vmatpush1.msra.mxu0 0.0
      %700 = vmatprep.subr.mxu0 0.0
      %701 = vmatpush1.msra.mxu0 0.0
      %702 = vmatprep.subr.mxu0 0.0
      %703 = vmatpush1.msra.mxu0 0.0
      %704 = vmatprep.subr.mxu0 0.0
      %705 = vmatpush1.msra.mxu0 0.0
      %706 = vmatprep.subr.mxu0 0.0
      %707 = vmatpush1.msra.mxu0 0.0
      %708 = vmatprep.subr.mxu0 0.0
      %709 = vmatpush1.msra.mxu0 0.0
      %710 = vmatprep.subr.mxu0 0.0
      %711 = vmatpush1.msra.mxu0 0.0
      %712 = vmatprep.subr.mxu0 0.0
      %713 = vmatpush1.msra.mxu0 0.0
      %714 = vmatprep.subr.mxu0 0.0
      %715 = vmatpush1.msra.mxu0 0.0
      %716 = vmatprep.subr.mxu0 0.0
      %717 = vmatpush1.msra.mxu0 0.0
      %718 = vmatprep.subr.mxu0 0.0
      %719 = vmatpush1.msra.mxu0 0.0
      %720 = vmatprep.subr.mxu0 0.0
      %721 = vmatpush1.msra.mxu0 0.0
      %722 = vmatprep.subr.mxu0 0.0
      %723 = vmatpush1.msra.mxu0 0.0
      %724 = vmatprep.subr.mxu0 0.0
      %725 = vmatpush1.msra.mxu0 0.0
      %726 = vmatprep.subr.mxu0 0.0
      %727 = vmatpush1.msra.mxu0 0.0
      %728 = vmatprep.subr.mxu0 0.0
      %729 = vmatpush1.msra.mxu0 0.0
      %730 = vmatprep.subr.mxu0 0.0
      %731 = vmatpush1.msra.mxu0 0.0
      %732 = vmatprep.subr.mxu0 0.0
      %733 = vmatpush1.msra.mxu0 0.0
      %734 = vmatprep.subr.mxu0 0.0
      %735 = vmatpush1.msra.mxu0 0.0
      %736 = vmatprep.subr.mxu0 0.0
      %737 = vmatpush1.msra.mxu0 0.0
      %738 = vmatprep.subr.mxu0 0.0
      %739 = vmatpush1.msra.mxu0 0.0
      %740 = vmatprep.subr.mxu0 0.0
      %741 = vmatpush1.msra.mxu0 0.0
      %742 = vmatprep.mubr.f32.mxu0 0.0
      %743 = vmatmul.mubr.f32.gmra.mrb[0].mxu0 %v659
      %v744 = vpop.f32.mrb[0].mxu0
      %v745 = vadd.f32 0.0, %v744
      %v746 = vpop.f32.mrb[0].mxu0
      %747 = vmatprep.mubr.f32.mxu0 0.0
      %748 = vmatmul.mubr.f32.gmra.mrb[0].mxu0 %v661
      %v749 = vpop.f32.mrb[0].mxu0
      %v750 = vadd.f32 0.0, %v749
      %v751 = vpop.f32.mrb[0].mxu0
      %752 = vmatprep.mubr.f32.mxu0 0.0
      %753 = vmatmul.mubr.f32.gmra.mrb[0].mxu0 %v663
      %v754 = vpop.f32.mrb[0].mxu0
      %v755 = vadd.f32 0.0, %v754
      %v756 = vpop.f32.mrb[0].mxu0
      %757 = vmatprep.mubr.f32.mxu0 0.0
      %758 = vmatmul.mubr.f32.gmra.mrb[0].mxu0 %v665
      %v759 = vpop.f32.mrb[0].mxu0
      %v760 = vadd.f32 0.0, %v759
      %v761 = vpop.f32.mrb[0].mxu0
      %762 = vmatprep.mubr.f32.mxu0 0.0
      %763 = vmatmul.mubr.f32.gmra.mrb[0].mxu0 %v667
      %v764 = vpop.f32.mrb[0].mxu0
      %v765 = vadd.f32 0.0, %v764
      %v766 = vpop.f32.mrb[0].mxu0
      %767 = vmatprep.mubr.f32.mxu0 0.0
      %768 = vmatmul.mubr.f32.gmra.mrb[0].mxu0 %v669
      %v769 = vpop.f32.mrb[0].mxu0
      %v770 = vadd.f32 0.0, %v769
      %v771 = vpop.f32.mrb[0].mxu0
      %772 = vmatprep.mubr.f32.mxu0 0.0
      %773 = vmatmul.mubr.f32.gmra.mrb[0].mxu0 %v671
      %v774 = vpop.f32.mrb[0].mxu0
      %v775 = vadd.f32 0.0, %v774
      %v776 = vpop.f32.mrb[0].mxu0
      %777 = vmatprep.mubr.f32.mxu0 0.0
      %778 = vmatmul.mubr.f32.gmra.mrb[0].mxu0 %v673
      %v779 = vpop.f32.mrb[0].mxu0
      %v780 = vadd.f32 0.0, %v779
      %v781 = vpop.f32.mrb[0].mxu0
      %782 = vdwg.mxu0
      %v783 = vadd.f32 %v594, %v745
      %v784 = vadd.f32 %v599, %v750
      %v785 = vadd.f32 %v604, %v755
      %v786 = vadd.f32 %v609, %v760
      %v787 = vadd.f32 %v614, %v765
      %v788 = vadd.f32 %v619, %v770
      %v789 = vadd.f32 %v624, %v775
      %v790 = vadd.f32 %v629, %v780
      %s791 = scalar_lea.vmem %s281, 12
      %v792 = vld [vmem:[%s791] sm:$0x7]
      %v794 = vsel %vm382, %v334, 0
      %v797 = vsel %vm399, %v792, 0
      %799 = vmatprep.subr.mxu0 0.0
      %800 = vmatpush1.msra.mxu0 %v797
      %801 = vmatprep.subr.mxu0 0.0
      %802 = vmatpush1.msra.mxu0 0.0
      %803 = vmatprep.subr.mxu0 0.0
      %804 = vmatpush1.msra.mxu0 0.0
      %805 = vmatprep.subr.mxu0 0.0
      %806 = vmatpush1.msra.mxu0 0.0
      %807 = vmatprep.subr.mxu0 0.0
      %808 = vmatpush1.msra.mxu0 0.0
      %809 = vmatprep.subr.mxu0 0.0
      %810 = vmatpush1.msra.mxu0 0.0
      %811 = vmatprep.subr.mxu0 0.0
      %812 = vmatpush1.msra.mxu0 0.0
      %813 = vmatprep.subr.mxu0 0.0
      %814 = vmatpush1.msra.mxu0 0.0
      %815 = vmatprep.subr.mxu0 0.0
      %816 = vmatpush1.msra.mxu0 0.0
      %817 = vmatprep.subr.mxu0 0.0
      %818 = vmatpush1.msra.mxu0 0.0
      %819 = vmatprep.subr.mxu0 0.0
      %820 = vmatpush1.msra.mxu0 0.0
      %821 = vmatprep.subr.mxu0 0.0
      %822 = vmatpush1.msra.mxu0 0.0
      %823 = vmatprep.subr.mxu0 0.0
      %824 = vmatpush1.msra.mxu0 0.0
      %825 = vmatprep.subr.mxu0 0.0
      %826 = vmatpush1.msra.mxu0 0.0
      %827 = vmatprep.subr.mxu0 0.0
      %828 = vmatpush1.msra.mxu0 0.0
      %829 = vmatprep.subr.mxu0 0.0
      %830 = vmatpush1.msra.mxu0 0.0
      %831 = vmatprep.subr.mxu0 0.0
      %832 = vmatpush1.msra.mxu0 0.0
      %833 = vmatprep.subr.mxu0 0.0
      %834 = vmatpush1.msra.mxu0 0.0
      %835 = vmatprep.subr.mxu0 0.0
      %836 = vmatpush1.msra.mxu0 0.0
      %837 = vmatprep.subr.mxu0 0.0
      %838 = vmatpush1.msra.mxu0 0.0
      %839 = vmatprep.subr.mxu0 0.0
      %840 = vmatpush1.msra.mxu0 0.0
      %841 = vmatprep.subr.mxu0 0.0
      %842 = vmatpush1.msra.mxu0 0.0
      %843 = vmatprep.subr.mxu0 0.0
      %844 = vmatpush1.msra.mxu0 0.0
      %845 = vmatprep.subr.mxu0 0.0
      %846 = vmatpush1.msra.mxu0 0.0
      %847 = vmatprep.subr.mxu0 0.0
      %848 = vmatpush1.msra.mxu0 0.0
      %849 = vmatprep.subr.mxu0 0.0
      %850 = vmatpush1.msra.mxu0 0.0
      %851 = vmatprep.subr.mxu0 0.0
      %852 = vmatpush1.msra.mxu0 0.0
      %853 = vmatprep.subr.mxu0 0.0
      %854 = vmatpush1.msra.mxu0 0.0
      %855 = vmatprep.subr.mxu0 0.0
      %856 = vmatpush1.msra.mxu0 0.0
      %857 = vmatprep.subr.mxu0 0.0
      %858 = vmatpush1.msra.mxu0 0.0
      %859 = vmatprep.subr.mxu0 0.0
      %860 = vmatpush1.msra.mxu0 0.0
      %861 = vmatprep.subr.mxu0 0.0
      %862 = vmatpush1.msra.mxu0 0.0
      %863 = vmatprep.mubr.f32.mxu0 0.0
      %864 = vmatmul.mubr.f32.gmra.mrb[0].mxu0 %v510
      %v865 = vpop.f32.mrb[0].mxu0
      %v866 = vadd.f32 0.0, %v865
      %v867 = vpop.f32.mrb[0].mxu0
      %868 = vmatprep.mubr.f32.mxu0 0.0
      %869 = vmatmul.mubr.f32.gmra.mrb[0].mxu0 %v512
      %v870 = vpop.f32.mrb[0].mxu0
      %v871 = vadd.f32 0.0, %v870
      %v872 = vpop.f32.mrb[0].mxu0
      %873 = vmatprep.mubr.f32.mxu0 0.0
      %874 = vmatmul.mubr.f32.gmra.mrb[0].mxu0 %v514
      %v875 = vpop.f32.mrb[0].mxu0
      %v876 = vadd.f32 0.0, %v875
      %v877 = vpop.f32.mrb[0].mxu0
      %878 = vmatprep.mubr.f32.mxu0 0.0
      %879 = vmatmul.mubr.f32.gmra.mrb[0].mxu0 %v516
      %v880 = vpop.f32.mrb[0].mxu0
      %v881 = vadd.f32 0.0, %v880
      %v882 = vpop.f32.mrb[0].mxu0
      %883 = vmatprep.mubr.f32.mxu0 0.0
      %884 = vmatmul.mubr.f32.gmra.mrb[0].mxu0 %v518
      %v885 = vpop.f32.mrb[0].mxu0
      %v886 = vadd.f32 0.0, %v885
      %v887 = vpop.f32.mrb[0].mxu0
      %888 = vmatprep.mubr.f32.mxu0 0.0
      %889 = vmatmul.mubr.f32.gmra.mrb[0].mxu0 %v520
      %v890 = vpop.f32.mrb[0].mxu0
      %v891 = vadd.f32 0.0, %v890
      %v892 = vpop.f32.mrb[0].mxu0
      %893 = vmatprep.mubr.f32.mxu0 0.0
      %894 = vmatmul.mubr.f32.gmra.mrb[0].mxu0 %v522
      %v895 = vpop.f32.mrb[0].mxu0
      %v896 = vadd.f32 0.0, %v895
      %v897 = vpop.f32.mrb[0].mxu0
      %898 = vmatprep.mubr.f32.mxu0 0.0
      %899 = vmatmul.mubr.f32.gmra.mrb[0].mxu0 %v794
      %v900 = vpop.f32.mrb[0].mxu0
      %v901 = vadd.f32 0.0, %v900
      %v902 = vpop.f32.mrb[0].mxu0
      %903 = vdwg.mxu0
      %v904 = vadd.f32 %v783, %v866
      %v905 = vadd.f32 %v784, %v871
      %v906 = vadd.f32 %v785, %v876
      %v907 = vadd.f32 %v786, %v881
      %v908 = vadd.f32 %v787, %v886
      %v909 = vadd.f32 %v788, %v891
      %v910 = vadd.f32 %v789, %v896
      %v911 = vadd.f32 %v790, %v901
      %v913 = vrot.slane %v334, 1
      %v914 = vrot.slane %v335, 1
      %v915 = vsel %vm355, %v913, %v914
      %s916 = scalar_lea.vmem %s281, 16
      %v917 = vld [vmem:[%s916] sm:$0x7]
      %v918 = vsel %vm382, %v915, 0
      %v921 = vsel %vm399, %v917, 0
      %923 = vmatprep.subr.mxu0 0.0
      %924 = vmatpush1.msra.mxu0 %v921
      %925 = vmatprep.subr.mxu0 0.0
      %926 = vmatpush1.msra.mxu0 0.0
      %927 = vmatprep.subr.mxu0 0.0
      %928 = vmatpush1.msra.mxu0 0.0
      %929 = vmatprep.subr.mxu0 0.0
      %930 = vmatpush1.msra.mxu0 0.0
      %931 = vmatprep.subr.mxu0 0.0
      %932 = vmatpush1.msra.mxu0 0.0
      %933 = vmatprep.subr.mxu0 0.0
      %934 = vmatpush1.msra.mxu0 0.0
      %935 = vmatprep.subr.mxu0 0.0
      %936 = vmatpush1.msra.mxu0 0.0
      %937 = vmatprep.subr.mxu0 0.0
      %938 = vmatpush1.msra.mxu0 0.0
      %939 = vmatprep.subr.mxu0 0.0
      %940 = vmatpush1.msra.mxu0 0.0
      %941 = vmatprep.subr.mxu0 0.0
      %942 = vmatpush1.msra.mxu0 0.0
      %943 = vmatprep.subr.mxu0 0.0
      %944 = vmatpush1.msra.mxu0 0.0
      %945 = vmatprep.subr.mxu0 0.0
      %946 = vmatpush1.msra.mxu0 0.0
      %947 = vmatprep.subr.mxu0 0.0
      %948 = vmatpush1.msra.mxu0 0.0
      %949 = vmatprep.subr.mxu0 0.0
      %950 = vmatpush1.msra.mxu0 0.0
      %951 = vmatprep.subr.mxu0 0.0
      %952 = vmatpush1.msra.mxu0 0.0
      %953 = vmatprep.subr.mxu0 0.0
      %954 = vmatpush1.msra.mxu0 0.0
      %955 = vmatprep.subr.mxu0 0.0
      %956 = vmatpush1.msra.mxu0 0.0
      %957 = vmatprep.subr.mxu0 0.0
      %958 = vmatpush1.msra.mxu0 0.0
      %959 = vmatprep.subr.mxu0 0.0
      %960 = vmatpush1.msra.mxu0 0.0
      %961 = vmatprep.subr.mxu0 0.0
      %962 = vmatpush1.msra.mxu0 0.0
      %963 = vmatprep.subr.mxu0 0.0
      %964 = vmatpush1.msra.mxu0 0.0
      %965 = vmatprep.subr.mxu0 0.0
      %966 = vmatpush1.msra.mxu0 0.0
      %967 = vmatprep.subr.mxu0 0.0
      %968 = vmatpush1.msra.mxu0 0.0
      %969 = vmatprep.subr.mxu0 0.0
      %970 = vmatpush1.msra.mxu0 0.0
      %971 = vmatprep.subr.mxu0 0.0
      %972 = vmatpush1.msra.mxu0 0.0
      %973 = vmatprep.subr.mxu0 0.0
      %974 = vmatpush1.msra.mxu0 0.0
      %975 = vmatprep.subr.mxu0 0.0
      %976 = vmatpush1.msra.mxu0 0.0
      %977 = vmatprep.subr.mxu0 0.0
      %978 = vmatpush1.msra.mxu0 0.0
      %979 = vmatprep.subr.mxu0 0.0
      %980 = vmatpush1.msra.mxu0 0.0
      %981 = vmatprep.subr.mxu0 0.0
      %982 = vmatpush1.msra.mxu0 0.0
      %983 = vmatprep.subr.mxu0 0.0
      %984 = vmatpush1.msra.mxu0 0.0
      %985 = vmatprep.subr.mxu0 0.0
      %986 = vmatpush1.msra.mxu0 0.0
      %987 = vmatprep.mubr.f32.mxu0 0.0
      %988 = vmatmul.mubr.f32.gmra.mrb[0].mxu0 %v385
      %v989 = vpop.f32.mrb[0].mxu0
      %v990 = vadd.f32 0.0, %v989
      %v991 = vpop.f32.mrb[0].mxu0
      %992 = vmatprep.mubr.f32.mxu0 0.0
      %993 = vmatmul.mubr.f32.gmra.mrb[0].mxu0 %v387
      %v994 = vpop.f32.mrb[0].mxu0
      %v995 = vadd.f32 0.0, %v994
      %v996 = vpop.f32.mrb[0].mxu0
      %997 = vmatprep.mubr.f32.mxu0 0.0
      %998 = vmatmul.mubr.f32.gmra.mrb[0].mxu0 %v389
      %v999 = vpop.f32.mrb[0].mxu0
      %v1000 = vadd.f32 0.0, %v999
      %v1001 = vpop.f32.mrb[0].mxu0
      %1002 = vmatprep.mubr.f32.mxu0 0.0
      %1003 = vmatmul.mubr.f32.gmra.mrb[0].mxu0 %v391
      %v1004 = vpop.f32.mrb[0].mxu0
      %v1005 = vadd.f32 0.0, %v1004
      %v1006 = vpop.f32.mrb[0].mxu0
      %1007 = vmatprep.mubr.f32.mxu0 0.0
      %1008 = vmatmul.mubr.f32.gmra.mrb[0].mxu0 %v393
      %v1009 = vpop.f32.mrb[0].mxu0
      %v1010 = vadd.f32 0.0, %v1009
      %v1011 = vpop.f32.mrb[0].mxu0
      %1012 = vmatprep.mubr.f32.mxu0 0.0
      %1013 = vmatmul.mubr.f32.gmra.mrb[0].mxu0 %v395
      %v1014 = vpop.f32.mrb[0].mxu0
      %v1015 = vadd.f32 0.0, %v1014
      %v1016 = vpop.f32.mrb[0].mxu0
      %1017 = vmatprep.mubr.f32.mxu0 0.0
      %1018 = vmatmul.mubr.f32.gmra.mrb[0].mxu0 %v397
      %v1019 = vpop.f32.mrb[0].mxu0
      %v1020 = vadd.f32 0.0, %v1019
      %v1021 = vpop.f32.mrb[0].mxu0
      %1022 = vmatprep.mubr.f32.mxu0 0.0
      %1023 = vmatmul.mubr.f32.gmra.mrb[0].mxu0 %v918
      %v1024 = vpop.f32.mrb[0].mxu0
      %v1025 = vadd.f32 0.0, %v1024
      %v1026 = vpop.f32.mrb[0].mxu0
      %1027 = vdwg.mxu0
      %v1028 = vadd.f32 %v904, %v990
      %v1029 = vadd.f32 %v905, %v995
      %v1030 = vadd.f32 %v906, %v1000
      %v1031 = vadd.f32 %v907, %v1005
      %v1032 = vadd.f32 %v908, %v1010
      %v1033 = vadd.f32 %v909, %v1015
      %v1034 = vadd.f32 %v910, %v1020
      %v1035 = vadd.f32 %v911, %v1025
      %v1036 = vrot.slane %v334, 2
      %v1037 = vrot.slane %v335, 2
      %v1038 = vsel %vm632, %v1036, %v1037
      %s1039 = scalar_lea.vmem %s281, 20
      %v1040 = vld [vmem:[%s1039] sm:$0x7]
      %v1041 = vsel %vm382, %v1038, 0
      %v1044 = vsel %vm399, %v1040, 0
      %1046 = vmatprep.subr.mxu0 0.0
      %1047 = vmatpush1.msra.mxu0 %v1044
      %1048 = vmatprep.subr.mxu0 0.0
      %1049 = vmatpush1.msra.mxu0 0.0
      %1050 = vmatprep.subr.mxu0 0.0
      %1051 = vmatpush1.msra.mxu0 0.0
      %1052 = vmatprep.subr.mxu0 0.0
      %1053 = vmatpush1.msra.mxu0 0.0
      %1054 = vmatprep.subr.mxu0 0.0
      %1055 = vmatpush1.msra.mxu0 0.0
      %1056 = vmatprep.subr.mxu0 0.0
      %1057 = vmatpush1.msra.mxu0 0.0
      %1058 = vmatprep.subr.mxu0 0.0
      %1059 = vmatpush1.msra.mxu0 0.0
      %1060 = vmatprep.subr.mxu0 0.0
      %1061 = vmatpush1.msra.mxu0 0.0
      %1062 = vmatprep.subr.mxu0 0.0
      %1063 = vmatpush1.msra.mxu0 0.0
      %1064 = vmatprep.subr.mxu0 0.0
      %1065 = vmatpush1.msra.mxu0 0.0
      %1066 = vmatprep.subr.mxu0 0.0
      %1067 = vmatpush1.msra.mxu0 0.0
      %1068 = vmatprep.subr.mxu0 0.0
      %1069 = vmatpush1.msra.mxu0 0.0
      %1070 = vmatprep.subr.mxu0 0.0
      %1071 = vmatpush1.msra.mxu0 0.0
      %1072 = vmatprep.subr.mxu0 0.0
      %1073 = vmatpush1.msra.mxu0 0.0
      %1074 = vmatprep.subr.mxu0 0.0
      %1075 = vmatpush1.msra.mxu0 0.0
      %1076 = vmatprep.subr.mxu0 0.0
      %1077 = vmatpush1.msra.mxu0 0.0
      %1078 = vmatprep.subr.mxu0 0.0
      %1079 = vmatpush1.msra.mxu0 0.0
      %1080 = vmatprep.subr.mxu0 0.0
      %1081 = vmatpush1.msra.mxu0 0.0
      %1082 = vmatprep.subr.mxu0 0.0
      %1083 = vmatpush1.msra.mxu0 0.0
      %1084 = vmatprep.subr.mxu0 0.0
      %1085 = vmatpush1.msra.mxu0 0.0
      %1086 = vmatprep.subr.mxu0 0.0
      %1087 = vmatpush1.msra.mxu0 0.0
      %1088 = vmatprep.subr.mxu0 0.0
      %1089 = vmatpush1.msra.mxu0 0.0
      %1090 = vmatprep.subr.mxu0 0.0
      %1091 = vmatpush1.msra.mxu0 0.0
      %1092 = vmatprep.subr.mxu0 0.0
      %1093 = vmatpush1.msra.mxu0 0.0
      %1094 = vmatprep.subr.mxu0 0.0
      %1095 = vmatpush1.msra.mxu0 0.0
      %1096 = vmatprep.subr.mxu0 0.0
      %1097 = vmatpush1.msra.mxu0 0.0
      %1098 = vmatprep.subr.mxu0 0.0
      %1099 = vmatpush1.msra.mxu0 0.0
      %1100 = vmatprep.subr.mxu0 0.0
      %1101 = vmatpush1.msra.mxu0 0.0
      %1102 = vmatprep.subr.mxu0 0.0
      %1103 = vmatpush1.msra.mxu0 0.0
      %1104 = vmatprep.subr.mxu0 0.0
      %1105 = vmatpush1.msra.mxu0 0.0
      %1106 = vmatprep.subr.mxu0 0.0
      %1107 = vmatpush1.msra.mxu0 0.0
      %1108 = vmatprep.subr.mxu0 0.0
      %1109 = vmatpush1.msra.mxu0 0.0
      %1110 = vmatprep.mubr.f32.mxu0 0.0
      %1111 = vmatmul.mubr.f32.gmra.mrb[0].mxu0 %v661
      %v1112 = vpop.f32.mrb[0].mxu0
      %v1113 = vadd.f32 0.0, %v1112
      %v1114 = vpop.f32.mrb[0].mxu0
      %1115 = vmatprep.mubr.f32.mxu0 0.0
      %1116 = vmatmul.mubr.f32.gmra.mrb[0].mxu0 %v663
      %v1117 = vpop.f32.mrb[0].mxu0
      %v1118 = vadd.f32 0.0, %v1117
      %v1119 = vpop.f32.mrb[0].mxu0
      %1120 = vmatprep.mubr.f32.mxu0 0.0
      %1121 = vmatmul.mubr.f32.gmra.mrb[0].mxu0 %v665
      %v1122 = vpop.f32.mrb[0].mxu0
      %v1123 = vadd.f32 0.0, %v1122
      %v1124 = vpop.f32.mrb[0].mxu0
      %1125 = vmatprep.mubr.f32.mxu0 0.0
      %1126 = vmatmul.mubr.f32.gmra.mrb[0].mxu0 %v667
      %v1127 = vpop.f32.mrb[0].mxu0
      %v1128 = vadd.f32 0.0, %v1127
      %v1129 = vpop.f32.mrb[0].mxu0
      %1130 = vmatprep.mubr.f32.mxu0 0.0
      %1131 = vmatmul.mubr.f32.gmra.mrb[0].mxu0 %v669
      %v1132 = vpop.f32.mrb[0].mxu0
      %v1133 = vadd.f32 0.0, %v1132
      %v1134 = vpop.f32.mrb[0].mxu0
      %1135 = vmatprep.mubr.f32.mxu0 0.0
      %1136 = vmatmul.mubr.f32.gmra.mrb[0].mxu0 %v671
      %v1137 = vpop.f32.mrb[0].mxu0
      %v1138 = vadd.f32 0.0, %v1137
      %v1139 = vpop.f32.mrb[0].mxu0
      %1140 = vmatprep.mubr.f32.mxu0 0.0
      %1141 = vmatmul.mubr.f32.gmra.mrb[0].mxu0 %v673
      %v1142 = vpop.f32.mrb[0].mxu0
      %v1143 = vadd.f32 0.0, %v1142
      %v1144 = vpop.f32.mrb[0].mxu0
      %1145 = vmatprep.mubr.f32.mxu0 0.0
      %1146 = vmatmul.mubr.f32.gmra.mrb[0].mxu0 %v1041
      %v1147 = vpop.f32.mrb[0].mxu0
      %v1148 = vadd.f32 0.0, %v1147
      %v1149 = vpop.f32.mrb[0].mxu0
      %1150 = vdwg.mxu0
      %v1151 = vadd.f32 %v1028, %v1113
      %v1152 = vadd.f32 %v1029, %v1118
      %v1153 = vadd.f32 %v1030, %v1123
      %v1154 = vadd.f32 %v1031, %v1128
      %v1155 = vadd.f32 %v1032, %v1133
      %v1156 = vadd.f32 %v1033, %v1138
      %v1157 = vadd.f32 %v1034, %v1143
      %v1158 = vadd.f32 %v1035, %v1148
      %s1159 = scalar_lea.vmem %s281, 24
      %v1160 = vld [vmem:[%s1159] sm:$0x7]
      %v1162 = vsel %vm382, %v336, 0
      %v1165 = vsel %vm399, %v1160, 0
      %1167 = vmatprep.subr.mxu0 0.0
      %1168 = vmatpush1.msra.mxu0 %v1165
      %1169 = vmatprep.subr.mxu0 0.0
      %1170 = vmatpush1.msra.mxu0 0.0
      %1171 = vmatprep.subr.mxu0 0.0
      %1172 = vmatpush1.msra.mxu0 0.0
      %1173 = vmatprep.subr.mxu0 0.0
      %1174 = vmatpush1.msra.mxu0 0.0
      %1175 = vmatprep.subr.mxu0 0.0
      %1176 = vmatpush1.msra.mxu0 0.0
      %1177 = vmatprep.subr.mxu0 0.0
      %1178 = vmatpush1.msra.mxu0 0.0
      %1179 = vmatprep.subr.mxu0 0.0
      %1180 = vmatpush1.msra.mxu0 0.0
      %1181 = vmatprep.subr.mxu0 0.0
      %1182 = vmatpush1.msra.mxu0 0.0
      %1183 = vmatprep.subr.mxu0 0.0
      %1184 = vmatpush1.msra.mxu0 0.0
      %1185 = vmatprep.subr.mxu0 0.0
      %1186 = vmatpush1.msra.mxu0 0.0
      %1187 = vmatprep.subr.mxu0 0.0
      %1188 = vmatpush1.msra.mxu0 0.0
      %1189 = vmatprep.subr.mxu0 0.0
      %1190 = vmatpush1.msra.mxu0 0.0
      %1191 = vmatprep.subr.mxu0 0.0
      %1192 = vmatpush1.msra.mxu0 0.0
      %1193 = vmatprep.subr.mxu0 0.0
      %1194 = vmatpush1.msra.mxu0 0.0
      %1195 = vmatprep.subr.mxu0 0.0
      %1196 = vmatpush1.msra.mxu0 0.0
      %1197 = vmatprep.subr.mxu0 0.0
      %1198 = vmatpush1.msra.mxu0 0.0
      %1199 = vmatprep.subr.mxu0 0.0
      %1200 = vmatpush1.msra.mxu0 0.0
      %1201 = vmatprep.subr.mxu0 0.0
      %1202 = vmatpush1.msra.mxu0 0.0
      %1203 = vmatprep.subr.mxu0 0.0
      %1204 = vmatpush1.msra.mxu0 0.0
      %1205 = vmatprep.subr.mxu0 0.0
      %1206 = vmatpush1.msra.mxu0 0.0
      %1207 = vmatprep.subr.mxu0 0.0
      %1208 = vmatpush1.msra.mxu0 0.0
      %1209 = vmatprep.subr.mxu0 0.0
      %1210 = vmatpush1.msra.mxu0 0.0
      %1211 = vmatprep.subr.mxu0 0.0
      %1212 = vmatpush1.msra.mxu0 0.0
      %1213 = vmatprep.subr.mxu0 0.0
      %1214 = vmatpush1.msra.mxu0 0.0
      %1215 = vmatprep.subr.mxu0 0.0
      %1216 = vmatpush1.msra.mxu0 0.0
      %1217 = vmatprep.subr.mxu0 0.0
      %1218 = vmatpush1.msra.mxu0 0.0
      %1219 = vmatprep.subr.mxu0 0.0
      %1220 = vmatpush1.msra.mxu0 0.0
      %1221 = vmatprep.subr.mxu0 0.0
      %1222 = vmatpush1.msra.mxu0 0.0
      %1223 = vmatprep.subr.mxu0 0.0
      %1224 = vmatpush1.msra.mxu0 0.0
      %1225 = vmatprep.subr.mxu0 0.0
      %1226 = vmatpush1.msra.mxu0 0.0
      %1227 = vmatprep.subr.mxu0 0.0
      %1228 = vmatpush1.msra.mxu0 0.0
      %1229 = vmatprep.subr.mxu0 0.0
      %1230 = vmatpush1.msra.mxu0 0.0
      %1231 = vmatprep.mubr.f32.mxu0 0.0
      %1232 = vmatmul.mubr.f32.gmra.mrb[0].mxu0 %v512
      %v1233 = vpop.f32.mrb[0].mxu0
      %v1234 = vadd.f32 0.0, %v1233
      %v1235 = vpop.f32.mrb[0].mxu0
      %1236 = vmatprep.mubr.f32.mxu0 0.0
      %1237 = vmatmul.mubr.f32.gmra.mrb[0].mxu0 %v514
      %v1238 = vpop.f32.mrb[0].mxu0
      %v1239 = vadd.f32 0.0, %v1238
      %v1240 = vpop.f32.mrb[0].mxu0
      %1241 = vmatprep.mubr.f32.mxu0 0.0
      %1242 = vmatmul.mubr.f32.gmra.mrb[0].mxu0 %v516
      %v1243 = vpop.f32.mrb[0].mxu0
      %v1244 = vadd.f32 0.0, %v1243
      %v1245 = vpop.f32.mrb[0].mxu0
      %1246 = vmatprep.mubr.f32.mxu0 0.0
      %1247 = vmatmul.mubr.f32.gmra.mrb[0].mxu0 %v518
      %v1248 = vpop.f32.mrb[0].mxu0
      %v1249 = vadd.f32 0.0, %v1248
      %v1250 = vpop.f32.mrb[0].mxu0
      %1251 = vmatprep.mubr.f32.mxu0 0.0
      %1252 = vmatmul.mubr.f32.gmra.mrb[0].mxu0 %v520
      %v1253 = vpop.f32.mrb[0].mxu0
      %v1254 = vadd.f32 0.0, %v1253
      %v1255 = vpop.f32.mrb[0].mxu0
      %1256 = vmatprep.mubr.f32.mxu0 0.0
      %1257 = vmatmul.mubr.f32.gmra.mrb[0].mxu0 %v522
      %v1258 = vpop.f32.mrb[0].mxu0
      %v1259 = vadd.f32 0.0, %v1258
      %v1260 = vpop.f32.mrb[0].mxu0
      %1261 = vmatprep.mubr.f32.mxu0 0.0
      %1262 = vmatmul.mubr.f32.gmra.mrb[0].mxu0 %v794
      %v1263 = vpop.f32.mrb[0].mxu0
      %v1264 = vadd.f32 0.0, %v1263
      %v1265 = vpop.f32.mrb[0].mxu0
      %1266 = vmatprep.mubr.f32.mxu0 0.0
      %1267 = vmatmul.mubr.f32.gmra.mrb[0].mxu0 %v1162
      %v1268 = vpop.f32.mrb[0].mxu0
      %v1269 = vadd.f32 0.0, %v1268
      %v1270 = vpop.f32.mrb[0].mxu0
      %1271 = vdwg.mxu0
      %v1272 = vadd.f32 %v1151, %v1234
      %v1273 = vadd.f32 %v1152, %v1239
      %v1274 = vadd.f32 %v1153, %v1244
      %v1275 = vadd.f32 %v1154, %v1249
      %v1276 = vadd.f32 %v1155, %v1254
      %v1277 = vadd.f32 %v1156, %v1259
      %v1278 = vadd.f32 %v1157, %v1264
      %v1279 = vadd.f32 %v1158, %v1269
      %v1281 = vrot.slane %v336, 1
      %v1282 = vrot.slane %v337, 1
      %v1283 = vsel %vm355, %v1281, %v1282
      %s1284 = scalar_lea.vmem %s281, 28
      %v1285 = vld [vmem:[%s1284] sm:$0x7]
      %v1286 = vsel %vm382, %v1283, 0
      %v1289 = vsel %vm399, %v1285, 0
      %1291 = vmatprep.subr.mxu0 0.0
      %1292 = vmatpush1.msra.mxu0 %v1289
      %1293 = vmatprep.subr.mxu0 0.0
      %1294 = vmatpush1.msra.mxu0 0.0
      %1295 = vmatprep.subr.mxu0 0.0
      %1296 = vmatpush1.msra.mxu0 0.0
      %1297 = vmatprep.subr.mxu0 0.0
      %1298 = vmatpush1.msra.mxu0 0.0
      %1299 = vmatprep.subr.mxu0 0.0
      %1300 = vmatpush1.msra.mxu0 0.0
      %1301 = vmatprep.subr.mxu0 0.0
      %1302 = vmatpush1.msra.mxu0 0.0
      %1303 = vmatprep.subr.mxu0 0.0
      %1304 = vmatpush1.msra.mxu0 0.0
      %1305 = vmatprep.subr.mxu0 0.0
      %1306 = vmatpush1.msra.mxu0 0.0
      %1307 = vmatprep.subr.mxu0 0.0
      %1308 = vmatpush1.msra.mxu0 0.0
      %1309 = vmatprep.subr.mxu0 0.0
      %1310 = vmatpush1.msra.mxu0 0.0
      %1311 = vmatprep.subr.mxu0 0.0
      %1312 = vmatpush1.msra.mxu0 0.0
      %1313 = vmatprep.subr.mxu0 0.0
      %1314 = vmatpush1.msra.mxu0 0.0
      %1315 = vmatprep.subr.mxu0 0.0
      %1316 = vmatpush1.msra.mxu0 0.0
      %1317 = vmatprep.subr.mxu0 0.0
      %1318 = vmatpush1.msra.mxu0 0.0
      %1319 = vmatprep.subr.mxu0 0.0
      %1320 = vmatpush1.msra.mxu0 0.0
      %1321 = vmatprep.subr.mxu0 0.0
      %1322 = vmatpush1.msra.mxu0 0.0
      %1323 = vmatprep.subr.mxu0 0.0
      %1324 = vmatpush1.msra.mxu0 0.0
      %1325 = vmatprep.subr.mxu0 0.0
      %1326 = vmatpush1.msra.mxu0 0.0
      %1327 = vmatprep.subr.mxu0 0.0
      %1328 = vmatpush1.msra.mxu0 0.0
      %1329 = vmatprep.subr.mxu0 0.0
      %1330 = vmatpush1.msra.mxu0 0.0
      %1331 = vmatprep.subr.mxu0 0.0
      %1332 = vmatpush1.msra.mxu0 0.0
      %1333 = vmatprep.subr.mxu0 0.0
      %1334 = vmatpush1.msra.mxu0 0.0
      %1335 = vmatprep.subr.mxu0 0.0
      %1336 = vmatpush1.msra.mxu0 0.0
      %1337 = vmatprep.subr.mxu0 0.0
      %1338 = vmatpush1.msra.mxu0 0.0
      %1339 = vmatprep.subr.mxu0 0.0
      %1340 = vmatpush1.msra.mxu0 0.0
      %1341 = vmatprep.subr.mxu0 0.0
      %1342 = vmatpush1.msra.mxu0 0.0
      %1343 = vmatprep.subr.mxu0 0.0
      %1344 = vmatpush1.msra.mxu0 0.0
      %1345 = vmatprep.subr.mxu0 0.0
      %1346 = vmatpush1.msra.mxu0 0.0
      %1347 = vmatprep.subr.mxu0 0.0
      %1348 = vmatpush1.msra.mxu0 0.0
      %1349 = vmatprep.subr.mxu0 0.0
      %1350 = vmatpush1.msra.mxu0 0.0
      %1351 = vmatprep.subr.mxu0 0.0
      %1352 = vmatpush1.msra.mxu0 0.0
      %1353 = vmatprep.subr.mxu0 0.0
      %1354 = vmatpush1.msra.mxu0 0.0
      %1355 = vmatprep.mubr.f32.mxu0 0.0
      %1356 = vmatmul.mubr.f32.gmra.mrb[0].mxu0 %v387
      %v1357 = vpop.f32.mrb[0].mxu0
      %v1358 = vadd.f32 0.0, %v1357
      %v1359 = vpop.f32.mrb[0].mxu0
      %1360 = vmatprep.mubr.f32.mxu0 0.0
      %1361 = vmatmul.mubr.f32.gmra.mrb[0].mxu0 %v389
      %v1362 = vpop.f32.mrb[0].mxu0
      %v1363 = vadd.f32 0.0, %v1362
      %v1364 = vpop.f32.mrb[0].mxu0
      %1365 = vmatprep.mubr.f32.mxu0 0.0
      %1366 = vmatmul.mubr.f32.gmra.mrb[0].mxu0 %v391
      %v1367 = vpop.f32.mrb[0].mxu0
      %v1368 = vadd.f32 0.0, %v1367
      %v1369 = vpop.f32.mrb[0].mxu0
      %1370 = vmatprep.mubr.f32.mxu0 0.0
      %1371 = vmatmul.mubr.f32.gmra.mrb[0].mxu0 %v393
      %v1372 = vpop.f32.mrb[0].mxu0
      %v1373 = vadd.f32 0.0, %v1372
      %v1374 = vpop.f32.mrb[0].mxu0
      %1375 = vmatprep.mubr.f32.mxu0 0.0
      %1376 = vmatmul.mubr.f32.gmra.mrb[0].mxu0 %v395
      %v1377 = vpop.f32.mrb[0].mxu0
      %v1378 = vadd.f32 0.0, %v1377
      %v1379 = vpop.f32.mrb[0].mxu0
      %1380 = vmatprep.mubr.f32.mxu0 0.0
      %1381 = vmatmul.mubr.f32.gmra.mrb[0].mxu0 %v397
      %v1382 = vpop.f32.mrb[0].mxu0
      %v1383 = vadd.f32 0.0, %v1382
      %v1384 = vpop.f32.mrb[0].mxu0
      %1385 = vmatprep.mubr.f32.mxu0 0.0
      %1386 = vmatmul.mubr.f32.gmra.mrb[0].mxu0 %v918
      %v1387 = vpop.f32.mrb[0].mxu0
      %v1388 = vadd.f32 0.0, %v1387
      %v1389 = vpop.f32.mrb[0].mxu0
      %1390 = vmatprep.mubr.f32.mxu0 0.0
      %1391 = vmatmul.mubr.f32.gmra.mrb[0].mxu0 %v1286
      %v1392 = vpop.f32.mrb[0].mxu0
      %v1393 = vadd.f32 0.0, %v1392
      %v1394 = vpop.f32.mrb[0].mxu0
      %1395 = vdwg.mxu0
      %v1396 = vadd.f32 %v1272, %v1358
      %v1397 = vadd.f32 %v1273, %v1363
      %v1398 = vadd.f32 %v1274, %v1368
      %v1399 = vadd.f32 %v1275, %v1373
      %v1400 = vadd.f32 %v1276, %v1378
      %v1401 = vadd.f32 %v1277, %v1383
      %v1402 = vadd.f32 %v1278, %v1388
      %v1403 = vadd.f32 %v1279, %v1393
      %v1404 = vrot.slane %v336, 2
      %v1405 = vrot.slane %v337, 2
      %v1406 = vsel %vm632, %v1404, %v1405
      %s1407 = scalar_lea.vmem %s281, 32
      %v1408 = vld [vmem:[%s1407] sm:$0x7]
      %v1409 = vsel %vm382, %v1406, 0
      %v1412 = vsel %vm399, %v1408, 0
      %1414 = vmatprep.subr.mxu0 0.0
      %1415 = vmatpush1.msra.mxu0 %v1412
      %1416 = vmatprep.subr.mxu0 0.0
      %1417 = vmatpush1.msra.mxu0 0.0
      %1418 = vmatprep.subr.mxu0 0.0
      %1419 = vmatpush1.msra.mxu0 0.0
      %1420 = vmatprep.subr.mxu0 0.0
      %1421 = vmatpush1.msra.mxu0 0.0
      %1422 = vmatprep.subr.mxu0 0.0
      %1423 = vmatpush1.msra.mxu0 0.0
      %1424 = vmatprep.subr.mxu0 0.0
      %1425 = vmatpush1.msra.mxu0 0.0
      %1426 = vmatprep.subr.mxu0 0.0
      %1427 = vmatpush1.msra.mxu0 0.0
      %1428 = vmatprep.subr.mxu0 0.0
      %1429 = vmatpush1.msra.mxu0 0.0
      %1430 = vmatprep.subr.mxu0 0.0
      %1431 = vmatpush1.msra.mxu0 0.0
      %1432 = vmatprep.subr.mxu0 0.0
      %1433 = vmatpush1.msra.mxu0 0.0
      %1434 = vmatprep.subr.mxu0 0.0
      %1435 = vmatpush1.msra.mxu0 0.0
      %1436 = vmatprep.subr.mxu0 0.0
      %1437 = vmatpush1.msra.mxu0 0.0
      %1438 = vmatprep.subr.mxu0 0.0
      %1439 = vmatpush1.msra.mxu0 0.0
      %1440 = vmatprep.subr.mxu0 0.0
      %1441 = vmatpush1.msra.mxu0 0.0
      %1442 = vmatprep.subr.mxu0 0.0
      %1443 = vmatpush1.msra.mxu0 0.0
      %1444 = vmatprep.subr.mxu0 0.0
      %1445 = vmatpush1.msra.mxu0 0.0
      %1446 = vmatprep.subr.mxu0 0.0
      %1447 = vmatpush1.msra.mxu0 0.0
      %1448 = vmatprep.subr.mxu0 0.0
      %1449 = vmatpush1.msra.mxu0 0.0
      %1450 = vmatprep.subr.mxu0 0.0
      %1451 = vmatpush1.msra.mxu0 0.0
      %1452 = vmatprep.subr.mxu0 0.0
      %1453 = vmatpush1.msra.mxu0 0.0
      %1454 = vmatprep.subr.mxu0 0.0
      %1455 = vmatpush1.msra.mxu0 0.0
      %1456 = vmatprep.subr.mxu0 0.0
      %1457 = vmatpush1.msra.mxu0 0.0
      %1458 = vmatprep.subr.mxu0 0.0
      %1459 = vmatpush1.msra.mxu0 0.0
      %1460 = vmatprep.subr.mxu0 0.0
      %1461 = vmatpush1.msra.mxu0 0.0
      %1462 = vmatprep.subr.mxu0 0.0
      %1463 = vmatpush1.msra.mxu0 0.0
      %1464 = vmatprep.subr.mxu0 0.0
      %1465 = vmatpush1.msra.mxu0 0.0
      %1466 = vmatprep.subr.mxu0 0.0
      %1467 = vmatpush1.msra.mxu0 0.0
      %1468 = vmatprep.subr.mxu0 0.0
      %1469 = vmatpush1.msra.mxu0 0.0
      %1470 = vmatprep.subr.mxu0 0.0
      %1471 = vmatpush1.msra.mxu0 0.0
      %1472 = vmatprep.subr.mxu0 0.0
      %1473 = vmatpush1.msra.mxu0 0.0
      %1474 = vmatprep.subr.mxu0 0.0
      %1475 = vmatpush1.msra.mxu0 0.0
      %1476 = vmatprep.subr.mxu0 0.0
      %1477 = vmatpush1.msra.mxu0 0.0
      %1478 = vmatprep.mubr.f32.mxu0 0.0
      %1479 = vmatmul.mubr.f32.gmra.mrb[0].mxu0 %v663
      %v1480 = vpop.f32.mrb[0].mxu0
      %v1481 = vadd.f32 0.0, %v1480
      %v1482 = vpop.f32.mrb[0].mxu0
      %1483 = vmatprep.mubr.f32.mxu0 0.0
      %1484 = vmatmul.mubr.f32.gmra.mrb[0].mxu0 %v665
      %v1485 = vpop.f32.mrb[0].mxu0
      %v1486 = vadd.f32 0.0, %v1485
      %v1487 = vpop.f32.mrb[0].mxu0
      %1488 = vmatprep.mubr.f32.mxu0 0.0
      %1489 = vmatmul.mubr.f32.gmra.mrb[0].mxu0 %v667
      %v1490 = vpop.f32.mrb[0].mxu0
      %v1491 = vadd.f32 0.0, %v1490
      %v1492 = vpop.f32.mrb[0].mxu0
      %1493 = vmatprep.mubr.f32.mxu0 0.0
      %1494 = vmatmul.mubr.f32.gmra.mrb[0].mxu0 %v669
      %v1495 = vpop.f32.mrb[0].mxu0
      %v1496 = vadd.f32 0.0, %v1495
      %v1497 = vpop.f32.mrb[0].mxu0
      %1498 = vmatprep.mubr.f32.mxu0 0.0
      %1499 = vmatmul.mubr.f32.gmra.mrb[0].mxu0 %v671
      %v1500 = vpop.f32.mrb[0].mxu0
      %v1501 = vadd.f32 0.0, %v1500
      %v1502 = vpop.f32.mrb[0].mxu0
      %1503 = vmatprep.mubr.f32.mxu0 0.0
      %1504 = vmatmul.mubr.f32.gmra.mrb[0].mxu0 %v673
      %v1505 = vpop.f32.mrb[0].mxu0
      %v1506 = vadd.f32 0.0, %v1505
      %v1507 = vpop.f32.mrb[0].mxu0
      %1508 = vmatprep.mubr.f32.mxu0 0.0
      %1509 = vmatmul.mubr.f32.gmra.mrb[0].mxu0 %v1041
      %v1510 = vpop.f32.mrb[0].mxu0
      %v1511 = vadd.f32 0.0, %v1510
      %v1512 = vpop.f32.mrb[0].mxu0
      %1513 = vmatprep.mubr.f32.mxu0 0.0
      %1514 = vmatmul.mubr.f32.gmra.mrb[0].mxu0 %v1409
      %v1515 = vpop.f32.mrb[0].mxu0
      %v1516 = vadd.f32 0.0, %v1515
      %v1517 = vpop.f32.mrb[0].mxu0
      %1518 = vdwg.mxu0
      %v1519 = vadd.f32 %v1396, %v1481
      %v1520 = vadd.f32 %v1397, %v1486
      %v1521 = vadd.f32 %v1398, %v1491
      %v1522 = vadd.f32 %v1399, %v1496
      %v1523 = vadd.f32 %v1400, %v1501
      %v1524 = vadd.f32 %v1401, %v1506
      %v1525 = vadd.f32 %v1402, %v1511
      %v1526 = vadd.f32 %v1403, %v1516
      %v1527 = vld [vmem:[#allocation2] sm:$0xff]
      %v1528 = vld [vmem:[#allocation2 + $0x8] sm:$0xff]
      %v1529 = vld [vmem:[#allocation2 + $0x10] sm:$0xff]
      %v1530 = vld [vmem:[#allocation2 + $0x18] sm:$0xff]
      %v1531 = vld [vmem:[#allocation2 + $0x20] sm:$0xff]
      %v1532 = vld [vmem:[#allocation2 + $0x28] sm:$0xff]
      %v1533 = vld [vmem:[#allocation2 + $0x30] sm:$0xff]
      %v1534 = vld [vmem:[#allocation2 + $0x38] sm:$0xff]
      %v1535 = vadd.f32 %v1527, %v1519
      %v1536 = vadd.f32 %v1528, %v1520
      %v1537 = vadd.f32 %v1529, %v1521
      %v1538 = vadd.f32 %v1530, %v1522
      %v1539 = vadd.f32 %v1531, %v1523
      %v1540 = vadd.f32 %v1532, %v1524
      %v1541 = vadd.f32 %v1533, %v1525
      %v1542 = vadd.f32 %v1534, %v1526
      %vm1543 = vcmask 261120
      %1544 = vst.msk [vmem:[#allocation2] sm:$0xff] %vm1543, %v1535
      %1545 = vst.msk [vmem:[#allocation2 + $0x8] sm:$0xff] %vm1543, %v1536
      %1546 = vst.msk [vmem:[#allocation2 + $0x10] sm:$0xff] %vm1543, %v1537
      %1547 = vst.msk [vmem:[#allocation2 + $0x18] sm:$0xff] %vm1543, %v1538
      %1548 = vst.msk [vmem:[#allocation2 + $0x20] sm:$0xff] %vm1543, %v1539
      %1549 = vst.msk [vmem:[#allocation2 + $0x28] sm:$0xff] %vm1543, %v1540
      %1550 = vst.msk [vmem:[#allocation2 + $0x30] sm:$0xff] %vm1543, %v1541
      %1551 = vst.msk [vmem:[#allocation2 + $0x38] sm:$0xff] %vm1543, %v1542
      %p1552 = scmp.eq.s32.totalorder %s23, 2
      // Predicated region
      $region33: #{down_transition_forward.4} parent=27 // pred_check
        %p1553 = pneg %p1552
      $region34: #{down_transition_forward.4} parent=27 // pred_check_branch
        %1555 = sbr.rel (%p1553) target = $region36
      $region35: #{down_transition_forward.4} parent=27 // pred_region
        %v1556 = vld [vmem:[#allocation2] sm:$0xff]
        %v1557 = vld [vmem:[#allocation2 + $0x8] sm:$0xff]
        %v1558 = vld [vmem:[#allocation2 + $0x10] sm:$0xff]
        %v1559 = vld [vmem:[#allocation2 + $0x18] sm:$0xff]
        %v1560 = vld [vmem:[#allocation2 + $0x20] sm:$0xff]
        %v1561 = vld [vmem:[#allocation2 + $0x28] sm:$0xff]
        %v1562 = vld [vmem:[#allocation2 + $0x30] sm:$0xff]
        %v1563 = vld [vmem:[#allocation2 + $0x38] sm:$0xff]
        %1564 = vst.msk [vmem:[%s290] sm:$0xff] %vm1543, %v1556
        %1565 = vst.msk [vmem:[%s290 + $0x8] sm:$0xff] %vm1543, %v1557
        %1566 = vst.msk [vmem:[%s290 + $0x10] sm:$0xff] %vm1543, %v1558
        %1567 = vst.msk [vmem:[%s290 + $0x18] sm:$0xff] %vm1543, %v1559
        %1568 = vst.msk [vmem:[%s290 + $0x20] sm:$0xff] %vm1543, %v1560
        %1569 = vst.msk [vmem:[%s290 + $0x28] sm:$0xff] %vm1543, %v1561
        %1570 = vst.msk [vmem:[%s290 + $0x30] sm:$0xff] %vm1543, %v1562
        %1571 = vst.msk [vmem:[%s290 + $0x38] sm:$0xff] %vm1543, %v1563
        %v1572 = vsel %vm1543, %v1556, 0.0
        %v1573 = vsel %vm1543, %v1557, 0.0
        %v1574 = vadd.f32 %v1572, %v1573
        %v1575 = vsel %vm1543, %v1558, 0.0
        %v1576 = vadd.f32 %v1574, %v1575
        %v1577 = vsel %vm1543, %v1559, 0.0
        %v1578 = vadd.f32 %v1576, %v1577
        %v1579 = vsel %vm1543, %v1560, 0.0
        %v1580 = vadd.f32 %v1578, %v1579
        %v1581 = vsel %vm1543, %v1561, 0.0
        %v1582 = vadd.f32 %v1580, %v1581
        %v1583 = vsel %vm1543, %v1562, 0.0
        %v1584 = vadd.f32 %v1582, %v1583
        %v1585 = vsel %vm1543, %v1563, 0.0
        %v1586 = vadd.f32 %v1584, %v1585
        %v1587 = vrot.slane %v1586, 4
        %v1588 = vadd.f32 %v1586, %v1587
        %v1589 = vrot.slane %v1588, 2
        %v1590 = vadd.f32 %v1588, %v1589
        %v1591 = vrot.slane %v1590, 1
        %v1592 = vadd.f32 %v1590, %v1591
        %v1593 = vmul.f32 %v1556, %v1556
        %v1594 = vmul.f32 %v1557, %v1557
        %v1595 = vmul.f32 %v1558, %v1558
        %v1596 = vmul.f32 %v1559, %v1559
        %v1597 = vmul.f32 %v1560, %v1560
        %v1598 = vmul.f32 %v1561, %v1561
        %v1599 = vmul.f32 %v1562, %v1562
        %v1600 = vmul.f32 %v1563, %v1563
        %v1601 = vsel %vm1543, %v1593, 0.0
        %v1602 = vsel %vm1543, %v1594, 0.0
        %v1603 = vadd.f32 %v1601, %v1602
        %v1604 = vsel %vm1543, %v1595, 0.0
        %v1605 = vadd.f32 %v1603, %v1604
        %v1606 = vsel %vm1543, %v1596, 0.0
        %v1607 = vadd.f32 %v1605, %v1606
        %v1608 = vsel %vm1543, %v1597, 0.0
        %v1609 = vadd.f32 %v1607, %v1608
        %v1610 = vsel %vm1543, %v1598, 0.0
        %v1611 = vadd.f32 %v1609, %v1610
        %v1612 = vsel %vm1543, %v1599, 0.0
        %v1613 = vadd.f32 %v1611, %v1612
        %v1614 = vsel %vm1543, %v1600, 0.0
        %v1615 = vadd.f32 %v1613, %v1614
        %v1616 = vrot.slane %v1615, 4
        %v1617 = vadd.f32 %v1615, %v1616
        %v1618 = vrot.slane %v1617, 2
        %v1619 = vadd.f32 %v1617, %v1618
        %v1620 = vrot.slane %v1619, 1
        %v1621 = vadd.f32 %v1619, %v1620
        %vm1622 = vcmask 253952
        %1623 = vst.msk [vmem:[%s297] sm:$0x1] %vm1622, %v1592
        %1624 = vst.msk [vmem:[%s304] sm:$0x1] %vm1622, %v1621
      $region36: #{down_transition_forward.4} parent=27 // pred_fallthru
        _
      %p1625 = scmp.lt.s32.totalorder %s21, 1
      %s1626 = scalar_select %p1625, %s21, 1
      %p1627 = scmp.lt.s32.totalorder %s22, 7
      %s1628 = scalar_select %p1627, %s22, 7
      %s1629 = smul.addr %s1628, 8
      %s1630 = smul.addr %s1626, 64
      %s1631 = sadd.s32 %s1629, %s1630
      %s1632 = smul.addr %s1631, 8
      %s1633 = scalar_lea.vmem %s2, %s1632
      %p1634 = scmp.lt.s32.totalorder %s21, 1
      %s1635 = scalar_select %p1634, %s21, 1
      %p1636 = scmp.lt.s32.totalorder %s22, 7
      %s1637 = scalar_select %p1636, %s22, 7
      %s1638 = smul.addr %s1635, 8
      %s1639 = sadd.s32 %s1637, %s1638
      %s1640 = scalar_lea.vmem %s3, %s1639
      %p1641 = scmp.lt.s32.totalorder %s21, 1
      %s1642 = scalar_select %p1641, %s21, 1
      %p1643 = scmp.lt.s32.totalorder %s22, 7
      %s1644 = scalar_select %p1643, %s22, 7
      %s1645 = smul.addr %s1642, 8
      %s1646 = sadd.s32 %s1644, %s1645
      %s1647 = scalar_lea.vmem %s4, %s1646
      // Predicated region
      $region37: #{down_transition_forward.4} parent=27 // pred_check
        %p1648 = pneg %p111
      $region38: #{down_transition_forward.4} parent=27 // pred_check_branch
        %1650 = sbr.rel (%p1648) target = $region40
      $region39: #{down_transition_forward.4} parent=27 // pred_region
        _
      $region40: #{down_transition_forward.4} parent=27 // pred_fallthru
        _
      // Predicated region
      $region41: #{down_transition_forward.4} parent=27 // pred_check
        %p1651 = pneg %p139
      $region42: #{down_transition_forward.4} parent=27 // pred_check_branch
        %1653 = sbr.rel (%p1651) target = $region44
      $region43: #{down_transition_forward.4} parent=27 // pred_region
        _
      $region44: #{down_transition_forward.4} parent=27 // pred_fallthru
        _
      // Predicated region
      $region45: #{down_transition_forward.4} parent=27 // pred_check
        %p1654 = pneg %p167
      $region46: #{down_transition_forward.4} parent=27 // pred_check_branch
        %1656 = sbr.rel (%p1654) target = $region48
      $region47: #{down_transition_forward.4} parent=27 // pred_region
        _
      $region48: #{down_transition_forward.4} parent=27 // pred_fallthru
        _
    $region28: #{down_transition_forward.4} parent=5 // pred_fallthru
      _
    %p1657 = scmp.le.s32.totalorder 2, %s11
    // Predicated region
    $region49: #{down_transition_forward.4} parent=5 // pred_check
      %p1658 = pneg %p1657
    $region50: #{down_transition_forward.4} parent=5 // pred_check_branch
      %1660 = sbr.rel (%p1658) target = $region52
    $region51: #{down_transition_forward.4} parent=5 // pred_region
      %s1661 = ssub.s32 %s11, 2
      // Predicated region
      $region53: #{down_transition_forward.4} parent=51 // pred_check
        %p1662 = pneg %p117
      $region54: #{down_transition_forward.4} parent=51 // pred_check_branch
        %1664 = sbr.rel (%p1662) target = $region56
      $region55: #{down_transition_forward.4} parent=51 // pred_region
        %p1665 = scmp.lt.s32.totalorder %s24, 1
        %s1666 = scalar_select %p1665, %s24, 1
        %p1667 = scmp.lt.s32.totalorder %s25, 7
        %s1668 = scalar_select %p1667, %s25, 7
        %s1669 = smul.addr %s1668, 8
        %s1670 = smul.addr %s1666, 64
        %s1671 = sadd.s32 %s1669, %s1670
        %s1672 = smul.addr %s1671, 8
        %s1673 = scalar_lea.vmem %s2, %s1672
      $region56: #{down_transition_forward.4} parent=51 // pred_fallthru
        _
      // Predicated region
      $region57: #{down_transition_forward.4} parent=51 // pred_check
        %p1674 = pneg %p145
      $region58: #{down_transition_forward.4} parent=51 // pred_check_branch
        %1676 = sbr.rel (%p1674) target = $region60
      $region59: #{down_transition_forward.4} parent=51 // pred_region
        %p1677 = scmp.lt.s32.totalorder %s24, 1
        %s1678 = scalar_select %p1677, %s24, 1
        %p1679 = scmp.lt.s32.totalorder %s25, 7
        %s1680 = scalar_select %p1679, %s25, 7
        %s1681 = smul.addr %s1678, 8
        %s1682 = sadd.s32 %s1680, %s1681
        %s1683 = scalar_lea.vmem %s3, %s1682
      $region60: #{down_transition_forward.4} parent=51 // pred_fallthru
        _
      // Predicated region
      $region61: #{down_transition_forward.4} parent=51 // pred_check
        %p1684 = pneg %p173
      $region62: #{down_transition_forward.4} parent=51 // pred_check_branch
        %1686 = sbr.rel (%p1684) target = $region64
      $region63: #{down_transition_forward.4} parent=51 // pred_region
        %p1687 = scmp.lt.s32.totalorder %s24, 1
        %s1688 = scalar_select %p1687, %s24, 1
        %p1689 = scmp.lt.s32.totalorder %s25, 7
        %s1690 = scalar_select %p1689, %s25, 7
        %s1691 = smul.addr %s1688, 8
        %s1692 = sadd.s32 %s1690, %s1691
        %s1693 = scalar_lea.vmem %s4, %s1692
      $region64: #{down_transition_forward.4} parent=51 // pred_fallthru
        _
    $region52: #{down_transition_forward.4} parent=5 // pred_fallthru
      _
  $region6: #{down_transition_forward.4} parent=0 // loop_footer
    %s15 = sadd.s32 1, %s11
  $region7: #{down_transition_forward.4} parent=0 // loop_footer_branch
    %10 = sbr.rel target = $region3
  $region8: #{down_transition_forward.4} parent=0 // loop_exit
    _

// kernel: down_transition_forward.5
$region0: #{down_transition_forward.5}
  #allocation0 [shape = 'u32[]', space=smem, size = 0x4, offset = 0x4, fixed_abs, tag = 'smem constant byte address 0x4 - core index']
  #allocation1 [shape = 'u32[144,128]{1,0:T(1,128)}', space=vmem, size = 0x12000, scoped, tag = 'internal scratch']
  %s0 = inlined_call_operand.vmem [shape: f32[256,128], index: 0, kind: input, shape index: {}]
  %s1 = inlined_call_operand.vmem [shape: f32[1,128], index: 1, kind: input, shape index: {}]
  %s2 = inlined_call_operand.vmem [shape: f32[1,128], index: 2, kind: input, shape index: {}]
  %s3 = inlined_call_operand.vmem [shape: f32[256,128], index: 3, kind: output, shape index: {}]
  %s4 = sld [smem:[#allocation0]]
  $region22: #{down_transition_forward.5} parent=0
    _
  %s6 = ssub.s32 1, %s4
  %s7 = scalar_select 0, %s6, %s4
  // Predicated region
  $region2: #{down_transition_forward.5} parent=0 // pred_check
    _
  $region3: #{down_transition_forward.5} parent=0 // pred_check_branch
    %9 = sbr.rel (0) target = $region5
  $region4: #{down_transition_forward.5} parent=0 // pred_region
    _
  $region5: #{down_transition_forward.5} parent=0 // pred_fallthru
    _
  // Predicated region
  $region6: #{down_transition_forward.5} parent=0 // pred_check
    _
  $region7: #{down_transition_forward.5} parent=0 // pred_check_branch
    %11 = sbr.rel (0) target = $region9
  $region8: #{down_transition_forward.5} parent=0 // pred_region
    _
  $region9: #{down_transition_forward.5} parent=0 // pred_fallthru
    _
  // Predicated region
  $region10: #{down_transition_forward.5} parent=0 // pred_check
    _
  $region11: #{down_transition_forward.5} parent=0 // pred_check_branch
    %13 = sbr.rel (0) target = $region13
  $region12: #{down_transition_forward.5} parent=0 // pred_region
    _
  $region13: #{down_transition_forward.5} parent=0 // pred_fallthru
    _
  %v14 = vld [vmem:[%s0] sm:$0xff]
  %v15 = vld [vmem:[%s0 + $0x8] sm:$0xff]
  %v16 = vld [vmem:[%s0 + $0x10] sm:$0xff]
  %v17 = vld [vmem:[%s0 + $0x18] sm:$0xff]
  %v18 = vld [vmem:[%s0 + $0x20] sm:$0xff]
  %v19 = vld [vmem:[%s0 + $0x28] sm:$0xff]
  %v20 = vld [vmem:[%s0 + $0x30] sm:$0xff]
  %v21 = vld [vmem:[%s0 + $0x38] sm:$0xff]
  %v22 = vld [vmem:[%s0 + $0x40] sm:$0xff]
  %v23 = vld [vmem:[%s0 + $0x48] sm:$0xff]
  %v24 = vld [vmem:[%s0 + $0x50] sm:$0xff]
  %v25 = vld [vmem:[%s0 + $0x58] sm:$0xff]
  %v26 = vld [vmem:[%s0 + $0x60] sm:$0xff]
  %v27 = vld [vmem:[%s0 + $0x68] sm:$0xff]
  %v28 = vld [vmem:[%s0 + $0x70] sm:$0xff]
  %v29 = vld [vmem:[%s0 + $0x78] sm:$0xff]
  %v30 = vld [vmem:[%s0 + $0x80] sm:$0xff]
  %v31 = vld [vmem:[%s0 + $0x88] sm:$0xff]
  %v32 = vld [vmem:[%s0 + $0x90] sm:$0xff]
  %v33 = vld [vmem:[%s0 + $0x98] sm:$0xff]
  %v34 = vld [vmem:[%s0 + $0xa0] sm:$0xff]
  %v35 = vld [vmem:[%s0 + $0xa8] sm:$0xff]
  %v36 = vld [vmem:[%s0 + $0xb0] sm:$0xff]
  %v37 = vld [vmem:[%s0 + $0xb8] sm:$0xff]
  %v38 = vld [vmem:[%s0 + $0xc0] sm:$0xff]
  %v39 = vld [vmem:[%s0 + $0xc8] sm:$0xff]
  %v40 = vld [vmem:[%s0 + $0xd0] sm:$0xff]
  %v41 = vld [vmem:[%s0 + $0xd8] sm:$0xff]
  %v42 = vld [vmem:[%s0 + $0xe0] sm:$0xff]
  %v43 = vld [vmem:[%s0 + $0xe8] sm:$0xff]
  %v44 = vld [vmem:[%s0 + $0xf0] sm:$0xff]
  %v45 = vld [vmem:[%s0 + $0xf8] sm:$0xff]
  %v46 = vld [vmem:[%s1] sm:$0x1]
  %v48 = vlaneseq
  %v49 = vshrl.u32 %v48, 7
  %v50 = vsub.s32 0, %v49
  %v51 = vrot.slane %v46, %v50
  %v53 = vmul.f32 %v14, %v51
  %v54 = vmul.f32 %v15, %v51
  %v55 = vmul.f32 %v16, %v51
  %v56 = vmul.f32 %v17, %v51
  %v57 = vmul.f32 %v18, %v51
  %v58 = vmul.f32 %v19, %v51
  %v59 = vmul.f32 %v20, %v51
  %v60 = vmul.f32 %v21, %v51
  %v61 = vmul.f32 %v22, %v51
  %v62 = vmul.f32 %v23, %v51
  %v63 = vmul.f32 %v24, %v51
  %v64 = vmul.f32 %v25, %v51
  %v65 = vmul.f32 %v26, %v51
  %v66 = vmul.f32 %v27, %v51
  %v67 = vmul.f32 %v28, %v51
  %v68 = vmul.f32 %v29, %v51
  %v69 = vmul.f32 %v30, %v51
  %v70 = vmul.f32 %v31, %v51
  %v71 = vmul.f32 %v32, %v51
  %v72 = vmul.f32 %v33, %v51
  %v73 = vmul.f32 %v34, %v51
  %v74 = vmul.f32 %v35, %v51
  %v75 = vmul.f32 %v36, %v51
  %v76 = vmul.f32 %v37, %v51
  %v77 = vmul.f32 %v38, %v51
  %v78 = vmul.f32 %v39, %v51
  %v79 = vmul.f32 %v40, %v51
  %v80 = vmul.f32 %v41, %v51
  %v81 = vmul.f32 %v42, %v51
  %v82 = vmul.f32 %v43, %v51
  %v83 = vmul.f32 %v44, %v51
  %v84 = vmul.f32 %v45, %v51
  %v85 = vld [vmem:[%s2] sm:$0x1]
  %v87 = vlaneseq
  %v88 = vshrl.u32 %v87, 7
  %v89 = vsub.s32 0, %v88
  %v90 = vrot.slane %v85, %v89
  %v92 = vadd.f32 %v53, %v90
  %v93 = vadd.f32 %v54, %v90
  %v94 = vadd.f32 %v55, %v90
  %v95 = vadd.f32 %v56, %v90
  %v96 = vadd.f32 %v57, %v90
  %v97 = vadd.f32 %v58, %v90
  %v98 = vadd.f32 %v59, %v90
  %v99 = vadd.f32 %v60, %v90
  %v100 = vadd.f32 %v61, %v90
  %v101 = vadd.f32 %v62, %v90
  %v102 = vadd.f32 %v63, %v90
  %v103 = vadd.f32 %v64, %v90
  %v104 = vadd.f32 %v65, %v90
  %v105 = vadd.f32 %v66, %v90
  %v106 = vadd.f32 %v67, %v90
  %v107 = vadd.f32 %v68, %v90
  %v108 = vadd.f32 %v69, %v90
  %v109 = vadd.f32 %v70, %v90
  %v110 = vadd.f32 %v71, %v90
  %v111 = vadd.f32 %v72, %v90
  %v112 = vadd.f32 %v73, %v90
  %v113 = vadd.f32 %v74, %v90
  %v114 = vadd.f32 %v75, %v90
  %v115 = vadd.f32 %v76, %v90
  %v116 = vadd.f32 %v77, %v90
  %v117 = vadd.f32 %v78, %v90
  %v118 = vadd.f32 %v79, %v90
  %v119 = vadd.f32 %v80, %v90
  %v120 = vadd.f32 %v81, %v90
  %v121 = vadd.f32 %v82, %v90
  %v122 = vadd.f32 %v83, %v90
  %v123 = vadd.f32 %v84, %v90
  %v124 = vmax.f32 %v92, 0.0
  %v125 = vmax.f32 %v93, 0.0
  %v126 = vmax.f32 %v94, 0.0
  %v127 = vmax.f32 %v95, 0.0
  %v128 = vmax.f32 %v96, 0.0
  %v129 = vmax.f32 %v97, 0.0
  %v130 = vmax.f32 %v98, 0.0
  %v131 = vmax.f32 %v99, 0.0
  %v132 = vmax.f32 %v100, 0.0
  %v133 = vmax.f32 %v101, 0.0
  %v134 = vmax.f32 %v102, 0.0
  %v135 = vmax.f32 %v103, 0.0
  %v136 = vmax.f32 %v104, 0.0
  %v137 = vmax.f32 %v105, 0.0
  %v138 = vmax.f32 %v106, 0.0
  %v139 = vmax.f32 %v107, 0.0
  %v140 = vmax.f32 %v108, 0.0
  %v141 = vmax.f32 %v109, 0.0
  %v142 = vmax.f32 %v110, 0.0
  %v143 = vmax.f32 %v111, 0.0
  %v144 = vmax.f32 %v112, 0.0
  %v145 = vmax.f32 %v113, 0.0
  %v146 = vmax.f32 %v114, 0.0
  %v147 = vmax.f32 %v115, 0.0
  %v148 = vmax.f32 %v116, 0.0
  %v149 = vmax.f32 %v117, 0.0
  %v150 = vmax.f32 %v118, 0.0
  %v151 = vmax.f32 %v119, 0.0
  %v152 = vmax.f32 %v120, 0.0
  %v153 = vmax.f32 %v121, 0.0
  %v154 = vmax.f32 %v122, 0.0
  %v155 = vmax.f32 %v123, 0.0
  %156 = vst [vmem:[%s3] sm:$0xff] %v124
  %157 = vst [vmem:[%s3 + $0x8] sm:$0xff] %v125
  %158 = vst [vmem:[%s3 + $0x10] sm:$0xff] %v126
  %159 = vst [vmem:[%s3 + $0x18] sm:$0xff] %v127
  %160 = vst [vmem:[%s3 + $0x20] sm:$0xff] %v128
  %161 = vst [vmem:[%s3 + $0x28] sm:$0xff] %v129
  %162 = vst [vmem:[%s3 + $0x30] sm:$0xff] %v130
  %163 = vst [vmem:[%s3 + $0x38] sm:$0xff] %v131
  %164 = vst [vmem:[%s3 + $0x40] sm:$0xff] %v132
  %165 = vst [vmem:[%s3 + $0x48] sm:$0xff] %v133
  %166 = vst [vmem:[%s3 + $0x50] sm:$0xff] %v134
  %167 = vst [vmem:[%s3 + $0x58] sm:$0xff] %v135
  %168 = vst [vmem:[%s3 + $0x60] sm:$0xff] %v136
  %169 = vst [vmem:[%s3 + $0x68] sm:$0xff] %v137
  %170 = vst [vmem:[%s3 + $0x70] sm:$0xff] %v138
  %171 = vst [vmem:[%s3 + $0x78] sm:$0xff] %v139
  %172 = vst [vmem:[%s3 + $0x80] sm:$0xff] %v140
  %173 = vst [vmem:[%s3 + $0x88] sm:$0xff] %v141
  %174 = vst [vmem:[%s3 + $0x90] sm:$0xff] %v142
  %175 = vst [vmem:[%s3 + $0x98] sm:$0xff] %v143
  %176 = vst [vmem:[%s3 + $0xa0] sm:$0xff] %v144
  %177 = vst [vmem:[%s3 + $0xa8] sm:$0xff] %v145
  %178 = vst [vmem:[%s3 + $0xb0] sm:$0xff] %v146
  %179 = vst [vmem:[%s3 + $0xb8] sm:$0xff] %v147
  %180 = vst [vmem:[%s3 + $0xc0] sm:$0xff] %v148
  %181 = vst [vmem:[%s3 + $0xc8] sm:$0xff] %v149
  %182 = vst [vmem:[%s3 + $0xd0] sm:$0xff] %v150
  %183 = vst [vmem:[%s3 + $0xd8] sm:$0xff] %v151
  %184 = vst [vmem:[%s3 + $0xe0] sm:$0xff] %v152
  %185 = vst [vmem:[%s3 + $0xe8] sm:$0xff] %v153
  %186 = vst [vmem:[%s3 + $0xf0] sm:$0xff] %v154
  %187 = vst [vmem:[%s3 + $0xf8] sm:$0xff] %v155
  // Predicated region
  $region14: #{down_transition_forward.5} parent=0 // pred_check
    _
  $region15: #{down_transition_forward.5} parent=0 // pred_check_branch
    %189 = sbr.rel (0) target = $region17
  $region16: #{down_transition_forward.5} parent=0 // pred_region
    _
  $region17: #{down_transition_forward.5} parent=0 // pred_fallthru
    _
  // Predicated region
  $region18: #{down_transition_forward.5} parent=0 // pred_check
    _
  $region19: #{down_transition_forward.5} parent=0 // pred_check_branch
    %191 = sbr.rel (0) target = $region21
  $region20: #{down_transition_forward.5} parent=0 // pred_region
    _
  $region21: #{down_transition_forward.5} parent=0 // pred_fallthru
    _

// kernel: down_transition_forward.6
$region0: #{down_transition_forward.6}
  #allocation0 [shape = 'u32[]', space=smem, size = 0x4, offset = 0x4, fixed_abs, tag = 'smem constant byte address 0x4 - core index']
  #allocation1 [shape = 'u32[144,128]{1,0:T(1,128)}', space=vmem, size = 0x12000, scoped, tag = 'internal scratch']
  #allocation2 [shape = 'f32[64,64]{1,0:T(8,128)}', space=vmem, size = 0x8000, scoped, tag = 'scratch operand']
  %s0 = inlined_call_operand.vmem [shape: f32[2,10,10,10,32], index: 0, kind: input, shape index: {}]
  %s1 = inlined_call_operand.vmem [shape: f32[3,9,32,64], index: 1, kind: input, shape index: {}]
  %s2 = inlined_call_operand.vmem [shape: f32[2,8,64,64], index: 2, kind: output, shape index: {0}]
  %s3 = inlined_call_operand.vmem [shape: f32[2,8,1,64], index: 3, kind: output, shape index: {1}]
  %s4 = inlined_call_operand.vmem [shape: f32[2,8,1,64], index: 4, kind: output, shape index: {2}]
  %5 = xla_tuple %s2, %s3, %s4
  %s6 = sld [smem:[#allocation0]]
  $region65: #{down_transition_forward.6} parent=0
    _
  %s8 = ssub.s32 1, %s6
  %s9 = scalar_select 0, %s8, %s6
  loop: start=0, step=1, limit=50
  $region2: #{down_transition_forward.6} parent=0 // loop_pre_header
    _
  $region3: #{down_transition_forward.6} parent=0 // loop_header
    %s11 = sphi 0, %s15
    %p12 = scmp.ge.s32.totalorder %s11, 50
    %s18 = sphi 0, %s37
    %s19 = sphi 0, %s33
    %s20 = sphi 0, %s29
    %s21 = sphi 0, %s18
    %s22 = sphi 0, %s19
    %s23 = sphi 0, %s20
    %s24 = sphi 0, %s21
    %s25 = sphi 0, %s22
    %s26 = sphi 0, %s23
    %s44 = sphi 0, %s46
    %s47 = sphi 0, %s44
    %s48 = sphi 0, %s47
    %s64 = sphi 0, %s48
    %s70 = sphi 0, %s72
    %s73 = sphi 0, %s70
    %s74 = sphi 0, %s73
    %s90 = sphi 0, %s74
    %s98 = sphi 0, %s100
    %s101 = sphi 0, %s98
    %s102 = sphi 0, %s101
    %s118 = sphi 0, %s102
    %s126 = sphi 0, %s128
    %s129 = sphi 0, %s126
    %s130 = sphi 0, %s129
    %s146 = sphi 0, %s130
    %s154 = sphi 0, %s156
    %s157 = sphi 0, %s154
    %s158 = sphi 0, %s157
    %s174 = sphi 0, %s158
  $region4: #{down_transition_forward.6} parent=0 // loop_header_branch
    %14 = sbr.rel (%p12) target = $region8
  $region5: #{down_transition_forward.6} parent=0 // loop_body
    %s16 = ssub.s32 %s11, 1
    %s17 = ssub.s32 %s11, 2
    %s27 = sadd.s32 1, %s20
    %p28 = scmp.ge.s32.totalorder %s27, 3
    %s29 = scalar_select %p28, 0, %s27
    %s30 = sadd.s32 1, %s19
    %s31 = scalar_select %p28, %s30, %s19
    %p32 = scmp.ge.s32.totalorder %s31, 8
    %s33 = scalar_select %p32, 0, %s31
    %s34 = sadd.s32 1, %s18
    %s35 = scalar_select %p32, %s34, %s18
    %p36 = scmp.ge.s32.totalorder %s35, 2
    %s37 = scalar_select %p36, 0, %s35
    %s38 = sadd.s32 %s19, %s20
    %s39 = sadd.s32 %s33, %s29
    %s40 = ssub.s32 %s18, %s37
    %s41 = ssub.s32 %s38, %s39
    %s42 = sor.u32 %s40, %s41
    %p43 = scmp.eq.s32.totalorder %s42, 0
    %s45 = sadd.s32 %s44, 1
    %s46 = scalar_select %p43, %s44, %s45
    %p49 = pneg %p43
    %p50 = scmp.eq.s32.totalorder %s11, 47
    %p51 = por %p49, %p50
    %p52 = scmp.ne.s32.totalorder %s44, %s47
    %p53 = scmp.eq.s32.totalorder %s11, 0
    %p54 = por %p52, %p53
    %p55 = scmp.ne.s32.totalorder %s44, %s47
    %p56 = scmp.eq.s32.totalorder %s16, 47
    %p57 = por %p55, %p56
    %p58 = scmp.ne.s32.totalorder %s47, %s48
    %p59 = scmp.eq.s32.totalorder %s16, 0
    %p60 = por %p58, %p59
    %p61 = scmp.ne.s32.totalorder %s47, %s48
    %p62 = scmp.eq.s32.totalorder %s17, 47
    %p63 = por %p61, %p62
    %p65 = scmp.ne.s32.totalorder %s48, %s64
    %p66 = scmp.eq.s32.totalorder %s17, 0
    %p67 = por %p65, %p66
    %s68 = ssub.s32 %s20, %s29
    %p69 = scmp.eq.s32.totalorder %s68, 0
    %s71 = sadd.s32 %s70, 1
    %s72 = scalar_select %p69, %s70, %s71
    %p75 = pneg %p69
    %p76 = scmp.eq.s32.totalorder %s11, 47
    %p77 = por %p75, %p76
    %p78 = scmp.ne.s32.totalorder %s70, %s73
    %p79 = scmp.eq.s32.totalorder %s11, 0
    %p80 = por %p78, %p79
    %p81 = scmp.ne.s32.totalorder %s70, %s73
    %p82 = scmp.eq.s32.totalorder %s16, 47
    %p83 = por %p81, %p82
    %p84 = scmp.ne.s32.totalorder %s73, %s74
    %p85 = scmp.eq.s32.totalorder %s16, 0
    %p86 = por %p84, %p85
    %p87 = scmp.ne.s32.totalorder %s73, %s74
    %p88 = scmp.eq.s32.totalorder %s17, 47
    %p89 = por %p87, %p88
    %p91 = scmp.ne.s32.totalorder %s74, %s90
    %p92 = scmp.eq.s32.totalorder %s17, 0
    %p93 = por %p91, %p92
    %s94 = ssub.s32 %s18, %s37
    %s95 = ssub.s32 %s19, %s33
    %s96 = sor.u32 %s94, %s95
    %p97 = scmp.eq.s32.totalorder %s96, 0
    %s99 = sadd.s32 %s98, 1
    %s100 = scalar_select %p97, %s98, %s99
    %p103 = pneg %p97
    %p104 = scmp.eq.s32.totalorder %s11, 47
    %p105 = por %p103, %p104
    %p106 = scmp.ne.s32.totalorder %s98, %s101
    %p107 = scmp.eq.s32.totalorder %s11, 0
    %p108 = por %p106, %p107
    %p109 = scmp.ne.s32.totalorder %s98, %s101
    %p110 = scmp.eq.s32.totalorder %s16, 47
    %p111 = por %p109, %p110
    %p112 = scmp.ne.s32.totalorder %s101, %s102
    %p113 = scmp.eq.s32.totalorder %s16, 0
    %p114 = por %p112, %p113
    %p115 = scmp.ne.s32.totalorder %s101, %s102
    %p116 = scmp.eq.s32.totalorder %s17, 47
    %p117 = por %p115, %p116
    %p119 = scmp.ne.s32.totalorder %s102, %s118
    %p120 = scmp.eq.s32.totalorder %s17, 0
    %p121 = por %p119, %p120
    %s122 = ssub.s32 %s18, %s37
    %s123 = ssub.s32 %s19, %s33
    %s124 = sor.u32 %s122, %s123
    %p125 = scmp.eq.s32.totalorder %s124, 0
    %s127 = sadd.s32 %s126, 1
    %s128 = scalar_select %p125, %s126, %s127
    %p131 = pneg %p125
    %p132 = scmp.eq.s32.totalorder %s11, 47
    %p133 = por %p131, %p132
    %p134 = scmp.ne.s32.totalorder %s126, %s129
    %p135 = scmp.eq.s32.totalorder %s11, 0
    %p136 = por %p134, %p135
    %p137 = scmp.ne.s32.totalorder %s126, %s129
    %p138 = scmp.eq.s32.totalorder %s16, 47
    %p139 = por %p137, %p138
    %p140 = scmp.ne.s32.totalorder %s129, %s130
    %p141 = scmp.eq.s32.totalorder %s16, 0
    %p142 = por %p140, %p141
    %p143 = scmp.ne.s32.totalorder %s129, %s130
    %p144 = scmp.eq.s32.totalorder %s17, 47
    %p145 = por %p143, %p144
    %p147 = scmp.ne.s32.totalorder %s130, %s146
    %p148 = scmp.eq.s32.totalorder %s17, 0
    %p149 = por %p147, %p148
    %s150 = ssub.s32 %s18, %s37
    %s151 = ssub.s32 %s19, %s33
    %s152 = sor.u32 %s150, %s151
    %p153 = scmp.eq.s32.totalorder %s152, 0
    %s155 = sadd.s32 %s154, 1
    %s156 = scalar_select %p153, %s154, %s155
    %p159 = pneg %p153
    %p160 = scmp.eq.s32.totalorder %s11, 47
    %p161 = por %p159, %p160
    %p162 = scmp.ne.s32.totalorder %s154, %s157
    %p163 = scmp.eq.s32.totalorder %s11, 0
    %p164 = por %p162, %p163
    %p165 = scmp.ne.s32.totalorder %s154, %s157
    %p166 = scmp.eq.s32.totalorder %s16, 47
    %p167 = por %p165, %p166
    %p168 = scmp.ne.s32.totalorder %s157, %s158
    %p169 = scmp.eq.s32.totalorder %s16, 0
    %p170 = por %p168, %p169
    %p171 = scmp.ne.s32.totalorder %s157, %s158
    %p172 = scmp.eq.s32.totalorder %s17, 47
    %p173 = por %p171, %p172
    %p175 = scmp.ne.s32.totalorder %s158, %s174
    %p176 = scmp.eq.s32.totalorder %s17, 0
    %p177 = por %p175, %p176
    %p178 = scmp.le.s32.totalorder 1, %s11
    %p179 = scmp.lt.s32.totalorder %s11, 49
    %p180 = pnand %p178, %p179
    %p181 = pneg %p180
    // Predicated region
    $region9: #{down_transition_forward.6} parent=5 // pred_check
      _
    $region10: #{down_transition_forward.6} parent=5 // pred_check_branch
      %183 = sbr.rel (%p180) target = $region12
    $region11: #{down_transition_forward.6} parent=5 // pred_region
      %s184 = ssub.s32 %s11, 1
    $region12: #{down_transition_forward.6} parent=5 // pred_fallthru
      _
    %p185 = scmp.lt.s32.totalorder %s11, 48
    // Predicated region
    $region13: #{down_transition_forward.6} parent=5 // pred_check
      %p186 = pneg %p185
    $region14: #{down_transition_forward.6} parent=5 // pred_check_branch
      %188 = sbr.rel (%p186) target = $region16
    $region15: #{down_transition_forward.6} parent=5 // pred_region
      // Predicated region
      $region17: #{down_transition_forward.6} parent=15 // pred_check
        %p189 = pneg %p54
      $region18: #{down_transition_forward.6} parent=15 // pred_check_branch
        %191 = sbr.rel (%p189) target = $region20
      $region19: #{down_transition_forward.6} parent=15 // pred_region
        %s192 = sadd.s32 %s19, %s20
        %p193 = scmp.lt.s32.totalorder %s18, 1
        %s194 = scalar_select %p193, %s18, 1
        %p195 = scmp.lt.s32.totalorder %s192, 9
        %s196 = scalar_select %p195, %s192, 9
        %s197 = smul.addr %s196, 20
        %s198 = smul.addr %s194, 200
        %s199 = sadd.s32 %s197, %s198
        %s200 = smul.addr %s199, 8
        %s201 = scalar_lea.vmem %s0, %s200
        %s202 = sadd.s32 %s19, %s20
      $region20: #{down_transition_forward.6} parent=15 // pred_fallthru
        _
      // Predicated region
      $region21: #{down_transition_forward.6} parent=15 // pred_check
        %p203 = pneg %p80
      $region22: #{down_transition_forward.6} parent=15 // pred_check_branch
        %205 = sbr.rel (%p203) target = $region24
      $region23: #{down_transition_forward.6} parent=15 // pred_region
        %p206 = scmp.lt.s32.totalorder %s20, 2
        %s207 = scalar_select %p206, %s20, 2
        %s208 = smul.addr %s207, 36
        %s209 = smul.addr %s208, 8
        %s210 = scalar_lea.vmem %s1, %s209
      $region24: #{down_transition_forward.6} parent=15 // pred_fallthru
        _
    $region16: #{down_transition_forward.6} parent=5 // pred_fallthru
      _
    %p211 = scmp.le.s32.totalorder 1, %s11
    %p212 = scmp.lt.s32.totalorder %s11, 49
    %p213 = pnand %p211, %p212
    %p214 = pneg %p213
    // Predicated region
    $region25: #{down_transition_forward.6} parent=5 // pred_check
      _
    $region26: #{down_transition_forward.6} parent=5 // pred_check_branch
      %216 = sbr.rel (%p213) target = $region28
    $region27: #{down_transition_forward.6} parent=5 // pred_region
      %s217 = ssub.s32 %s11, 1
      %s218 = sadd.s32 %s22, %s23
      %p219 = scmp.lt.s32.totalorder %s21, 1
      %s220 = scalar_select %p219, %s21, 1
      %p221 = scmp.lt.s32.totalorder %s218, 9
      %s222 = scalar_select %p221, %s218, 9
      %s223 = smul.addr %s222, 20
      %s224 = smul.addr %s220, 200
      %s225 = sadd.s32 %s223, %s224
      %s226 = smul.addr %s225, 8
      %s227 = scalar_lea.vmem %s0, %s226
      %p228 = pneg %p60
      %p229 = pneg %p57
      %p230 = scmp.lt.s32.totalorder %s23, 2
      %s231 = scalar_select %p230, %s23, 2
      %s232 = smul.addr %s231, 36
      %s233 = smul.addr %s232, 8
      %s234 = scalar_lea.vmem %s1, %s233
      %p235 = pneg %p86
      %p236 = pneg %p83
      %p237 = pneg %p114
      %p238 = pneg %p111
      %p239 = scmp.lt.s32.totalorder %s21, 1
      %s240 = scalar_select %p239, %s21, 1
      %p241 = scmp.lt.s32.totalorder %s22, 7
      %s242 = scalar_select %p241, %s22, 7
      %s243 = smul.addr %s242, 8
      %s244 = smul.addr %s240, 64
      %s245 = sadd.s32 %s243, %s244
      %s246 = smul.addr %s245, 8
      %s247 = scalar_lea.vmem %s2, %s246
      %p248 = pneg %p142
      %p249 = pneg %p139
      %p250 = scmp.lt.s32.totalorder %s21, 1
      %s251 = scalar_select %p250, %s21, 1
      %p252 = scmp.lt.s32.totalorder %s22, 7
      %s253 = scalar_select %p252, %s22, 7
      %s254 = smul.addr %s251, 8
      %s255 = sadd.s32 %s253, %s254
      %s256 = scalar_lea.vmem %s3, %s255
      %p257 = pneg %p170
      %p258 = pneg %p167
      %p259 = scmp.lt.s32.totalorder %s21, 1
      %s260 = scalar_select %p259, %s21, 1
      %p261 = scmp.lt.s32.totalorder %s22, 7
      %s262 = scalar_select %p261, %s22, 7
      %s263 = smul.addr %s260, 8
      %s264 = sadd.s32 %s262, %s263
      %s265 = scalar_lea.vmem %s4, %s264
      %s266 = sadd.s32 %s22, %s23
      %p267 = scmp.lt.s32.totalorder %s21, 1
      %s268 = scalar_select %p267, %s21, 1
      %p269 = scmp.lt.s32.totalorder %s266, 9
      %s270 = scalar_select %p269, %s266, 9
      %s271 = smul.addr %s270, 20
      %s272 = smul.addr %s268, 200
      %s273 = sadd.s32 %s271, %s272
      %s274 = smul.addr %s273, 8
      %s275 = scalar_lea.vmem %s0, %s274
      %s276 = sadd.s32 %s22, %s23
      %p277 = scmp.lt.s32.totalorder %s23, 2
      %s278 = scalar_select %p277, %s23, 2
      %s279 = smul.addr %s278, 36
      %s280 = smul.addr %s279, 8
      %s281 = scalar_lea.vmem %s1, %s280
      %p282 = scmp.lt.s32.totalorder %s21, 1
      %s283 = scalar_select %p282, %s21, 1
      %p284 = scmp.lt.s32.totalorder %s22, 7
      %s285 = scalar_select %p284, %s22, 7
      %s286 = smul.addr %s285, 8
      %s287 = smul.addr %s283, 64
      %s288 = sadd.s32 %s286, %s287
      %s289 = smul.addr %s288, 8
      %s290 = scalar_lea.vmem %s2, %s289
      %p291 = scmp.lt.s32.totalorder %s21, 1
      %s292 = scalar_select %p291, %s21, 1
      %p293 = scmp.lt.s32.totalorder %s22, 7
      %s294 = scalar_select %p293, %s22, 7
      %s295 = smul.addr %s292, 8
      %s296 = sadd.s32 %s294, %s295
      %s297 = scalar_lea.vmem %s3, %s296
      %p298 = scmp.lt.s32.totalorder %s21, 1
      %s299 = scalar_select %p298, %s21, 1
      %p300 = scmp.lt.s32.totalorder %s22, 7
      %s301 = scalar_select %p300, %s22, 7
      %s302 = smul.addr %s299, 8
      %s303 = sadd.s32 %s301, %s302
      %s304 = scalar_lea.vmem %s4, %s303
      %p305 = scmp.eq.s32.totalorder %s23, 0
      // Predicated region
      $region29: #{down_transition_forward.6} parent=27 // pred_check
        %p306 = pneg %p305
      $region30: #{down_transition_forward.6} parent=27 // pred_check_branch
        %308 = sbr.rel (%p306) target = $region32
      $region31: #{down_transition_forward.6} parent=27 // pred_region
        %vm309 = vcmask 523264
        %310 = vst.msk [vmem:[#allocation2] sm:$0xff] %vm309, 0.0
        %311 = vst.msk [vmem:[#allocation2 + $0x8] sm:$0xff] %vm309, 0.0
        %312 = vst.msk [vmem:[#allocation2 + $0x10] sm:$0xff] %vm309, 0.0
        %313 = vst.msk [vmem:[#allocation2 + $0x18] sm:$0xff] %vm309, 0.0
        %314 = vst.msk [vmem:[#allocation2 + $0x20] sm:$0xff] %vm309, 0.0
        %315 = vst.msk [vmem:[#allocation2 + $0x28] sm:$0xff] %vm309, 0.0
        %316 = vst.msk [vmem:[#allocation2 + $0x30] sm:$0xff] %vm309, 0.0
        %317 = vst.msk [vmem:[#allocation2 + $0x38] sm:$0xff] %vm309, 0.0
      $region32: #{down_transition_forward.6} parent=27 // pred_fallthru
        _
      %v318 = vld [vmem:[%s275] sm:$0xff]
      %v319 = vld [vmem:[%s275 + $0x8] sm:$0x3]
      %v320 = vld [vmem:[%s275 + $0x10] sm:$0xff]
      %v321 = vld [vmem:[%s275 + $0x18] sm:$0x3]
      %v322 = vld [vmem:[%s275 + $0x20] sm:$0xff]
      %v323 = vld [vmem:[%s275 + $0x28] sm:$0x3]
      %v324 = vld [vmem:[%s275 + $0x30] sm:$0xff]
      %v325 = vld [vmem:[%s275 + $0x38] sm:$0x3]
      %v326 = vld [vmem:[%s275 + $0x40] sm:$0xff]
      %v327 = vld [vmem:[%s275 + $0x48] sm:$0x3]
      %v328 = vld [vmem:[%s275 + $0x50] sm:$0xff]
      %v329 = vld [vmem:[%s275 + $0x58] sm:$0x3]
      %v330 = vld [vmem:[%s275 + $0x60] sm:$0xff]
      %v331 = vld [vmem:[%s275 + $0x68] sm:$0x3]
      %v332 = vld [vmem:[%s275 + $0x70] sm:$0xff]
      %v333 = vld [vmem:[%s275 + $0x78] sm:$0x3]
      %v334 = vld [vmem:[%s275 + $0x80] sm:$0xff]
      %v335 = vld [vmem:[%s275 + $0x88] sm:$0x3]
      %v336 = vld [vmem:[%s275 + $0x90] sm:$0xff]
      %v337 = vld [vmem:[%s275 + $0x98] sm:$0x3]
      %v338 = vld [vmem:[%s281] sm:$0xff]
      %v339 = vld [vmem:[%s281 + $0x8] sm:$0xff]
      %v340 = vld [vmem:[%s281 + $0x10] sm:$0xff]
      %v341 = vld [vmem:[%s281 + $0x18] sm:$0xff]
      %vm358 = vcmask 1046528
      %v359 = vrot.slane %v318, 1
      %v360 = vrot.slane %v319, 1
      %v361 = vsel %vm358, %v359, %v360
      %v362 = vrot.slane %v320, 1
      %v363 = vrot.slane %v321, 1
      %v364 = vsel %vm358, %v362, %v363
      %v365 = vrot.slane %v322, 1
      %v366 = vrot.slane %v323, 1
      %v367 = vsel %vm358, %v365, %v366
      %v368 = vrot.slane %v324, 1
      %v369 = vrot.slane %v325, 1
      %v370 = vsel %vm358, %v368, %v369
      %v371 = vrot.slane %v326, 1
      %v372 = vrot.slane %v327, 1
      %v373 = vsel %vm358, %v371, %v372
      %v374 = vrot.slane %v328, 1
      %v375 = vrot.slane %v329, 1
      %v376 = vsel %vm358, %v374, %v375
      %v377 = vrot.slane %v330, 1
      %v378 = vrot.slane %v331, 1
      %v379 = vsel %vm358, %v377, %v378
      %v380 = vrot.slane %v332, 1
      %v381 = vrot.slane %v333, 1
      %v382 = vsel %vm358, %v380, %v381
      %s383 = scalar_lea.vmem %s281, 32
      %v384 = vld [vmem:[%s383] sm:$0xff]
      %v385 = vld [vmem:[%s383 + $0x8] sm:$0xff]
      %v386 = vld [vmem:[%s383 + $0x10] sm:$0xff]
      %v387 = vld [vmem:[%s383 + $0x18] sm:$0xff]
      %vm388 = vcmask 261120
      %v389 = vsel %vm388, %v361, 0
      %v391 = vsel %vm388, %v364, 0
      %v393 = vsel %vm388, %v367, 0
      %v395 = vsel %vm388, %v370, 0
      %v397 = vsel %vm388, %v373, 0
      %v399 = vsel %vm388, %v376, 0
      %v401 = vsel %vm388, %v379, 0
      %v403 = vsel %vm388, %v382, 0
      %405 = vmatprep.subr.mxu0 0.0
      %406 = vmatpush1.msra.mxu0 %v384
      %407 = vmatprep.subr.mxu0 0.0
      %408 = vmatpush1.msra.mxu0 %v385
      %409 = vmatprep.subr.mxu0 0.0
      %410 = vmatpush1.msra.mxu0 %v386
      %411 = vmatprep.subr.mxu0 0.0
      %412 = vmatpush1.msra.mxu0 %v387
      %413 = vmatprep.subr.mxu0 0.0
      %414 = vmatpush1.msra.mxu0 0.0
      %415 = vmatprep.subr.mxu0 0.0
      %416 = vmatpush1.msra.mxu0 0.0
      %417 = vmatprep.subr.mxu0 0.0
      %418 = vmatpush1.msra.mxu0 0.0
      %419 = vmatprep.subr.mxu0 0.0
      %420 = vmatpush1.msra.mxu0 0.0
      %421 = vmatprep.subr.mxu0 0.0
      %422 = vmatpush1.msra.mxu0 0.0
      %423 = vmatprep.subr.mxu0 0.0
      %424 = vmatpush1.msra.mxu0 0.0
      %425 = vmatprep.subr.mxu0 0.0
      %426 = vmatpush1.msra.mxu0 0.0
      %427 = vmatprep.subr.mxu0 0.0
      %428 = vmatpush1.msra.mxu0 0.0
      %429 = vmatprep.subr.mxu0 0.0
      %430 = vmatpush1.msra.mxu0 0.0
      %431 = vmatprep.subr.mxu0 0.0
      %432 = vmatpush1.msra.mxu0 0.0
      %433 = vmatprep.subr.mxu0 0.0
      %434 = vmatpush1.msra.mxu0 0.0
      %435 = vmatprep.subr.mxu0 0.0
      %436 = vmatpush1.msra.mxu0 0.0
      %437 = vmatprep.subr.mxu0 0.0
      %438 = vmatpush1.msra.mxu0 0.0
      %439 = vmatprep.subr.mxu0 0.0
      %440 = vmatpush1.msra.mxu0 0.0
      %441 = vmatprep.subr.mxu0 0.0
      %442 = vmatpush1.msra.mxu0 0.0
      %443 = vmatprep.subr.mxu0 0.0
      %444 = vmatpush1.msra.mxu0 0.0
      %445 = vmatprep.subr.mxu0 0.0
      %446 = vmatpush1.msra.mxu0 0.0
      %447 = vmatprep.subr.mxu0 0.0
      %448 = vmatpush1.msra.mxu0 0.0
      %449 = vmatprep.subr.mxu0 0.0
      %450 = vmatpush1.msra.mxu0 0.0
      %451 = vmatprep.subr.mxu0 0.0
      %452 = vmatpush1.msra.mxu0 0.0
      %453 = vmatprep.subr.mxu0 0.0
      %454 = vmatpush1.msra.mxu0 0.0
      %455 = vmatprep.subr.mxu0 0.0
      %456 = vmatpush1.msra.mxu0 0.0
      %457 = vmatprep.subr.mxu0 0.0
      %458 = vmatpush1.msra.mxu0 0.0
      %459 = vmatprep.subr.mxu0 0.0
      %460 = vmatpush1.msra.mxu0 0.0
      %461 = vmatprep.subr.mxu0 0.0
      %462 = vmatpush1.msra.mxu0 0.0
      %463 = vmatprep.subr.mxu0 0.0
      %464 = vmatpush1.msra.mxu0 0.0
      %465 = vmatprep.subr.mxu0 0.0
      %466 = vmatpush1.msra.mxu0 0.0
      %467 = vmatprep.subr.mxu0 0.0
      %468 = vmatpush1.msra.mxu0 0.0
      %469 = vmatprep.mubr.f32.mxu0 0.0
      %470 = vmatmul.mubr.f32.gmra.mrb[0].mxu0 %v389
      %v471 = vpop.f32.mrb[0].mxu0
      %v472 = vadd.f32 0.0, %v471
      %v473 = vpop.f32.mrb[0].mxu0
      %474 = vmatprep.mubr.f32.mxu0 0.0
      %475 = vmatmul.mubr.f32.gmra.mrb[0].mxu0 %v391
      %v476 = vpop.f32.mrb[0].mxu0
      %v477 = vadd.f32 0.0, %v476
      %v478 = vpop.f32.mrb[0].mxu0
      %479 = vmatprep.mubr.f32.mxu0 0.0
      %480 = vmatmul.mubr.f32.gmra.mrb[0].mxu0 %v393
      %v481 = vpop.f32.mrb[0].mxu0
      %v482 = vadd.f32 0.0, %v481
      %v483 = vpop.f32.mrb[0].mxu0
      %484 = vmatprep.mubr.f32.mxu0 0.0
      %485 = vmatmul.mubr.f32.gmra.mrb[0].mxu0 %v395
      %v486 = vpop.f32.mrb[0].mxu0
      %v487 = vadd.f32 0.0, %v486
      %v488 = vpop.f32.mrb[0].mxu0
      %489 = vmatprep.mubr.f32.mxu0 0.0
      %490 = vmatmul.mubr.f32.gmra.mrb[0].mxu0 %v397
      %v491 = vpop.f32.mrb[0].mxu0
      %v492 = vadd.f32 0.0, %v491
      %v493 = vpop.f32.mrb[0].mxu0
      %494 = vmatprep.mubr.f32.mxu0 0.0
      %495 = vmatmul.mubr.f32.gmra.mrb[0].mxu0 %v399
      %v496 = vpop.f32.mrb[0].mxu0
      %v497 = vadd.f32 0.0, %v496
      %v498 = vpop.f32.mrb[0].mxu0
      %499 = vmatprep.mubr.f32.mxu0 0.0
      %500 = vmatmul.mubr.f32.gmra.mrb[0].mxu0 %v401
      %v501 = vpop.f32.mrb[0].mxu0
      %v502 = vadd.f32 0.0, %v501
      %v503 = vpop.f32.mrb[0].mxu0
      %504 = vmatprep.mubr.f32.mxu0 0.0
      %505 = vmatmul.mubr.f32.gmra.mrb[0].mxu0 %v403
      %v506 = vpop.f32.mrb[0].mxu0
      %v507 = vadd.f32 0.0, %v506
      %v508 = vpop.f32.mrb[0].mxu0
      %509 = vdwg.mxu0
      %v510 = vsel %vm388, %v318, 0
      %v512 = vsel %vm388, %v320, 0
      %v514 = vsel %vm388, %v322, 0
      %v516 = vsel %vm388, %v324, 0
      %v518 = vsel %vm388, %v326, 0
      %v520 = vsel %vm388, %v328, 0
      %v522 = vsel %vm388, %v330, 0
      %v524 = vsel %vm388, %v332, 0
      %526 = vmatprep.subr.mxu0 0.0
      %527 = vmatpush1.msra.mxu0 %v338
      %528 = vmatprep.subr.mxu0 0.0
      %529 = vmatpush1.msra.mxu0 %v339
      %530 = vmatprep.subr.mxu0 0.0
      %531 = vmatpush1.msra.mxu0 %v340
      %532 = vmatprep.subr.mxu0 0.0
      %533 = vmatpush1.msra.mxu0 %v341
      %534 = vmatprep.subr.mxu0 0.0
      %535 = vmatpush1.msra.mxu0 0.0
      %536 = vmatprep.subr.mxu0 0.0
      %537 = vmatpush1.msra.mxu0 0.0
      %538 = vmatprep.subr.mxu0 0.0
      %539 = vmatpush1.msra.mxu0 0.0
      %540 = vmatprep.subr.mxu0 0.0
      %541 = vmatpush1.msra.mxu0 0.0
      %542 = vmatprep.subr.mxu0 0.0
      %543 = vmatpush1.msra.mxu0 0.0
      %544 = vmatprep.subr.mxu0 0.0
      %545 = vmatpush1.msra.mxu0 0.0
      %546 = vmatprep.subr.mxu0 0.0
      %547 = vmatpush1.msra.mxu0 0.0
      %548 = vmatprep.subr.mxu0 0.0
      %549 = vmatpush1.msra.mxu0 0.0
      %550 = vmatprep.subr.mxu0 0.0
      %551 = vmatpush1.msra.mxu0 0.0
      %552 = vmatprep.subr.mxu0 0.0
      %553 = vmatpush1.msra.mxu0 0.0
      %554 = vmatprep.subr.mxu0 0.0
      %555 = vmatpush1.msra.mxu0 0.0
      %556 = vmatprep.subr.mxu0 0.0
      %557 = vmatpush1.msra.mxu0 0.0
      %558 = vmatprep.subr.mxu0 0.0
      %559 = vmatpush1.msra.mxu0 0.0
      %560 = vmatprep.subr.mxu0 0.0
      %561 = vmatpush1.msra.mxu0 0.0
      %562 = vmatprep.subr.mxu0 0.0
      %563 = vmatpush1.msra.mxu0 0.0
      %564 = vmatprep.subr.mxu0 0.0
      %565 = vmatpush1.msra.mxu0 0.0
      %566 = vmatprep.subr.mxu0 0.0
      %567 = vmatpush1.msra.mxu0 0.0
      %568 = vmatprep.subr.mxu0 0.0
      %569 = vmatpush1.msra.mxu0 0.0
      %570 = vmatprep.subr.mxu0 0.0
      %571 = vmatpush1.msra.mxu0 0.0
      %572 = vmatprep.subr.mxu0 0.0
      %573 = vmatpush1.msra.mxu0 0.0
      %574 = vmatprep.subr.mxu0 0.0
      %575 = vmatpush1.msra.mxu0 0.0
      %576 = vmatprep.subr.mxu0 0.0
      %577 = vmatpush1.msra.mxu0 0.0
      %578 = vmatprep.subr.mxu0 0.0
      %579 = vmatpush1.msra.mxu0 0.0
      %580 = vmatprep.subr.mxu0 0.0
      %581 = vmatpush1.msra.mxu0 0.0
      %582 = vmatprep.subr.mxu0 0.0
      %583 = vmatpush1.msra.mxu0 0.0
      %584 = vmatprep.subr.mxu0 0.0
      %585 = vmatpush1.msra.mxu0 0.0
      %586 = vmatprep.subr.mxu0 0.0
      %587 = vmatpush1.msra.mxu0 0.0
      %588 = vmatprep.subr.mxu0 0.0
      %589 = vmatpush1.msra.mxu0 0.0
      %590 = vmatprep.mubr.f32.mxu0 0.0
      %591 = vmatmul.mubr.f32.gmra.mrb[0].mxu0 %v510
      %v592 = vpop.f32.mrb[0].mxu0
      %v593 = vadd.f32 %v472, %v592
      %v594 = vpop.f32.mrb[0].mxu0
      %595 = vmatprep.mubr.f32.mxu0 0.0
      %596 = vmatmul.mubr.f32.gmra.mrb[0].mxu0 %v512
      %v597 = vpop.f32.mrb[0].mxu0
      %v598 = vadd.f32 %v477, %v597
      %v599 = vpop.f32.mrb[0].mxu0
      %600 = vmatprep.mubr.f32.mxu0 0.0
      %601 = vmatmul.mubr.f32.gmra.mrb[0].mxu0 %v514
      %v602 = vpop.f32.mrb[0].mxu0
      %v603 = vadd.f32 %v482, %v602
      %v604 = vpop.f32.mrb[0].mxu0
      %605 = vmatprep.mubr.f32.mxu0 0.0
      %606 = vmatmul.mubr.f32.gmra.mrb[0].mxu0 %v516
      %v607 = vpop.f32.mrb[0].mxu0
      %v608 = vadd.f32 %v487, %v607
      %v609 = vpop.f32.mrb[0].mxu0
      %610 = vmatprep.mubr.f32.mxu0 0.0
      %611 = vmatmul.mubr.f32.gmra.mrb[0].mxu0 %v518
      %v612 = vpop.f32.mrb[0].mxu0
      %v613 = vadd.f32 %v492, %v612
      %v614 = vpop.f32.mrb[0].mxu0
      %615 = vmatprep.mubr.f32.mxu0 0.0
      %616 = vmatmul.mubr.f32.gmra.mrb[0].mxu0 %v520
      %v617 = vpop.f32.mrb[0].mxu0
      %v618 = vadd.f32 %v497, %v617
      %v619 = vpop.f32.mrb[0].mxu0
      %620 = vmatprep.mubr.f32.mxu0 0.0
      %621 = vmatmul.mubr.f32.gmra.mrb[0].mxu0 %v522
      %v622 = vpop.f32.mrb[0].mxu0
      %v623 = vadd.f32 %v502, %v622
      %v624 = vpop.f32.mrb[0].mxu0
      %625 = vmatprep.mubr.f32.mxu0 0.0
      %626 = vmatmul.mubr.f32.gmra.mrb[0].mxu0 %v524
      %v627 = vpop.f32.mrb[0].mxu0
      %v628 = vadd.f32 %v507, %v627
      %v629 = vpop.f32.mrb[0].mxu0
      %630 = vdwg.mxu0
      %vm631 = vcmask 1045504
      %v632 = vrot.slane %v318, 2
      %v633 = vrot.slane %v319, 2
      %v634 = vsel %vm631, %v632, %v633
      %v635 = vrot.slane %v320, 2
      %v636 = vrot.slane %v321, 2
      %v637 = vsel %vm631, %v635, %v636
      %v638 = vrot.slane %v322, 2
      %v639 = vrot.slane %v323, 2
      %v640 = vsel %vm631, %v638, %v639
      %v641 = vrot.slane %v324, 2
      %v642 = vrot.slane %v325, 2
      %v643 = vsel %vm631, %v641, %v642
      %v644 = vrot.slane %v326, 2
      %v645 = vrot.slane %v327, 2
      %v646 = vsel %vm631, %v644, %v645
      %v647 = vrot.slane %v328, 2
      %v648 = vrot.slane %v329, 2
      %v649 = vsel %vm631, %v647, %v648
      %v650 = vrot.slane %v330, 2
      %v651 = vrot.slane %v331, 2
      %v652 = vsel %vm631, %v650, %v651
      %v653 = vrot.slane %v332, 2
      %v654 = vrot.slane %v333, 2
      %v655 = vsel %vm631, %v653, %v654
      %s656 = scalar_lea.vmem %s281, 64
      %v657 = vld [vmem:[%s656] sm:$0xff]
      %v658 = vld [vmem:[%s656 + $0x8] sm:$0xff]
      %v659 = vld [vmem:[%s656 + $0x10] sm:$0xff]
      %v660 = vld [vmem:[%s656 + $0x18] sm:$0xff]
      %v661 = vsel %vm388, %v634, 0
      %v663 = vsel %vm388, %v637, 0
      %v665 = vsel %vm388, %v640, 0
      %v667 = vsel %vm388, %v643, 0
      %v669 = vsel %vm388, %v646, 0
      %v671 = vsel %vm388, %v649, 0
      %v673 = vsel %vm388, %v652, 0
      %v675 = vsel %vm388, %v655, 0
      %677 = vmatprep.subr.mxu0 0.0
      %678 = vmatpush1.msra.mxu0 %v657
      %679 = vmatprep.subr.mxu0 0.0
      %680 = vmatpush1.msra.mxu0 %v658
      %681 = vmatprep.subr.mxu0 0.0
      %682 = vmatpush1.msra.mxu0 %v659
      %683 = vmatprep.subr.mxu0 0.0
      %684 = vmatpush1.msra.mxu0 %v660
      %685 = vmatprep.subr.mxu0 0.0
      %686 = vmatpush1.msra.mxu0 0.0
      %687 = vmatprep.subr.mxu0 0.0
      %688 = vmatpush1.msra.mxu0 0.0
      %689 = vmatprep.subr.mxu0 0.0
      %690 = vmatpush1.msra.mxu0 0.0
      %691 = vmatprep.subr.mxu0 0.0
      %692 = vmatpush1.msra.mxu0 0.0
      %693 = vmatprep.subr.mxu0 0.0
      %694 = vmatpush1.msra.mxu0 0.0
      %695 = vmatprep.subr.mxu0 0.0
      %696 = vmatpush1.msra.mxu0 0.0
      %697 = vmatprep.subr.mxu0 0.0
      %698 = vmatpush1.msra.mxu0 0.0
      %699 = vmatprep.subr.mxu0 0.0
      %700 = vmatpush1.msra.mxu0 0.0
      %701 = vmatprep.subr.mxu0 0.0
      %702 = vmatpush1.msra.mxu0 0.0
      %703 = vmatprep.subr.mxu0 0.0
      %704 = vmatpush1.msra.mxu0 0.0
      %705 = vmatprep.subr.mxu0 0.0
      %706 = vmatpush1.msra.mxu0 0.0
      %707 = vmatprep.subr.mxu0 0.0
      %708 = vmatpush1.msra.mxu0 0.0
      %709 = vmatprep.subr.mxu0 0.0
      %710 = vmatpush1.msra.mxu0 0.0
      %711 = vmatprep.subr.mxu0 0.0
      %712 = vmatpush1.msra.mxu0 0.0
      %713 = vmatprep.subr.mxu0 0.0
      %714 = vmatpush1.msra.mxu0 0.0
      %715 = vmatprep.subr.mxu0 0.0
      %716 = vmatpush1.msra.mxu0 0.0
      %717 = vmatprep.subr.mxu0 0.0
      %718 = vmatpush1.msra.mxu0 0.0
      %719 = vmatprep.subr.mxu0 0.0
      %720 = vmatpush1.msra.mxu0 0.0
      %721 = vmatprep.subr.mxu0 0.0
      %722 = vmatpush1.msra.mxu0 0.0
      %723 = vmatprep.subr.mxu0 0.0
      %724 = vmatpush1.msra.mxu0 0.0
      %725 = vmatprep.subr.mxu0 0.0
      %726 = vmatpush1.msra.mxu0 0.0
      %727 = vmatprep.subr.mxu0 0.0
      %728 = vmatpush1.msra.mxu0 0.0
      %729 = vmatprep.subr.mxu0 0.0
      %730 = vmatpush1.msra.mxu0 0.0
      %731 = vmatprep.subr.mxu0 0.0
      %732 = vmatpush1.msra.mxu0 0.0
      %733 = vmatprep.subr.mxu0 0.0
      %734 = vmatpush1.msra.mxu0 0.0
      %735 = vmatprep.subr.mxu0 0.0
      %736 = vmatpush1.msra.mxu0 0.0
      %737 = vmatprep.subr.mxu0 0.0
      %738 = vmatpush1.msra.mxu0 0.0
      %739 = vmatprep.subr.mxu0 0.0
      %740 = vmatpush1.msra.mxu0 0.0
      %741 = vmatprep.mubr.f32.mxu0 0.0
      %742 = vmatmul.mubr.f32.gmra.mrb[0].mxu0 %v661
      %v743 = vpop.f32.mrb[0].mxu0
      %v744 = vadd.f32 0.0, %v743
      %v745 = vpop.f32.mrb[0].mxu0
      %746 = vmatprep.mubr.f32.mxu0 0.0
      %747 = vmatmul.mubr.f32.gmra.mrb[0].mxu0 %v663
      %v748 = vpop.f32.mrb[0].mxu0
      %v749 = vadd.f32 0.0, %v748
      %v750 = vpop.f32.mrb[0].mxu0
      %751 = vmatprep.mubr.f32.mxu0 0.0
      %752 = vmatmul.mubr.f32.gmra.mrb[0].mxu0 %v665
      %v753 = vpop.f32.mrb[0].mxu0
      %v754 = vadd.f32 0.0, %v753
      %v755 = vpop.f32.mrb[0].mxu0
      %756 = vmatprep.mubr.f32.mxu0 0.0
      %757 = vmatmul.mubr.f32.gmra.mrb[0].mxu0 %v667
      %v758 = vpop.f32.mrb[0].mxu0
      %v759 = vadd.f32 0.0, %v758
      %v760 = vpop.f32.mrb[0].mxu0
      %761 = vmatprep.mubr.f32.mxu0 0.0
      %762 = vmatmul.mubr.f32.gmra.mrb[0].mxu0 %v669
      %v763 = vpop.f32.mrb[0].mxu0
      %v764 = vadd.f32 0.0, %v763
      %v765 = vpop.f32.mrb[0].mxu0
      %766 = vmatprep.mubr.f32.mxu0 0.0
      %767 = vmatmul.mubr.f32.gmra.mrb[0].mxu0 %v671
      %v768 = vpop.f32.mrb[0].mxu0
      %v769 = vadd.f32 0.0, %v768
      %v770 = vpop.f32.mrb[0].mxu0
      %771 = vmatprep.mubr.f32.mxu0 0.0
      %772 = vmatmul.mubr.f32.gmra.mrb[0].mxu0 %v673
      %v773 = vpop.f32.mrb[0].mxu0
      %v774 = vadd.f32 0.0, %v773
      %v775 = vpop.f32.mrb[0].mxu0
      %776 = vmatprep.mubr.f32.mxu0 0.0
      %777 = vmatmul.mubr.f32.gmra.mrb[0].mxu0 %v675
      %v778 = vpop.f32.mrb[0].mxu0
      %v779 = vadd.f32 0.0, %v778
      %v780 = vpop.f32.mrb[0].mxu0
      %781 = vdwg.mxu0
      %v782 = vadd.f32 %v593, %v744
      %v783 = vadd.f32 %v598, %v749
      %v784 = vadd.f32 %v603, %v754
      %v785 = vadd.f32 %v608, %v759
      %v786 = vadd.f32 %v613, %v764
      %v787 = vadd.f32 %v618, %v769
      %v788 = vadd.f32 %v623, %v774
      %v789 = vadd.f32 %v628, %v779
      %s790 = scalar_lea.vmem %s281, 96
      %v791 = vld [vmem:[%s790] sm:$0xff]
      %v792 = vld [vmem:[%s790 + $0x8] sm:$0xff]
      %v793 = vld [vmem:[%s790 + $0x10] sm:$0xff]
      %v794 = vld [vmem:[%s790 + $0x18] sm:$0xff]
      %v796 = vsel %vm388, %v334, 0
      %798 = vmatprep.subr.mxu0 0.0
      %799 = vmatpush1.msra.mxu0 %v791
      %800 = vmatprep.subr.mxu0 0.0
      %801 = vmatpush1.msra.mxu0 %v792
      %802 = vmatprep.subr.mxu0 0.0
      %803 = vmatpush1.msra.mxu0 %v793
      %804 = vmatprep.subr.mxu0 0.0
      %805 = vmatpush1.msra.mxu0 %v794
      %806 = vmatprep.subr.mxu0 0.0
      %807 = vmatpush1.msra.mxu0 0.0
      %808 = vmatprep.subr.mxu0 0.0
      %809 = vmatpush1.msra.mxu0 0.0
      %810 = vmatprep.subr.mxu0 0.0
      %811 = vmatpush1.msra.mxu0 0.0
      %812 = vmatprep.subr.mxu0 0.0
      %813 = vmatpush1.msra.mxu0 0.0
      %814 = vmatprep.subr.mxu0 0.0
      %815 = vmatpush1.msra.mxu0 0.0
      %816 = vmatprep.subr.mxu0 0.0
      %817 = vmatpush1.msra.mxu0 0.0
      %818 = vmatprep.subr.mxu0 0.0
      %819 = vmatpush1.msra.mxu0 0.0
      %820 = vmatprep.subr.mxu0 0.0
      %821 = vmatpush1.msra.mxu0 0.0
      %822 = vmatprep.subr.mxu0 0.0
      %823 = vmatpush1.msra.mxu0 0.0
      %824 = vmatprep.subr.mxu0 0.0
      %825 = vmatpush1.msra.mxu0 0.0
      %826 = vmatprep.subr.mxu0 0.0
      %827 = vmatpush1.msra.mxu0 0.0
      %828 = vmatprep.subr.mxu0 0.0
      %829 = vmatpush1.msra.mxu0 0.0
      %830 = vmatprep.subr.mxu0 0.0
      %831 = vmatpush1.msra.mxu0 0.0
      %832 = vmatprep.subr.mxu0 0.0
      %833 = vmatpush1.msra.mxu0 0.0
      %834 = vmatprep.subr.mxu0 0.0
      %835 = vmatpush1.msra.mxu0 0.0
      %836 = vmatprep.subr.mxu0 0.0
      %837 = vmatpush1.msra.mxu0 0.0
      %838 = vmatprep.subr.mxu0 0.0
      %839 = vmatpush1.msra.mxu0 0.0
      %840 = vmatprep.subr.mxu0 0.0
      %841 = vmatpush1.msra.mxu0 0.0
      %842 = vmatprep.subr.mxu0 0.0
      %843 = vmatpush1.msra.mxu0 0.0
      %844 = vmatprep.subr.mxu0 0.0
      %845 = vmatpush1.msra.mxu0 0.0
      %846 = vmatprep.subr.mxu0 0.0
      %847 = vmatpush1.msra.mxu0 0.0
      %848 = vmatprep.subr.mxu0 0.0
      %849 = vmatpush1.msra.mxu0 0.0
      %850 = vmatprep.subr.mxu0 0.0
      %851 = vmatpush1.msra.mxu0 0.0
      %852 = vmatprep.subr.mxu0 0.0
      %853 = vmatpush1.msra.mxu0 0.0
      %854 = vmatprep.subr.mxu0 0.0
      %855 = vmatpush1.msra.mxu0 0.0
      %856 = vmatprep.subr.mxu0 0.0
      %857 = vmatpush1.msra.mxu0 0.0
      %858 = vmatprep.subr.mxu0 0.0
      %859 = vmatpush1.msra.mxu0 0.0
      %860 = vmatprep.subr.mxu0 0.0
      %861 = vmatpush1.msra.mxu0 0.0
      %862 = vmatprep.mubr.f32.mxu0 0.0
      %863 = vmatmul.mubr.f32.gmra.mrb[0].mxu0 %v512
      %v864 = vpop.f32.mrb[0].mxu0
      %v865 = vadd.f32 0.0, %v864
      %v866 = vpop.f32.mrb[0].mxu0
      %867 = vmatprep.mubr.f32.mxu0 0.0
      %868 = vmatmul.mubr.f32.gmra.mrb[0].mxu0 %v514
      %v869 = vpop.f32.mrb[0].mxu0
      %v870 = vadd.f32 0.0, %v869
      %v871 = vpop.f32.mrb[0].mxu0
      %872 = vmatprep.mubr.f32.mxu0 0.0
      %873 = vmatmul.mubr.f32.gmra.mrb[0].mxu0 %v516
      %v874 = vpop.f32.mrb[0].mxu0
      %v875 = vadd.f32 0.0, %v874
      %v876 = vpop.f32.mrb[0].mxu0
      %877 = vmatprep.mubr.f32.mxu0 0.0
      %878 = vmatmul.mubr.f32.gmra.mrb[0].mxu0 %v518
      %v879 = vpop.f32.mrb[0].mxu0
      %v880 = vadd.f32 0.0, %v879
      %v881 = vpop.f32.mrb[0].mxu0
      %882 = vmatprep.mubr.f32.mxu0 0.0
      %883 = vmatmul.mubr.f32.gmra.mrb[0].mxu0 %v520
      %v884 = vpop.f32.mrb[0].mxu0
      %v885 = vadd.f32 0.0, %v884
      %v886 = vpop.f32.mrb[0].mxu0
      %887 = vmatprep.mubr.f32.mxu0 0.0
      %888 = vmatmul.mubr.f32.gmra.mrb[0].mxu0 %v522
      %v889 = vpop.f32.mrb[0].mxu0
      %v890 = vadd.f32 0.0, %v889
      %v891 = vpop.f32.mrb[0].mxu0
      %892 = vmatprep.mubr.f32.mxu0 0.0
      %893 = vmatmul.mubr.f32.gmra.mrb[0].mxu0 %v524
      %v894 = vpop.f32.mrb[0].mxu0
      %v895 = vadd.f32 0.0, %v894
      %v896 = vpop.f32.mrb[0].mxu0
      %897 = vmatprep.mubr.f32.mxu0 0.0
      %898 = vmatmul.mubr.f32.gmra.mrb[0].mxu0 %v796
      %v899 = vpop.f32.mrb[0].mxu0
      %v900 = vadd.f32 0.0, %v899
      %v901 = vpop.f32.mrb[0].mxu0
      %902 = vdwg.mxu0
      %v903 = vadd.f32 %v782, %v865
      %v904 = vadd.f32 %v783, %v870
      %v905 = vadd.f32 %v784, %v875
      %v906 = vadd.f32 %v785, %v880
      %v907 = vadd.f32 %v786, %v885
      %v908 = vadd.f32 %v787, %v890
      %v909 = vadd.f32 %v788, %v895
      %v910 = vadd.f32 %v789, %v900
      %v912 = vrot.slane %v334, 1
      %v913 = vrot.slane %v335, 1
      %v914 = vsel %vm358, %v912, %v913
      %s915 = scalar_lea.vmem %s281, 128
      %v916 = vld [vmem:[%s915] sm:$0xff]
      %v917 = vld [vmem:[%s915 + $0x8] sm:$0xff]
      %v918 = vld [vmem:[%s915 + $0x10] sm:$0xff]
      %v919 = vld [vmem:[%s915 + $0x18] sm:$0xff]
      %v920 = vsel %vm388, %v914, 0
      %922 = vmatprep.subr.mxu0 0.0
      %923 = vmatpush1.msra.mxu0 %v916
      %924 = vmatprep.subr.mxu0 0.0
      %925 = vmatpush1.msra.mxu0 %v917
      %926 = vmatprep.subr.mxu0 0.0
      %927 = vmatpush1.msra.mxu0 %v918
      %928 = vmatprep.subr.mxu0 0.0
      %929 = vmatpush1.msra.mxu0 %v919
      %930 = vmatprep.subr.mxu0 0.0
      %931 = vmatpush1.msra.mxu0 0.0
      %932 = vmatprep.subr.mxu0 0.0
      %933 = vmatpush1.msra.mxu0 0.0
      %934 = vmatprep.subr.mxu0 0.0
      %935 = vmatpush1.msra.mxu0 0.0
      %936 = vmatprep.subr.mxu0 0.0
      %937 = vmatpush1.msra.mxu0 0.0
      %938 = vmatprep.subr.mxu0 0.0
      %939 = vmatpush1.msra.mxu0 0.0
      %940 = vmatprep.subr.mxu0 0.0
      %941 = vmatpush1.msra.mxu0 0.0
      %942 = vmatprep.subr.mxu0 0.0
      %943 = vmatpush1.msra.mxu0 0.0
      %944 = vmatprep.subr.mxu0 0.0
      %945 = vmatpush1.msra.mxu0 0.0
      %946 = vmatprep.subr.mxu0 0.0
      %947 = vmatpush1.msra.mxu0 0.0
      %948 = vmatprep.subr.mxu0 0.0
      %949 = vmatpush1.msra.mxu0 0.0
      %950 = vmatprep.subr.mxu0 0.0
      %951 = vmatpush1.msra.mxu0 0.0
      %952 = vmatprep.subr.mxu0 0.0
      %953 = vmatpush1.msra.mxu0 0.0
      %954 = vmatprep.subr.mxu0 0.0
      %955 = vmatpush1.msra.mxu0 0.0
      %956 = vmatprep.subr.mxu0 0.0
      %957 = vmatpush1.msra.mxu0 0.0
      %958 = vmatprep.subr.mxu0 0.0
      %959 = vmatpush1.msra.mxu0 0.0
      %960 = vmatprep.subr.mxu0 0.0
      %961 = vmatpush1.msra.mxu0 0.0
      %962 = vmatprep.subr.mxu0 0.0
      %963 = vmatpush1.msra.mxu0 0.0
      %964 = vmatprep.subr.mxu0 0.0
      %965 = vmatpush1.msra.mxu0 0.0
      %966 = vmatprep.subr.mxu0 0.0
      %967 = vmatpush1.msra.mxu0 0.0
      %968 = vmatprep.subr.mxu0 0.0
      %969 = vmatpush1.msra.mxu0 0.0
      %970 = vmatprep.subr.mxu0 0.0
      %971 = vmatpush1.msra.mxu0 0.0
      %972 = vmatprep.subr.mxu0 0.0
      %973 = vmatpush1.msra.mxu0 0.0
      %974 = vmatprep.subr.mxu0 0.0
      %975 = vmatpush1.msra.mxu0 0.0
      %976 = vmatprep.subr.mxu0 0.0
      %977 = vmatpush1.msra.mxu0 0.0
      %978 = vmatprep.subr.mxu0 0.0
      %979 = vmatpush1.msra.mxu0 0.0
      %980 = vmatprep.subr.mxu0 0.0
      %981 = vmatpush1.msra.mxu0 0.0
      %982 = vmatprep.subr.mxu0 0.0
      %983 = vmatpush1.msra.mxu0 0.0
      %984 = vmatprep.subr.mxu0 0.0
      %985 = vmatpush1.msra.mxu0 0.0
      %986 = vmatprep.mubr.f32.mxu0 0.0
      %987 = vmatmul.mubr.f32.gmra.mrb[0].mxu0 %v391
      %v988 = vpop.f32.mrb[0].mxu0
      %v989 = vadd.f32 0.0, %v988
      %v990 = vpop.f32.mrb[0].mxu0
      %991 = vmatprep.mubr.f32.mxu0 0.0
      %992 = vmatmul.mubr.f32.gmra.mrb[0].mxu0 %v393
      %v993 = vpop.f32.mrb[0].mxu0
      %v994 = vadd.f32 0.0, %v993
      %v995 = vpop.f32.mrb[0].mxu0
      %996 = vmatprep.mubr.f32.mxu0 0.0
      %997 = vmatmul.mubr.f32.gmra.mrb[0].mxu0 %v395
      %v998 = vpop.f32.mrb[0].mxu0
      %v999 = vadd.f32 0.0, %v998
      %v1000 = vpop.f32.mrb[0].mxu0
      %1001 = vmatprep.mubr.f32.mxu0 0.0
      %1002 = vmatmul.mubr.f32.gmra.mrb[0].mxu0 %v397
      %v1003 = vpop.f32.mrb[0].mxu0
      %v1004 = vadd.f32 0.0, %v1003
      %v1005 = vpop.f32.mrb[0].mxu0
      %1006 = vmatprep.mubr.f32.mxu0 0.0
      %1007 = vmatmul.mubr.f32.gmra.mrb[0].mxu0 %v399
      %v1008 = vpop.f32.mrb[0].mxu0
      %v1009 = vadd.f32 0.0, %v1008
      %v1010 = vpop.f32.mrb[0].mxu0
      %1011 = vmatprep.mubr.f32.mxu0 0.0
      %1012 = vmatmul.mubr.f32.gmra.mrb[0].mxu0 %v401
      %v1013 = vpop.f32.mrb[0].mxu0
      %v1014 = vadd.f32 0.0, %v1013
      %v1015 = vpop.f32.mrb[0].mxu0
      %1016 = vmatprep.mubr.f32.mxu0 0.0
      %1017 = vmatmul.mubr.f32.gmra.mrb[0].mxu0 %v403
      %v1018 = vpop.f32.mrb[0].mxu0
      %v1019 = vadd.f32 0.0, %v1018
      %v1020 = vpop.f32.mrb[0].mxu0
      %1021 = vmatprep.mubr.f32.mxu0 0.0
      %1022 = vmatmul.mubr.f32.gmra.mrb[0].mxu0 %v920
      %v1023 = vpop.f32.mrb[0].mxu0
      %v1024 = vadd.f32 0.0, %v1023
      %v1025 = vpop.f32.mrb[0].mxu0
      %1026 = vdwg.mxu0
      %v1027 = vadd.f32 %v903, %v989
      %v1028 = vadd.f32 %v904, %v994
      %v1029 = vadd.f32 %v905, %v999
      %v1030 = vadd.f32 %v906, %v1004
      %v1031 = vadd.f32 %v907, %v1009
      %v1032 = vadd.f32 %v908, %v1014
      %v1033 = vadd.f32 %v909, %v1019
      %v1034 = vadd.f32 %v910, %v1024
      %v1035 = vrot.slane %v334, 2
      %v1036 = vrot.slane %v335, 2
      %v1037 = vsel %vm631, %v1035, %v1036
      %s1038 = scalar_lea.vmem %s281, 160
      %v1039 = vld [vmem:[%s1038] sm:$0xff]
      %v1040 = vld [vmem:[%s1038 + $0x8] sm:$0xff]
      %v1041 = vld [vmem:[%s1038 + $0x10] sm:$0xff]
      %v1042 = vld [vmem:[%s1038 + $0x18] sm:$0xff]
      %v1043 = vsel %vm388, %v1037, 0
      %1045 = vmatprep.subr.mxu0 0.0
      %1046 = vmatpush1.msra.mxu0 %v1039
      %1047 = vmatprep.subr.mxu0 0.0
      %1048 = vmatpush1.msra.mxu0 %v1040
      %1049 = vmatprep.subr.mxu0 0.0
      %1050 = vmatpush1.msra.mxu0 %v1041
      %1051 = vmatprep.subr.mxu0 0.0
      %1052 = vmatpush1.msra.mxu0 %v1042
      %1053 = vmatprep.subr.mxu0 0.0
      %1054 = vmatpush1.msra.mxu0 0.0
      %1055 = vmatprep.subr.mxu0 0.0
      %1056 = vmatpush1.msra.mxu0 0.0
      %1057 = vmatprep.subr.mxu0 0.0
      %1058 = vmatpush1.msra.mxu0 0.0
      %1059 = vmatprep.subr.mxu0 0.0
      %1060 = vmatpush1.msra.mxu0 0.0
      %1061 = vmatprep.subr.mxu0 0.0
      %1062 = vmatpush1.msra.mxu0 0.0
      %1063 = vmatprep.subr.mxu0 0.0
      %1064 = vmatpush1.msra.mxu0 0.0
      %1065 = vmatprep.subr.mxu0 0.0
      %1066 = vmatpush1.msra.mxu0 0.0
      %1067 = vmatprep.subr.mxu0 0.0
      %1068 = vmatpush1.msra.mxu0 0.0
      %1069 = vmatprep.subr.mxu0 0.0
      %1070 = vmatpush1.msra.mxu0 0.0
      %1071 = vmatprep.subr.mxu0 0.0
      %1072 = vmatpush1.msra.mxu0 0.0
      %1073 = vmatprep.subr.mxu0 0.0
      %1074 = vmatpush1.msra.mxu0 0.0
      %1075 = vmatprep.subr.mxu0 0.0
      %1076 = vmatpush1.msra.mxu0 0.0
      %1077 = vmatprep.subr.mxu0 0.0
      %1078 = vmatpush1.msra.mxu0 0.0
      %1079 = vmatprep.subr.mxu0 0.0
      %1080 = vmatpush1.msra.mxu0 0.0
      %1081 = vmatprep.subr.mxu0 0.0
      %1082 = vmatpush1.msra.mxu0 0.0
      %1083 = vmatprep.subr.mxu0 0.0
      %1084 = vmatpush1.msra.mxu0 0.0
      %1085 = vmatprep.subr.mxu0 0.0
      %1086 = vmatpush1.msra.mxu0 0.0
      %1087 = vmatprep.subr.mxu0 0.0
      %1088 = vmatpush1.msra.mxu0 0.0
      %1089 = vmatprep.subr.mxu0 0.0
      %1090 = vmatpush1.msra.mxu0 0.0
      %1091 = vmatprep.subr.mxu0 0.0
      %1092 = vmatpush1.msra.mxu0 0.0
      %1093 = vmatprep.subr.mxu0 0.0
      %1094 = vmatpush1.msra.mxu0 0.0
      %1095 = vmatprep.subr.mxu0 0.0
      %1096 = vmatpush1.msra.mxu0 0.0
      %1097 = vmatprep.subr.mxu0 0.0
      %1098 = vmatpush1.msra.mxu0 0.0
      %1099 = vmatprep.subr.mxu0 0.0
      %1100 = vmatpush1.msra.mxu0 0.0
      %1101 = vmatprep.subr.mxu0 0.0
      %1102 = vmatpush1.msra.mxu0 0.0
      %1103 = vmatprep.subr.mxu0 0.0
      %1104 = vmatpush1.msra.mxu0 0.0
      %1105 = vmatprep.subr.mxu0 0.0
      %1106 = vmatpush1.msra.mxu0 0.0
      %1107 = vmatprep.subr.mxu0 0.0
      %1108 = vmatpush1.msra.mxu0 0.0
      %1109 = vmatprep.mubr.f32.mxu0 0.0
      %1110 = vmatmul.mubr.f32.gmra.mrb[0].mxu0 %v663
      %v1111 = vpop.f32.mrb[0].mxu0
      %v1112 = vadd.f32 0.0, %v1111
      %v1113 = vpop.f32.mrb[0].mxu0
      %1114 = vmatprep.mubr.f32.mxu0 0.0
      %1115 = vmatmul.mubr.f32.gmra.mrb[0].mxu0 %v665
      %v1116 = vpop.f32.mrb[0].mxu0
      %v1117 = vadd.f32 0.0, %v1116
      %v1118 = vpop.f32.mrb[0].mxu0
      %1119 = vmatprep.mubr.f32.mxu0 0.0
      %1120 = vmatmul.mubr.f32.gmra.mrb[0].mxu0 %v667
      %v1121 = vpop.f32.mrb[0].mxu0
      %v1122 = vadd.f32 0.0, %v1121
      %v1123 = vpop.f32.mrb[0].mxu0
      %1124 = vmatprep.mubr.f32.mxu0 0.0
      %1125 = vmatmul.mubr.f32.gmra.mrb[0].mxu0 %v669
      %v1126 = vpop.f32.mrb[0].mxu0
      %v1127 = vadd.f32 0.0, %v1126
      %v1128 = vpop.f32.mrb[0].mxu0
      %1129 = vmatprep.mubr.f32.mxu0 0.0
      %1130 = vmatmul.mubr.f32.gmra.mrb[0].mxu0 %v671
      %v1131 = vpop.f32.mrb[0].mxu0
      %v1132 = vadd.f32 0.0, %v1131
      %v1133 = vpop.f32.mrb[0].mxu0
      %1134 = vmatprep.mubr.f32.mxu0 0.0
      %1135 = vmatmul.mubr.f32.gmra.mrb[0].mxu0 %v673
      %v1136 = vpop.f32.mrb[0].mxu0
      %v1137 = vadd.f32 0.0, %v1136
      %v1138 = vpop.f32.mrb[0].mxu0
      %1139 = vmatprep.mubr.f32.mxu0 0.0
      %1140 = vmatmul.mubr.f32.gmra.mrb[0].mxu0 %v675
      %v1141 = vpop.f32.mrb[0].mxu0
      %v1142 = vadd.f32 0.0, %v1141
      %v1143 = vpop.f32.mrb[0].mxu0
      %1144 = vmatprep.mubr.f32.mxu0 0.0
      %1145 = vmatmul.mubr.f32.gmra.mrb[0].mxu0 %v1043
      %v1146 = vpop.f32.mrb[0].mxu0
      %v1147 = vadd.f32 0.0, %v1146
      %v1148 = vpop.f32.mrb[0].mxu0
      %1149 = vdwg.mxu0
      %v1150 = vadd.f32 %v1027, %v1112
      %v1151 = vadd.f32 %v1028, %v1117
      %v1152 = vadd.f32 %v1029, %v1122
      %v1153 = vadd.f32 %v1030, %v1127
      %v1154 = vadd.f32 %v1031, %v1132
      %v1155 = vadd.f32 %v1032, %v1137
      %v1156 = vadd.f32 %v1033, %v1142
      %v1157 = vadd.f32 %v1034, %v1147
      %s1158 = scalar_lea.vmem %s281, 192
      %v1159 = vld [vmem:[%s1158] sm:$0xff]
      %v1160 = vld [vmem:[%s1158 + $0x8] sm:$0xff]
      %v1161 = vld [vmem:[%s1158 + $0x10] sm:$0xff]
      %v1162 = vld [vmem:[%s1158 + $0x18] sm:$0xff]
      %v1164 = vsel %vm388, %v336, 0
      %1166 = vmatprep.subr.mxu0 0.0
      %1167 = vmatpush1.msra.mxu0 %v1159
      %1168 = vmatprep.subr.mxu0 0.0
      %1169 = vmatpush1.msra.mxu0 %v1160
      %1170 = vmatprep.subr.mxu0 0.0
      %1171 = vmatpush1.msra.mxu0 %v1161
      %1172 = vmatprep.subr.mxu0 0.0
      %1173 = vmatpush1.msra.mxu0 %v1162
      %1174 = vmatprep.subr.mxu0 0.0
      %1175 = vmatpush1.msra.mxu0 0.0
      %1176 = vmatprep.subr.mxu0 0.0
      %1177 = vmatpush1.msra.mxu0 0.0
      %1178 = vmatprep.subr.mxu0 0.0
      %1179 = vmatpush1.msra.mxu0 0.0
      %1180 = vmatprep.subr.mxu0 0.0
      %1181 = vmatpush1.msra.mxu0 0.0
      %1182 = vmatprep.subr.mxu0 0.0
      %1183 = vmatpush1.msra.mxu0 0.0
      %1184 = vmatprep.subr.mxu0 0.0
      %1185 = vmatpush1.msra.mxu0 0.0
      %1186 = vmatprep.subr.mxu0 0.0
      %1187 = vmatpush1.msra.mxu0 0.0
      %1188 = vmatprep.subr.mxu0 0.0
      %1189 = vmatpush1.msra.mxu0 0.0
      %1190 = vmatprep.subr.mxu0 0.0
      %1191 = vmatpush1.msra.mxu0 0.0
      %1192 = vmatprep.subr.mxu0 0.0
      %1193 = vmatpush1.msra.mxu0 0.0
      %1194 = vmatprep.subr.mxu0 0.0
      %1195 = vmatpush1.msra.mxu0 0.0
      %1196 = vmatprep.subr.mxu0 0.0
      %1197 = vmatpush1.msra.mxu0 0.0
      %1198 = vmatprep.subr.mxu0 0.0
      %1199 = vmatpush1.msra.mxu0 0.0
      %1200 = vmatprep.subr.mxu0 0.0
      %1201 = vmatpush1.msra.mxu0 0.0
      %1202 = vmatprep.subr.mxu0 0.0
      %1203 = vmatpush1.msra.mxu0 0.0
      %1204 = vmatprep.subr.mxu0 0.0
      %1205 = vmatpush1.msra.mxu0 0.0
      %1206 = vmatprep.subr.mxu0 0.0
      %1207 = vmatpush1.msra.mxu0 0.0
      %1208 = vmatprep.subr.mxu0 0.0
      %1209 = vmatpush1.msra.mxu0 0.0
      %1210 = vmatprep.subr.mxu0 0.0
      %1211 = vmatpush1.msra.mxu0 0.0
      %1212 = vmatprep.subr.mxu0 0.0
      %1213 = vmatpush1.msra.mxu0 0.0
      %1214 = vmatprep.subr.mxu0 0.0
      %1215 = vmatpush1.msra.mxu0 0.0
      %1216 = vmatprep.subr.mxu0 0.0
      %1217 = vmatpush1.msra.mxu0 0.0
      %1218 = vmatprep.subr.mxu0 0.0
      %1219 = vmatpush1.msra.mxu0 0.0
      %1220 = vmatprep.subr.mxu0 0.0
      %1221 = vmatpush1.msra.mxu0 0.0
      %1222 = vmatprep.subr.mxu0 0.0
      %1223 = vmatpush1.msra.mxu0 0.0
      %1224 = vmatprep.subr.mxu0 0.0
      %1225 = vmatpush1.msra.mxu0 0.0
      %1226 = vmatprep.subr.mxu0 0.0
      %1227 = vmatpush1.msra.mxu0 0.0
      %1228 = vmatprep.subr.mxu0 0.0
      %1229 = vmatpush1.msra.mxu0 0.0
      %1230 = vmatprep.mubr.f32.mxu0 0.0
      %1231 = vmatmul.mubr.f32.gmra.mrb[0].mxu0 %v514
      %v1232 = vpop.f32.mrb[0].mxu0
      %v1233 = vadd.f32 0.0, %v1232
      %v1234 = vpop.f32.mrb[0].mxu0
      %1235 = vmatprep.mubr.f32.mxu0 0.0
      %1236 = vmatmul.mubr.f32.gmra.mrb[0].mxu0 %v516
      %v1237 = vpop.f32.mrb[0].mxu0
      %v1238 = vadd.f32 0.0, %v1237
      %v1239 = vpop.f32.mrb[0].mxu0
      %1240 = vmatprep.mubr.f32.mxu0 0.0
      %1241 = vmatmul.mubr.f32.gmra.mrb[0].mxu0 %v518
      %v1242 = vpop.f32.mrb[0].mxu0
      %v1243 = vadd.f32 0.0, %v1242
      %v1244 = vpop.f32.mrb[0].mxu0
      %1245 = vmatprep.mubr.f32.mxu0 0.0
      %1246 = vmatmul.mubr.f32.gmra.mrb[0].mxu0 %v520
      %v1247 = vpop.f32.mrb[0].mxu0
      %v1248 = vadd.f32 0.0, %v1247
      %v1249 = vpop.f32.mrb[0].mxu0
      %1250 = vmatprep.mubr.f32.mxu0 0.0
      %1251 = vmatmul.mubr.f32.gmra.mrb[0].mxu0 %v522
      %v1252 = vpop.f32.mrb[0].mxu0
      %v1253 = vadd.f32 0.0, %v1252
      %v1254 = vpop.f32.mrb[0].mxu0
      %1255 = vmatprep.mubr.f32.mxu0 0.0
      %1256 = vmatmul.mubr.f32.gmra.mrb[0].mxu0 %v524
      %v1257 = vpop.f32.mrb[0].mxu0
      %v1258 = vadd.f32 0.0, %v1257
      %v1259 = vpop.f32.mrb[0].mxu0
      %1260 = vmatprep.mubr.f32.mxu0 0.0
      %1261 = vmatmul.mubr.f32.gmra.mrb[0].mxu0 %v796
      %v1262 = vpop.f32.mrb[0].mxu0
      %v1263 = vadd.f32 0.0, %v1262
      %v1264 = vpop.f32.mrb[0].mxu0
      %1265 = vmatprep.mubr.f32.mxu0 0.0
      %1266 = vmatmul.mubr.f32.gmra.mrb[0].mxu0 %v1164
      %v1267 = vpop.f32.mrb[0].mxu0
      %v1268 = vadd.f32 0.0, %v1267
      %v1269 = vpop.f32.mrb[0].mxu0
      %1270 = vdwg.mxu0
      %v1271 = vadd.f32 %v1150, %v1233
      %v1272 = vadd.f32 %v1151, %v1238
      %v1273 = vadd.f32 %v1152, %v1243
      %v1274 = vadd.f32 %v1153, %v1248
      %v1275 = vadd.f32 %v1154, %v1253
      %v1276 = vadd.f32 %v1155, %v1258
      %v1277 = vadd.f32 %v1156, %v1263
      %v1278 = vadd.f32 %v1157, %v1268
      %v1280 = vrot.slane %v336, 1
      %v1281 = vrot.slane %v337, 1
      %v1282 = vsel %vm358, %v1280, %v1281
      %s1283 = scalar_lea.vmem %s281, 224
      %v1284 = vld [vmem:[%s1283] sm:$0xff]
      %v1285 = vld [vmem:[%s1283 + $0x8] sm:$0xff]
      %v1286 = vld [vmem:[%s1283 + $0x10] sm:$0xff]
      %v1287 = vld [vmem:[%s1283 + $0x18] sm:$0xff]
      %v1288 = vsel %vm388, %v1282, 0
      %1290 = vmatprep.subr.mxu0 0.0
      %1291 = vmatpush1.msra.mxu0 %v1284
      %1292 = vmatprep.subr.mxu0 0.0
      %1293 = vmatpush1.msra.mxu0 %v1285
      %1294 = vmatprep.subr.mxu0 0.0
      %1295 = vmatpush1.msra.mxu0 %v1286
      %1296 = vmatprep.subr.mxu0 0.0
      %1297 = vmatpush1.msra.mxu0 %v1287
      %1298 = vmatprep.subr.mxu0 0.0
      %1299 = vmatpush1.msra.mxu0 0.0
      %1300 = vmatprep.subr.mxu0 0.0
      %1301 = vmatpush1.msra.mxu0 0.0
      %1302 = vmatprep.subr.mxu0 0.0
      %1303 = vmatpush1.msra.mxu0 0.0
      %1304 = vmatprep.subr.mxu0 0.0
      %1305 = vmatpush1.msra.mxu0 0.0
      %1306 = vmatprep.subr.mxu0 0.0
      %1307 = vmatpush1.msra.mxu0 0.0
      %1308 = vmatprep.subr.mxu0 0.0
      %1309 = vmatpush1.msra.mxu0 0.0
      %1310 = vmatprep.subr.mxu0 0.0
      %1311 = vmatpush1.msra.mxu0 0.0
      %1312 = vmatprep.subr.mxu0 0.0
      %1313 = vmatpush1.msra.mxu0 0.0
      %1314 = vmatprep.subr.mxu0 0.0
      %1315 = vmatpush1.msra.mxu0 0.0
      %1316 = vmatprep.subr.mxu0 0.0
      %1317 = vmatpush1.msra.mxu0 0.0
      %1318 = vmatprep.subr.mxu0 0.0
      %1319 = vmatpush1.msra.mxu0 0.0
      %1320 = vmatprep.subr.mxu0 0.0
      %1321 = vmatpush1.msra.mxu0 0.0
      %1322 = vmatprep.subr.mxu0 0.0
      %1323 = vmatpush1.msra.mxu0 0.0
      %1324 = vmatprep.subr.mxu0 0.0
      %1325 = vmatpush1.msra.mxu0 0.0
      %1326 = vmatprep.subr.mxu0 0.0
      %1327 = vmatpush1.msra.mxu0 0.0
      %1328 = vmatprep.subr.mxu0 0.0
      %1329 = vmatpush1.msra.mxu0 0.0
      %1330 = vmatprep.subr.mxu0 0.0
      %1331 = vmatpush1.msra.mxu0 0.0
      %1332 = vmatprep.subr.mxu0 0.0
      %1333 = vmatpush1.msra.mxu0 0.0
      %1334 = vmatprep.subr.mxu0 0.0
      %1335 = vmatpush1.msra.mxu0 0.0
      %1336 = vmatprep.subr.mxu0 0.0
      %1337 = vmatpush1.msra.mxu0 0.0
      %1338 = vmatprep.subr.mxu0 0.0
      %1339 = vmatpush1.msra.mxu0 0.0
      %1340 = vmatprep.subr.mxu0 0.0
      %1341 = vmatpush1.msra.mxu0 0.0
      %1342 = vmatprep.subr.mxu0 0.0
      %1343 = vmatpush1.msra.mxu0 0.0
      %1344 = vmatprep.subr.mxu0 0.0
      %1345 = vmatpush1.msra.mxu0 0.0
      %1346 = vmatprep.subr.mxu0 0.0
      %1347 = vmatpush1.msra.mxu0 0.0
      %1348 = vmatprep.subr.mxu0 0.0
      %1349 = vmatpush1.msra.mxu0 0.0
      %1350 = vmatprep.subr.mxu0 0.0
      %1351 = vmatpush1.msra.mxu0 0.0
      %1352 = vmatprep.subr.mxu0 0.0
      %1353 = vmatpush1.msra.mxu0 0.0
      %1354 = vmatprep.mubr.f32.mxu0 0.0
      %1355 = vmatmul.mubr.f32.gmra.mrb[0].mxu0 %v393
      %v1356 = vpop.f32.mrb[0].mxu0
      %v1357 = vadd.f32 0.0, %v1356
      %v1358 = vpop.f32.mrb[0].mxu0
      %1359 = vmatprep.mubr.f32.mxu0 0.0
      %1360 = vmatmul.mubr.f32.gmra.mrb[0].mxu0 %v395
      %v1361 = vpop.f32.mrb[0].mxu0
      %v1362 = vadd.f32 0.0, %v1361
      %v1363 = vpop.f32.mrb[0].mxu0
      %1364 = vmatprep.mubr.f32.mxu0 0.0
      %1365 = vmatmul.mubr.f32.gmra.mrb[0].mxu0 %v397
      %v1366 = vpop.f32.mrb[0].mxu0
      %v1367 = vadd.f32 0.0, %v1366
      %v1368 = vpop.f32.mrb[0].mxu0
      %1369 = vmatprep.mubr.f32.mxu0 0.0
      %1370 = vmatmul.mubr.f32.gmra.mrb[0].mxu0 %v399
      %v1371 = vpop.f32.mrb[0].mxu0
      %v1372 = vadd.f32 0.0, %v1371
      %v1373 = vpop.f32.mrb[0].mxu0
      %1374 = vmatprep.mubr.f32.mxu0 0.0
      %1375 = vmatmul.mubr.f32.gmra.mrb[0].mxu0 %v401
      %v1376 = vpop.f32.mrb[0].mxu0
      %v1377 = vadd.f32 0.0, %v1376
      %v1378 = vpop.f32.mrb[0].mxu0
      %1379 = vmatprep.mubr.f32.mxu0 0.0
      %1380 = vmatmul.mubr.f32.gmra.mrb[0].mxu0 %v403
      %v1381 = vpop.f32.mrb[0].mxu0
      %v1382 = vadd.f32 0.0, %v1381
      %v1383 = vpop.f32.mrb[0].mxu0
      %1384 = vmatprep.mubr.f32.mxu0 0.0
      %1385 = vmatmul.mubr.f32.gmra.mrb[0].mxu0 %v920
      %v1386 = vpop.f32.mrb[0].mxu0
      %v1387 = vadd.f32 0.0, %v1386
      %v1388 = vpop.f32.mrb[0].mxu0
      %1389 = vmatprep.mubr.f32.mxu0 0.0
      %1390 = vmatmul.mubr.f32.gmra.mrb[0].mxu0 %v1288
      %v1391 = vpop.f32.mrb[0].mxu0
      %v1392 = vadd.f32 0.0, %v1391
      %v1393 = vpop.f32.mrb[0].mxu0
      %1394 = vdwg.mxu0
      %v1395 = vadd.f32 %v1271, %v1357
      %v1396 = vadd.f32 %v1272, %v1362
      %v1397 = vadd.f32 %v1273, %v1367
      %v1398 = vadd.f32 %v1274, %v1372
      %v1399 = vadd.f32 %v1275, %v1377
      %v1400 = vadd.f32 %v1276, %v1382
      %v1401 = vadd.f32 %v1277, %v1387
      %v1402 = vadd.f32 %v1278, %v1392
      %v1403 = vrot.slane %v336, 2
      %v1404 = vrot.slane %v337, 2
      %v1405 = vsel %vm631, %v1403, %v1404
      %s1406 = scalar_lea.vmem %s281, 256
      %v1407 = vld [vmem:[%s1406] sm:$0xff]
      %v1408 = vld [vmem:[%s1406 + $0x8] sm:$0xff]
      %v1409 = vld [vmem:[%s1406 + $0x10] sm:$0xff]
      %v1410 = vld [vmem:[%s1406 + $0x18] sm:$0xff]
      %v1411 = vsel %vm388, %v1405, 0
      %1413 = vmatprep.subr.mxu0 0.0
      %1414 = vmatpush1.msra.mxu0 %v1407
      %1415 = vmatprep.subr.mxu0 0.0
      %1416 = vmatpush1.msra.mxu0 %v1408
      %1417 = vmatprep.subr.mxu0 0.0
      %1418 = vmatpush1.msra.mxu0 %v1409
      %1419 = vmatprep.subr.mxu0 0.0
      %1420 = vmatpush1.msra.mxu0 %v1410
      %1421 = vmatprep.subr.mxu0 0.0
      %1422 = vmatpush1.msra.mxu0 0.0
      %1423 = vmatprep.subr.mxu0 0.0
      %1424 = vmatpush1.msra.mxu0 0.0
      %1425 = vmatprep.subr.mxu0 0.0
      %1426 = vmatpush1.msra.mxu0 0.0
      %1427 = vmatprep.subr.mxu0 0.0
      %1428 = vmatpush1.msra.mxu0 0.0
      %1429 = vmatprep.subr.mxu0 0.0
      %1430 = vmatpush1.msra.mxu0 0.0
      %1431 = vmatprep.subr.mxu0 0.0
      %1432 = vmatpush1.msra.mxu0 0.0
      %1433 = vmatprep.subr.mxu0 0.0
      %1434 = vmatpush1.msra.mxu0 0.0
      %1435 = vmatprep.subr.mxu0 0.0
      %1436 = vmatpush1.msra.mxu0 0.0
      %1437 = vmatprep.subr.mxu0 0.0
      %1438 = vmatpush1.msra.mxu0 0.0
      %1439 = vmatprep.subr.mxu0 0.0
      %1440 = vmatpush1.msra.mxu0 0.0
      %1441 = vmatprep.subr.mxu0 0.0
      %1442 = vmatpush1.msra.mxu0 0.0
      %1443 = vmatprep.subr.mxu0 0.0
      %1444 = vmatpush1.msra.mxu0 0.0
      %1445 = vmatprep.subr.mxu0 0.0
      %1446 = vmatpush1.msra.mxu0 0.0
      %1447 = vmatprep.subr.mxu0 0.0
      %1448 = vmatpush1.msra.mxu0 0.0
      %1449 = vmatprep.subr.mxu0 0.0
      %1450 = vmatpush1.msra.mxu0 0.0
      %1451 = vmatprep.subr.mxu0 0.0
      %1452 = vmatpush1.msra.mxu0 0.0
      %1453 = vmatprep.subr.mxu0 0.0
      %1454 = vmatpush1.msra.mxu0 0.0
      %1455 = vmatprep.subr.mxu0 0.0
      %1456 = vmatpush1.msra.mxu0 0.0
      %1457 = vmatprep.subr.mxu0 0.0
      %1458 = vmatpush1.msra.mxu0 0.0
      %1459 = vmatprep.subr.mxu0 0.0
      %1460 = vmatpush1.msra.mxu0 0.0
      %1461 = vmatprep.subr.mxu0 0.0
      %1462 = vmatpush1.msra.mxu0 0.0
      %1463 = vmatprep.subr.mxu0 0.0
      %1464 = vmatpush1.msra.mxu0 0.0
      %1465 = vmatprep.subr.mxu0 0.0
      %1466 = vmatpush1.msra.mxu0 0.0
      %1467 = vmatprep.subr.mxu0 0.0
      %1468 = vmatpush1.msra.mxu0 0.0
      %1469 = vmatprep.subr.mxu0 0.0
      %1470 = vmatpush1.msra.mxu0 0.0
      %1471 = vmatprep.subr.mxu0 0.0
      %1472 = vmatpush1.msra.mxu0 0.0
      %1473 = vmatprep.subr.mxu0 0.0
      %1474 = vmatpush1.msra.mxu0 0.0
      %1475 = vmatprep.subr.mxu0 0.0
      %1476 = vmatpush1.msra.mxu0 0.0
      %1477 = vmatprep.mubr.f32.mxu0 0.0
      %1478 = vmatmul.mubr.f32.gmra.mrb[0].mxu0 %v665
      %v1479 = vpop.f32.mrb[0].mxu0
      %v1480 = vadd.f32 0.0, %v1479
      %v1481 = vpop.f32.mrb[0].mxu0
      %1482 = vmatprep.mubr.f32.mxu0 0.0
      %1483 = vmatmul.mubr.f32.gmra.mrb[0].mxu0 %v667
      %v1484 = vpop.f32.mrb[0].mxu0
      %v1485 = vadd.f32 0.0, %v1484
      %v1486 = vpop.f32.mrb[0].mxu0
      %1487 = vmatprep.mubr.f32.mxu0 0.0
      %1488 = vmatmul.mubr.f32.gmra.mrb[0].mxu0 %v669
      %v1489 = vpop.f32.mrb[0].mxu0
      %v1490 = vadd.f32 0.0, %v1489
      %v1491 = vpop.f32.mrb[0].mxu0
      %1492 = vmatprep.mubr.f32.mxu0 0.0
      %1493 = vmatmul.mubr.f32.gmra.mrb[0].mxu0 %v671
      %v1494 = vpop.f32.mrb[0].mxu0
      %v1495 = vadd.f32 0.0, %v1494
      %v1496 = vpop.f32.mrb[0].mxu0
      %1497 = vmatprep.mubr.f32.mxu0 0.0
      %1498 = vmatmul.mubr.f32.gmra.mrb[0].mxu0 %v673
      %v1499 = vpop.f32.mrb[0].mxu0
      %v1500 = vadd.f32 0.0, %v1499
      %v1501 = vpop.f32.mrb[0].mxu0
      %1502 = vmatprep.mubr.f32.mxu0 0.0
      %1503 = vmatmul.mubr.f32.gmra.mrb[0].mxu0 %v675
      %v1504 = vpop.f32.mrb[0].mxu0
      %v1505 = vadd.f32 0.0, %v1504
      %v1506 = vpop.f32.mrb[0].mxu0
      %1507 = vmatprep.mubr.f32.mxu0 0.0
      %1508 = vmatmul.mubr.f32.gmra.mrb[0].mxu0 %v1043
      %v1509 = vpop.f32.mrb[0].mxu0
      %v1510 = vadd.f32 0.0, %v1509
      %v1511 = vpop.f32.mrb[0].mxu0
      %1512 = vmatprep.mubr.f32.mxu0 0.0
      %1513 = vmatmul.mubr.f32.gmra.mrb[0].mxu0 %v1411
      %v1514 = vpop.f32.mrb[0].mxu0
      %v1515 = vadd.f32 0.0, %v1514
      %v1516 = vpop.f32.mrb[0].mxu0
      %1517 = vdwg.mxu0
      %v1518 = vadd.f32 %v1395, %v1480
      %v1519 = vadd.f32 %v1396, %v1485
      %v1520 = vadd.f32 %v1397, %v1490
      %v1521 = vadd.f32 %v1398, %v1495
      %v1522 = vadd.f32 %v1399, %v1500
      %v1523 = vadd.f32 %v1400, %v1505
      %v1524 = vadd.f32 %v1401, %v1510
      %v1525 = vadd.f32 %v1402, %v1515
      %v1526 = vld [vmem:[#allocation2] sm:$0xff]
      %v1527 = vld [vmem:[#allocation2 + $0x8] sm:$0xff]
      %v1528 = vld [vmem:[#allocation2 + $0x10] sm:$0xff]
      %v1529 = vld [vmem:[#allocation2 + $0x18] sm:$0xff]
      %v1530 = vld [vmem:[#allocation2 + $0x20] sm:$0xff]
      %v1531 = vld [vmem:[#allocation2 + $0x28] sm:$0xff]
      %v1532 = vld [vmem:[#allocation2 + $0x30] sm:$0xff]
      %v1533 = vld [vmem:[#allocation2 + $0x38] sm:$0xff]
      %v1534 = vadd.f32 %v1526, %v1518
      %v1535 = vadd.f32 %v1527, %v1519
      %v1536 = vadd.f32 %v1528, %v1520
      %v1537 = vadd.f32 %v1529, %v1521
      %v1538 = vadd.f32 %v1530, %v1522
      %v1539 = vadd.f32 %v1531, %v1523
      %v1540 = vadd.f32 %v1532, %v1524
      %v1541 = vadd.f32 %v1533, %v1525
      %vm1542 = vcmask 523264
      %1543 = vst.msk [vmem:[#allocation2] sm:$0xff] %vm1542, %v1534
      %1544 = vst.msk [vmem:[#allocation2 + $0x8] sm:$0xff] %vm1542, %v1535
      %1545 = vst.msk [vmem:[#allocation2 + $0x10] sm:$0xff] %vm1542, %v1536
      %1546 = vst.msk [vmem:[#allocation2 + $0x18] sm:$0xff] %vm1542, %v1537
      %1547 = vst.msk [vmem:[#allocation2 + $0x20] sm:$0xff] %vm1542, %v1538
      %1548 = vst.msk [vmem:[#allocation2 + $0x28] sm:$0xff] %vm1542, %v1539
      %1549 = vst.msk [vmem:[#allocation2 + $0x30] sm:$0xff] %vm1542, %v1540
      %1550 = vst.msk [vmem:[#allocation2 + $0x38] sm:$0xff] %vm1542, %v1541
      %p1551 = scmp.eq.s32.totalorder %s23, 2
      // Predicated region
      $region33: #{down_transition_forward.6} parent=27 // pred_check
        %p1552 = pneg %p1551
      $region34: #{down_transition_forward.6} parent=27 // pred_check_branch
        %1554 = sbr.rel (%p1552) target = $region36
      $region35: #{down_transition_forward.6} parent=27 // pred_region
        %v1555 = vld [vmem:[#allocation2] sm:$0xff]
        %v1556 = vld [vmem:[#allocation2 + $0x8] sm:$0xff]
        %v1557 = vld [vmem:[#allocation2 + $0x10] sm:$0xff]
        %v1558 = vld [vmem:[#allocation2 + $0x18] sm:$0xff]
        %v1559 = vld [vmem:[#allocation2 + $0x20] sm:$0xff]
        %v1560 = vld [vmem:[#allocation2 + $0x28] sm:$0xff]
        %v1561 = vld [vmem:[#allocation2 + $0x30] sm:$0xff]
        %v1562 = vld [vmem:[#allocation2 + $0x38] sm:$0xff]
        %1563 = vst.msk [vmem:[%s290] sm:$0xff] %vm1542, %v1555
        %1564 = vst.msk [vmem:[%s290 + $0x8] sm:$0xff] %vm1542, %v1556
        %1565 = vst.msk [vmem:[%s290 + $0x10] sm:$0xff] %vm1542, %v1557
        %1566 = vst.msk [vmem:[%s290 + $0x18] sm:$0xff] %vm1542, %v1558
        %1567 = vst.msk [vmem:[%s290 + $0x20] sm:$0xff] %vm1542, %v1559
        %1568 = vst.msk [vmem:[%s290 + $0x28] sm:$0xff] %vm1542, %v1560
        %1569 = vst.msk [vmem:[%s290 + $0x30] sm:$0xff] %vm1542, %v1561
        %1570 = vst.msk [vmem:[%s290 + $0x38] sm:$0xff] %vm1542, %v1562
        %v1571 = vsel %vm1542, %v1555, 0.0
        %v1572 = vsel %vm1542, %v1556, 0.0
        %v1573 = vadd.f32 %v1571, %v1572
        %v1574 = vsel %vm1542, %v1557, 0.0
        %v1575 = vadd.f32 %v1573, %v1574
        %v1576 = vsel %vm1542, %v1558, 0.0
        %v1577 = vadd.f32 %v1575, %v1576
        %v1578 = vsel %vm1542, %v1559, 0.0
        %v1579 = vadd.f32 %v1577, %v1578
        %v1580 = vsel %vm1542, %v1560, 0.0
        %v1581 = vadd.f32 %v1579, %v1580
        %v1582 = vsel %vm1542, %v1561, 0.0
        %v1583 = vadd.f32 %v1581, %v1582
        %v1584 = vsel %vm1542, %v1562, 0.0
        %v1585 = vadd.f32 %v1583, %v1584
        %v1586 = vrot.slane %v1585, 4
        %v1587 = vadd.f32 %v1585, %v1586
        %v1588 = vrot.slane %v1587, 2
        %v1589 = vadd.f32 %v1587, %v1588
        %v1590 = vrot.slane %v1589, 1
        %v1591 = vadd.f32 %v1589, %v1590
        %v1592 = vmul.f32 %v1555, %v1555
        %v1593 = vmul.f32 %v1556, %v1556
        %v1594 = vmul.f32 %v1557, %v1557
        %v1595 = vmul.f32 %v1558, %v1558
        %v1596 = vmul.f32 %v1559, %v1559
        %v1597 = vmul.f32 %v1560, %v1560
        %v1598 = vmul.f32 %v1561, %v1561
        %v1599 = vmul.f32 %v1562, %v1562
        %v1600 = vsel %vm1542, %v1592, 0.0
        %v1601 = vsel %vm1542, %v1593, 0.0
        %v1602 = vadd.f32 %v1600, %v1601
        %v1603 = vsel %vm1542, %v1594, 0.0
        %v1604 = vadd.f32 %v1602, %v1603
        %v1605 = vsel %vm1542, %v1595, 0.0
        %v1606 = vadd.f32 %v1604, %v1605
        %v1607 = vsel %vm1542, %v1596, 0.0
        %v1608 = vadd.f32 %v1606, %v1607
        %v1609 = vsel %vm1542, %v1597, 0.0
        %v1610 = vadd.f32 %v1608, %v1609
        %v1611 = vsel %vm1542, %v1598, 0.0
        %v1612 = vadd.f32 %v1610, %v1611
        %v1613 = vsel %vm1542, %v1599, 0.0
        %v1614 = vadd.f32 %v1612, %v1613
        %v1615 = vrot.slane %v1614, 4
        %v1616 = vadd.f32 %v1614, %v1615
        %v1617 = vrot.slane %v1616, 2
        %v1618 = vadd.f32 %v1616, %v1617
        %v1619 = vrot.slane %v1618, 1
        %v1620 = vadd.f32 %v1618, %v1619
        %vm1621 = vcmask 516096
        %1622 = vst.msk [vmem:[%s297] sm:$0x1] %vm1621, %v1591
        %1623 = vst.msk [vmem:[%s304] sm:$0x1] %vm1621, %v1620
      $region36: #{down_transition_forward.6} parent=27 // pred_fallthru
        _
      %p1624 = scmp.lt.s32.totalorder %s21, 1
      %s1625 = scalar_select %p1624, %s21, 1
      %p1626 = scmp.lt.s32.totalorder %s22, 7
      %s1627 = scalar_select %p1626, %s22, 7
      %s1628 = smul.addr %s1627, 8
      %s1629 = smul.addr %s1625, 64
      %s1630 = sadd.s32 %s1628, %s1629
      %s1631 = smul.addr %s1630, 8
      %s1632 = scalar_lea.vmem %s2, %s1631
      %p1633 = scmp.lt.s32.totalorder %s21, 1
      %s1634 = scalar_select %p1633, %s21, 1
      %p1635 = scmp.lt.s32.totalorder %s22, 7
      %s1636 = scalar_select %p1635, %s22, 7
      %s1637 = smul.addr %s1634, 8
      %s1638 = sadd.s32 %s1636, %s1637
      %s1639 = scalar_lea.vmem %s3, %s1638
      %p1640 = scmp.lt.s32.totalorder %s21, 1
      %s1641 = scalar_select %p1640, %s21, 1
      %p1642 = scmp.lt.s32.totalorder %s22, 7
      %s1643 = scalar_select %p1642, %s22, 7
      %s1644 = smul.addr %s1641, 8
      %s1645 = sadd.s32 %s1643, %s1644
      %s1646 = scalar_lea.vmem %s4, %s1645
      // Predicated region
      $region37: #{down_transition_forward.6} parent=27 // pred_check
        %p1647 = pneg %p111
      $region38: #{down_transition_forward.6} parent=27 // pred_check_branch
        %1649 = sbr.rel (%p1647) target = $region40
      $region39: #{down_transition_forward.6} parent=27 // pred_region
        _
      $region40: #{down_transition_forward.6} parent=27 // pred_fallthru
        _
      // Predicated region
      $region41: #{down_transition_forward.6} parent=27 // pred_check
        %p1650 = pneg %p139
      $region42: #{down_transition_forward.6} parent=27 // pred_check_branch
        %1652 = sbr.rel (%p1650) target = $region44
      $region43: #{down_transition_forward.6} parent=27 // pred_region
        _
      $region44: #{down_transition_forward.6} parent=27 // pred_fallthru
        _
      // Predicated region
      $region45: #{down_transition_forward.6} parent=27 // pred_check
        %p1653 = pneg %p167
      $region46: #{down_transition_forward.6} parent=27 // pred_check_branch
        %1655 = sbr.rel (%p1653) target = $region48
      $region47: #{down_transition_forward.6} parent=27 // pred_region
        _
      $region48: #{down_transition_forward.6} parent=27 // pred_fallthru
        _
    $region28: #{down_transition_forward.6} parent=5 // pred_fallthru
      _
    %p1656 = scmp.le.s32.totalorder 2, %s11
    // Predicated region
    $region49: #{down_transition_forward.6} parent=5 // pred_check
      %p1657 = pneg %p1656
    $region50: #{down_transition_forward.6} parent=5 // pred_check_branch
      %1659 = sbr.rel (%p1657) target = $region52
    $region51: #{down_transition_forward.6} parent=5 // pred_region
      %s1660 = ssub.s32 %s11, 2
      // Predicated region
      $region53: #{down_transition_forward.6} parent=51 // pred_check
        %p1661 = pneg %p117
      $region54: #{down_transition_forward.6} parent=51 // pred_check_branch
        %1663 = sbr.rel (%p1661) target = $region56
      $region55: #{down_transition_forward.6} parent=51 // pred_region
        %p1664 = scmp.lt.s32.totalorder %s24, 1
        %s1665 = scalar_select %p1664, %s24, 1
        %p1666 = scmp.lt.s32.totalorder %s25, 7
        %s1667 = scalar_select %p1666, %s25, 7
        %s1668 = smul.addr %s1667, 8
        %s1669 = smul.addr %s1665, 64
        %s1670 = sadd.s32 %s1668, %s1669
        %s1671 = smul.addr %s1670, 8
        %s1672 = scalar_lea.vmem %s2, %s1671
      $region56: #{down_transition_forward.6} parent=51 // pred_fallthru
        _
      // Predicated region
      $region57: #{down_transition_forward.6} parent=51 // pred_check
        %p1673 = pneg %p145
      $region58: #{down_transition_forward.6} parent=51 // pred_check_branch
        %1675 = sbr.rel (%p1673) target = $region60
      $region59: #{down_transition_forward.6} parent=51 // pred_region
        %p1676 = scmp.lt.s32.totalorder %s24, 1
        %s1677 = scalar_select %p1676, %s24, 1
        %p1678 = scmp.lt.s32.totalorder %s25, 7
        %s1679 = scalar_select %p1678, %s25, 7
        %s1680 = smul.addr %s1677, 8
        %s1681 = sadd.s32 %s1679, %s1680
        %s1682 = scalar_lea.vmem %s3, %s1681
      $region60: #{down_transition_forward.6} parent=51 // pred_fallthru
        _
      // Predicated region
      $region61: #{down_transition_forward.6} parent=51 // pred_check
        %p1683 = pneg %p173
      $region62: #{down_transition_forward.6} parent=51 // pred_check_branch
        %1685 = sbr.rel (%p1683) target = $region64
      $region63: #{down_transition_forward.6} parent=51 // pred_region
        %p1686 = scmp.lt.s32.totalorder %s24, 1
        %s1687 = scalar_select %p1686, %s24, 1
        %p1688 = scmp.lt.s32.totalorder %s25, 7
        %s1689 = scalar_select %p1688, %s25, 7
        %s1690 = smul.addr %s1687, 8
        %s1691 = sadd.s32 %s1689, %s1690
        %s1692 = scalar_lea.vmem %s4, %s1691
      $region64: #{down_transition_forward.6} parent=51 // pred_fallthru
        _
    $region52: #{down_transition_forward.6} parent=5 // pred_fallthru
      _
  $region6: #{down_transition_forward.6} parent=0 // loop_footer
    %s15 = sadd.s32 1, %s11
  $region7: #{down_transition_forward.6} parent=0 // loop_footer_branch
    %10 = sbr.rel target = $region3
  $region8: #{down_transition_forward.6} parent=0 // loop_exit
    _

// kernel: down_transition_forward.7
$region0: #{down_transition_forward.7}
  #allocation0 [shape = 'u32[]', space=smem, size = 0x4, offset = 0x4, fixed_abs, tag = 'smem constant byte address 0x4 - core index']
  #allocation1 [shape = 'u32[144,128]{1,0:T(1,128)}', space=vmem, size = 0x12000, scoped, tag = 'internal scratch']
  %s0 = inlined_call_operand.vmem [shape: f32[2,8,8,4,128], index: 0, kind: input, shape index: {}]
  %s1 = inlined_call_operand.vmem [shape: f32[1,128], index: 1, kind: input, shape index: {}]
  %s2 = inlined_call_operand.vmem [shape: f32[1,128], index: 2, kind: input, shape index: {}]
  %s3 = inlined_call_operand.vmem [shape: f32[2,8,8,4,128], index: 3, kind: output, shape index: {0}]
  %s4 = inlined_call_operand.hbm [shape: f32[2,4,4,4,64], index: 4, kind: output, shape index: {1}]
  %5 = xla_tuple %s3, %s4
  %s6 = sld [smem:[#allocation0]]
  $region53: #{down_transition_forward.7} parent=0
    _
  %s8 = ssub.s32 1, %s6
  %s9 = scalar_select 0, %s8, %s6
  $region1: #{down_transition_forward.7} parent=0
    #allocation2 [shape = 'u8[16384]{0}', space=vmem, size = 0x4000, scoped, tag = 'output window, operand 1']
    #allocation3 [shape = 's32[2]{0}', space=sflag, size = 0x8, scoped, tag = 'scoped memory for down_transition_forward.7']
    %10 = vsyncpa [#allocation3], 0
    %s11 = scalar_lea.sflag [#allocation3], 1
    %12 = vsyncpa %s11, 0
    loop: start=0, step=1, limit=10
    $region2: #{down_transition_forward.7} parent=1 // loop_pre_header
      _
    $region3: #{down_transition_forward.7} parent=1 // loop_header
      %s14 = sphi 0, %s18
      %p15 = scmp.ge.s32.totalorder %s14, 10
      %s21 = sphi 0, %s33
      %s22 = sphi 0, %s29
      %s23 = sphi 0, %s21
      %s24 = sphi 0, %s22
      %s25 = sphi 0, %s23
      %s26 = sphi 0, %s24
      %s38 = sphi 0, %s40
      %s41 = sphi 0, %s38
      %s42 = sphi 0, %s41
      %s58 = sphi 0, %s42
      %s62 = sphi 0, %s62
      %s64 = sphi 0, %s62
      %s65 = sphi 0, %s64
      %s79 = sphi 0, %s65
      %s83 = sphi 0, %s83
      %s85 = sphi 0, %s83
      %s86 = sphi 0, %s85
      %s100 = sphi 0, %s86
      %s108 = sphi 0, %s110
      %s111 = sphi 0, %s108
      %s112 = sphi 0, %s111
      %s128 = sphi 0, %s112
      %s136 = sphi 0, %s138
      %s139 = sphi 0, %s136
      %s140 = sphi 0, %s139
      %s156 = sphi 0, %s140
    $region4: #{down_transition_forward.7} parent=1 // loop_header_branch
      %17 = sbr.rel (%p15) target = $region8
    $region5: #{down_transition_forward.7} parent=1 // loop_body
      %s19 = ssub.s32 %s14, 1
      %s20 = ssub.s32 %s14, 2
      %s27 = sadd.s32 1, %s22
      %p28 = scmp.ge.s32.totalorder %s27, 4
      %s29 = scalar_select %p28, 0, %s27
      %s30 = sadd.s32 1, %s21
      %s31 = scalar_select %p28, %s30, %s21
      %p32 = scmp.ge.s32.totalorder %s31, 2
      %s33 = scalar_select %p32, 0, %s31
      %s34 = ssub.s32 %s21, %s33
      %s35 = ssub.s32 %s22, %s29
      %s36 = sor.u32 %s34, %s35
      %p37 = scmp.eq.s32.totalorder %s36, 0
      %s39 = sadd.s32 %s38, 1
      %s40 = scalar_select %p37, %s38, %s39
      %p43 = pneg %p37
      %p44 = scmp.eq.s32.totalorder %s14, 7
      %p45 = por %p43, %p44
      %p46 = scmp.ne.s32.totalorder %s38, %s41
      %p47 = scmp.eq.s32.totalorder %s14, 0
      %p48 = por %p46, %p47
      %p49 = scmp.ne.s32.totalorder %s38, %s41
      %p50 = scmp.eq.s32.totalorder %s19, 7
      %p51 = por %p49, %p50
      %p52 = scmp.ne.s32.totalorder %s41, %s42
      %p53 = scmp.eq.s32.totalorder %s19, 0
      %p54 = por %p52, %p53
      %p55 = scmp.ne.s32.totalorder %s41, %s42
      %p56 = scmp.eq.s32.totalorder %s20, 7
      %p57 = por %p55, %p56
      %p59 = scmp.ne.s32.totalorder %s42, %s58
      %p60 = scmp.eq.s32.totalorder %s20, 0
      %p61 = por %p59, %p60
      %s63 = sadd.s32 %s62, 1
      %p66 = scmp.eq.s32.totalorder %s14, 7
      %p67 = scmp.ne.s32.totalorder %s62, %s64
      %p68 = scmp.eq.s32.totalorder %s14, 0
      %p69 = por %p67, %p68
      %p70 = scmp.ne.s32.totalorder %s62, %s64
      %p71 = scmp.eq.s32.totalorder %s19, 7
      %p72 = por %p70, %p71
      %p73 = scmp.ne.s32.totalorder %s64, %s65
      %p74 = scmp.eq.s32.totalorder %s19, 0
      %p75 = por %p73, %p74
      %p76 = scmp.ne.s32.totalorder %s64, %s65
      %p77 = scmp.eq.s32.totalorder %s20, 7
      %p78 = por %p76, %p77
      %p80 = scmp.ne.s32.totalorder %s65, %s79
      %p81 = scmp.eq.s32.totalorder %s20, 0
      %p82 = por %p80, %p81
      %s84 = sadd.s32 %s83, 1
      %p87 = scmp.eq.s32.totalorder %s14, 7
      %p88 = scmp.ne.s32.totalorder %s83, %s85
      %p89 = scmp.eq.s32.totalorder %s14, 0
      %p90 = por %p88, %p89
      %p91 = scmp.ne.s32.totalorder %s83, %s85
      %p92 = scmp.eq.s32.totalorder %s19, 7
      %p93 = por %p91, %p92
      %p94 = scmp.ne.s32.totalorder %s85, %s86
      %p95 = scmp.eq.s32.totalorder %s19, 0
      %p96 = por %p94, %p95
      %p97 = scmp.ne.s32.totalorder %s85, %s86
      %p98 = scmp.eq.s32.totalorder %s20, 7
      %p99 = por %p97, %p98
      %p101 = scmp.ne.s32.totalorder %s86, %s100
      %p102 = scmp.eq.s32.totalorder %s20, 0
      %p103 = por %p101, %p102
      %s104 = ssub.s32 %s21, %s33
      %s105 = ssub.s32 %s22, %s29
      %s106 = sor.u32 %s104, %s105
      %p107 = scmp.eq.s32.totalorder %s106, 0
      %s109 = sadd.s32 %s108, 1
      %s110 = scalar_select %p107, %s108, %s109
      %p113 = pneg %p107
      %p114 = scmp.eq.s32.totalorder %s14, 7
      %p115 = por %p113, %p114
      %p116 = scmp.ne.s32.totalorder %s108, %s111
      %p117 = scmp.eq.s32.totalorder %s14, 0
      %p118 = por %p116, %p117
      %p119 = scmp.ne.s32.totalorder %s108, %s111
      %p120 = scmp.eq.s32.totalorder %s19, 7
      %p121 = por %p119, %p120
      %p122 = scmp.ne.s32.totalorder %s111, %s112
      %p123 = scmp.eq.s32.totalorder %s19, 0
      %p124 = por %p122, %p123
      %p125 = scmp.ne.s32.totalorder %s111, %s112
      %p126 = scmp.eq.s32.totalorder %s20, 7
      %p127 = por %p125, %p126
      %p129 = scmp.ne.s32.totalorder %s112, %s128
      %p130 = scmp.eq.s32.totalorder %s20, 0
      %p131 = por %p129, %p130
      %s132 = ssub.s32 %s21, %s33
      %s133 = ssub.s32 %s22, %s29
      %s134 = sor.u32 %s132, %s133
      %p135 = scmp.eq.s32.totalorder %s134, 0
      %s137 = sadd.s32 %s136, 1
      %s138 = scalar_select %p135, %s136, %s137
      %p141 = pneg %p135
      %p142 = scmp.eq.s32.totalorder %s14, 7
      %p143 = por %p141, %p142
      %p144 = scmp.ne.s32.totalorder %s136, %s139
      %p145 = scmp.eq.s32.totalorder %s14, 0
      %p146 = por %p144, %p145
      %p147 = scmp.ne.s32.totalorder %s136, %s139
      %p148 = scmp.eq.s32.totalorder %s19, 7
      %p149 = por %p147, %p148
      %p150 = scmp.ne.s32.totalorder %s139, %s140
      %p151 = scmp.eq.s32.totalorder %s19, 0
      %p152 = por %p150, %p151
      %p153 = scmp.ne.s32.totalorder %s139, %s140
      %p154 = scmp.eq.s32.totalorder %s20, 7
      %p155 = por %p153, %p154
      %p157 = scmp.ne.s32.totalorder %s140, %s156
      %p158 = scmp.eq.s32.totalorder %s20, 0
      %p159 = por %p157, %p158
      %p160 = scmp.le.s32.totalorder 1, %s14
      %p161 = scmp.lt.s32.totalorder %s14, 9
      %p162 = pnand %p160, %p161
      %p163 = pneg %p162
      // Predicated region
      $region9: #{down_transition_forward.7} parent=5 // pred_check
        _
      $region10: #{down_transition_forward.7} parent=5 // pred_check_branch
        %165 = sbr.rel (%p162) target = $region12
      $region11: #{down_transition_forward.7} parent=5 // pred_region
        %s166 = ssub.s32 %s14, 1
        // Predicated region
        $region13: #{down_transition_forward.7} parent=11 // pred_check
          %p167 = pneg %p75
        $region14: #{down_transition_forward.7} parent=11 // pred_check_branch
          %169 = sbr.rel (%p167) target = $region16
        $region15: #{down_transition_forward.7} parent=11 // pred_region
          _
        $region16: #{down_transition_forward.7} parent=11 // pred_fallthru
          _
        // Predicated region
        $region17: #{down_transition_forward.7} parent=11 // pred_check
          %p170 = pneg %p96
        $region18: #{down_transition_forward.7} parent=11 // pred_check_branch
          %172 = sbr.rel (%p170) target = $region20
        $region19: #{down_transition_forward.7} parent=11 // pred_region
          _
        $region20: #{down_transition_forward.7} parent=11 // pred_fallthru
          _
      $region12: #{down_transition_forward.7} parent=5 // pred_fallthru
        _
      %p173 = scmp.lt.s32.totalorder %s14, 8
      // Predicated region
      $region21: #{down_transition_forward.7} parent=5 // pred_check
        %p174 = pneg %p173
      $region22: #{down_transition_forward.7} parent=5 // pred_check_branch
        %176 = sbr.rel (%p174) target = $region24
      $region23: #{down_transition_forward.7} parent=5 // pred_region
        // Predicated region
        $region25: #{down_transition_forward.7} parent=23 // pred_check
          %p177 = pneg %p48
        $region26: #{down_transition_forward.7} parent=23 // pred_check_branch
          %179 = sbr.rel (%p177) target = $region28
        $region27: #{down_transition_forward.7} parent=23 // pred_region
          %s180 = smul.u32 2, %s22
          %p181 = scmp.lt.s32.totalorder %s21, 1
          %s182 = scalar_select %p181, %s21, 1
          %p183 = scmp.lt.s32.totalorder %s180, 7
          %s184 = scalar_select %p183, %s180, 7
          %s185 = smul.addr %s184, 8
          %s186 = smul.addr %s182, 64
          %s187 = sadd.s32 %s185, %s186
          %s188 = smul.addr %s187, 4
          %s189 = scalar_lea.vmem %s0, %s188
          %s190 = smul.u32 2, %s22
        $region28: #{down_transition_forward.7} parent=23 // pred_fallthru
          _
      $region24: #{down_transition_forward.7} parent=5 // pred_fallthru
        _
      %p191 = scmp.le.s32.totalorder 1, %s14
      %p192 = scmp.lt.s32.totalorder %s14, 9
      %p193 = pnand %p191, %p192
      %p194 = pneg %p193
      // Predicated region
      $region29: #{down_transition_forward.7} parent=5 // pred_check
        _
      $region30: #{down_transition_forward.7} parent=5 // pred_check_branch
        %196 = sbr.rel (%p193) target = $region32
      $region31: #{down_transition_forward.7} parent=5 // pred_region
        %s197 = ssub.s32 %s14, 1
        %s198 = smul.u32 2, %s24
        %p199 = scmp.lt.s32.totalorder %s23, 1
        %s200 = scalar_select %p199, %s23, 1
        %p201 = scmp.lt.s32.totalorder %s198, 7
        %s202 = scalar_select %p201, %s198, 7
        %s203 = smul.addr %s202, 8
        %s204 = smul.addr %s200, 64
        %s205 = sadd.s32 %s203, %s204
        %s206 = smul.addr %s205, 4
        %s207 = scalar_lea.vmem %s0, %s206
        %p208 = pneg %p54
        %p209 = pneg %p51
        %p210 = pneg %p75
        %p211 = pneg %p72
        %p212 = pneg %p96
        %p213 = pneg %p93
        %p214 = pneg %p124
        %p215 = pneg %p121
        %s216 = smul.u32 2, %s24
        %p217 = scmp.lt.s32.totalorder %s23, 1
        %s218 = scalar_select %p217, %s23, 1
        %p219 = scmp.lt.s32.totalorder %s216, 7
        %s220 = scalar_select %p219, %s216, 7
        %s221 = smul.addr %s220, 8
        %s222 = smul.addr %s218, 64
        %s223 = sadd.s32 %s221, %s222
        %s224 = smul.addr %s223, 4
        %s225 = scalar_lea.vmem %s3, %s224
        %p226 = pneg %p152
        %p227 = pneg %p149
        %s228 = sand.u32 %s139, 1
        %s229 = scalar_lea.sflag [#allocation3], %s228
        %s230 = sand.u32 %s139, 1
        %s231 = smul.addr %s230, 16
        %s232 = scalar_lea.vmem [#allocation2], %s231
        %s233 = smul.u32 2, %s24
        %p234 = scmp.lt.s32.totalorder %s23, 1
        %s235 = scalar_select %p234, %s23, 1
        %p236 = scmp.lt.s32.totalorder %s233, 7
        %s237 = scalar_select %p236, %s233, 7
        %s238 = smul.addr %s237, 8
        %s239 = smul.addr %s235, 64
        %s240 = sadd.s32 %s238, %s239
        %s241 = smul.addr %s240, 4
        %s242 = scalar_lea.vmem %s0, %s241
        %s243 = smul.u32 2, %s24
        %s244 = smul.u32 2, %s24
        %p245 = scmp.lt.s32.totalorder %s23, 1
        %s246 = scalar_select %p245, %s23, 1
        %p247 = scmp.lt.s32.totalorder %s244, 7
        %s248 = scalar_select %p247, %s244, 7
        %s249 = smul.addr %s248, 8
        %s250 = smul.addr %s246, 64
        %s251 = sadd.s32 %s249, %s250
        %s252 = smul.addr %s251, 4
        %s253 = scalar_lea.vmem %s3, %s252
        %s254 = smul.u32 2, %s24
        %v255 = vld [vmem:[%s242] sm:$0xf]
        %v256 = vld [vmem:[%s242 + $0x4] sm:$0xf]
        %v257 = vld [vmem:[%s242 + $0x8] sm:$0xf]
        %v258 = vld [vmem:[%s242 + $0xc] sm:$0xf]
        %v259 = vld [vmem:[%s242 + $0x10] sm:$0xf]
        %v260 = vld [vmem:[%s242 + $0x14] sm:$0xf]
        %v261 = vld [vmem:[%s242 + $0x18] sm:$0xf]
        %v262 = vld [vmem:[%s242 + $0x1c] sm:$0xf]
        %v263 = vld [vmem:[%s242 + $0x20] sm:$0xf]
        %v264 = vld [vmem:[%s242 + $0x24] sm:$0xf]
        %v265 = vld [vmem:[%s242 + $0x28] sm:$0xf]
        %v266 = vld [vmem:[%s242 + $0x2c] sm:$0xf]
        %v267 = vld [vmem:[%s242 + $0x30] sm:$0xf]
        %v268 = vld [vmem:[%s242 + $0x34] sm:$0xf]
        %v269 = vld [vmem:[%s242 + $0x38] sm:$0xf]
        %v270 = vld [vmem:[%s242 + $0x3c] sm:$0xf]
        %v271 = vld [vmem:[%s1] sm:$0x1]
        %v273 = vlaneseq
        %v274 = vshrl.u32 %v273, 7
        %v275 = vsub.s32 0, %v274
        %v276 = vrot.slane %v271, %v275
        %v278 = vmul.f32 %v255, %v276
        %v279 = vmul.f32 %v256, %v276
        %v280 = vmul.f32 %v257, %v276
        %v281 = vmul.f32 %v258, %v276
        %v282 = vmul.f32 %v259, %v276
        %v283 = vmul.f32 %v260, %v276
        %v284 = vmul.f32 %v261, %v276
        %v285 = vmul.f32 %v262, %v276
        %v286 = vmul.f32 %v263, %v276
        %v287 = vmul.f32 %v264, %v276
        %v288 = vmul.f32 %v265, %v276
        %v289 = vmul.f32 %v266, %v276
        %v290 = vmul.f32 %v267, %v276
        %v291 = vmul.f32 %v268, %v276
        %v292 = vmul.f32 %v269, %v276
        %v293 = vmul.f32 %v270, %v276
        %v294 = vld [vmem:[%s2] sm:$0x1]
        %v296 = vlaneseq
        %v297 = vshrl.u32 %v296, 7
        %v298 = vsub.s32 0, %v297
        %v299 = vrot.slane %v294, %v298
        %v301 = vadd.f32 %v278, %v299
        %v302 = vadd.f32 %v279, %v299
        %v303 = vadd.f32 %v280, %v299
        %v304 = vadd.f32 %v281, %v299
        %v305 = vadd.f32 %v282, %v299
        %v306 = vadd.f32 %v283, %v299
        %v307 = vadd.f32 %v284, %v299
        %v308 = vadd.f32 %v285, %v299
        %v309 = vadd.f32 %v286, %v299
        %v310 = vadd.f32 %v287, %v299
        %v311 = vadd.f32 %v288, %v299
        %v312 = vadd.f32 %v289, %v299
        %v313 = vadd.f32 %v290, %v299
        %v314 = vadd.f32 %v291, %v299
        %v315 = vadd.f32 %v292, %v299
        %v316 = vadd.f32 %v293, %v299
        %v317 = vmax.f32 %v301, 0.0
        %v318 = vmax.f32 %v302, 0.0
        %v319 = vmax.f32 %v303, 0.0
        %v320 = vmax.f32 %v304, 0.0
        %v321 = vmax.f32 %v305, 0.0
        %v322 = vmax.f32 %v306, 0.0
        %v323 = vmax.f32 %v307, 0.0
        %v324 = vmax.f32 %v308, 0.0
        %v325 = vmax.f32 %v309, 0.0
        %v326 = vmax.f32 %v310, 0.0
        %v327 = vmax.f32 %v311, 0.0
        %v328 = vmax.f32 %v312, 0.0
        %v329 = vmax.f32 %v313, 0.0
        %v330 = vmax.f32 %v314, 0.0
        %v331 = vmax.f32 %v315, 0.0
        %v332 = vmax.f32 %v316, 0.0
        %333 = vst [vmem:[%s253] sm:$0xf] %v317
        %334 = vst [vmem:[%s253 + $0x4] sm:$0xf] %v318
        %335 = vst [vmem:[%s253 + $0x8] sm:$0xf] %v319
        %336 = vst [vmem:[%s253 + $0xc] sm:$0xf] %v320
        %337 = vst [vmem:[%s253 + $0x10] sm:$0xf] %v321
        %338 = vst [vmem:[%s253 + $0x14] sm:$0xf] %v322
        %339 = vst [vmem:[%s253 + $0x18] sm:$0xf] %v323
        %340 = vst [vmem:[%s253 + $0x1c] sm:$0xf] %v324
        %341 = vst [vmem:[%s253 + $0x20] sm:$0xf] %v325
        %342 = vst [vmem:[%s253 + $0x24] sm:$0xf] %v326
        %343 = vst [vmem:[%s253 + $0x28] sm:$0xf] %v327
        %344 = vst [vmem:[%s253 + $0x2c] sm:$0xf] %v328
        %345 = vst [vmem:[%s253 + $0x30] sm:$0xf] %v329
        %346 = vst [vmem:[%s253 + $0x34] sm:$0xf] %v330
        %347 = vst [vmem:[%s253 + $0x38] sm:$0xf] %v331
        %348 = vst [vmem:[%s253 + $0x3c] sm:$0xf] %v332
        %v349 = vmax.f32 %v317, %v325
        %v350 = vmax.f32 %v318, %v326
        %v351 = vmax.f32 %v319, %v327
        %v352 = vmax.f32 %v320, %v328
        %v353 = vmax.f32 %v321, %v329
        %v354 = vmax.f32 %v322, %v330
        %v355 = vmax.f32 %v323, %v331
        %v356 = vmax.f32 %v324, %v332
        %vm357 = vcmask 1043456
        %v358 = vsel %vm357, %v349, -inf
        %v359 = vsel %vm357, %v350, -inf
        %v360 = vmax.f32 %v358, %v359
        %v361 = vsel %vm357, %v351, -inf
        %v362 = vsel %vm357, %v352, -inf
        %v363 = vmax.f32 %v361, %v362
        %v364 = vsel %vm357, %v353, -inf
        %v365 = vsel %vm357, %v354, -inf
        %v366 = vmax.f32 %v364, %v365
        %v367 = vsel %vm357, %v355, -inf
        %v368 = vsel %vm357, %v356, -inf
        %v369 = vmax.f32 %v367, %v368
        %374 = vrot.lane.b32.xlu0 %v360, 64
        %v375 = vpop.permute.xlu0 %374
        %376 = vrot.lane.b32.xlu0 %v363, 64
        %v377 = vpop.permute.xlu0 %376
        %378 = vrot.lane.b32.xlu0 %v366, 64
        %v379 = vpop.permute.xlu0 %378
        %380 = vrot.lane.b32.xlu0 %v369, 64
        %v381 = vpop.permute.xlu0 %380
        %v386 = vmax.f32 %v360, %v375
        %v387 = vmax.f32 %v363, %v377
        %v388 = vmax.f32 %v366, %v379
        %v389 = vmax.f32 %v369, %v381
        %vm390 = vcmask 519168
        %391 = vst.msk [vmem:[%s232] sm:$0xf] %vm390, %v386
        %392 = vst.msk [vmem:[%s232 + $0x4] sm:$0xf] %vm390, %v387
        %393 = vst.msk [vmem:[%s232 + $0x8] sm:$0xf] %vm390, %v388
        %394 = vst.msk [vmem:[%s232 + $0xc] sm:$0xf] %vm390, %v389
        %s395 = smul.u32 2, %s24
        %p396 = scmp.lt.s32.totalorder %s23, 1
        %s397 = scalar_select %p396, %s23, 1
        %p398 = scmp.lt.s32.totalorder %s395, 7
        %s399 = scalar_select %p398, %s395, 7
        %s400 = smul.addr %s399, 8
        %s401 = smul.addr %s397, 64
        %s402 = sadd.s32 %s400, %s401
        %s403 = smul.addr %s402, 4
        %s404 = scalar_lea.vmem %s3, %s403
        %s405 = sand.u32 %s139, 1
        %s406 = scalar_lea.sflag [#allocation3], %s405
        %s407 = sand.u32 %s139, 1
        %s408 = smul.addr %s407, 16
        %s409 = scalar_lea.vmem [#allocation2], %s408
        // Predicated region
        $region33: #{down_transition_forward.7} parent=31 // pred_check
          %p410 = pneg %p121
        $region34: #{down_transition_forward.7} parent=31 // pred_check_branch
          %412 = sbr.rel (%p410) target = $region36
        $region35: #{down_transition_forward.7} parent=31 // pred_region
          %s413 = smul.u32 2, %s24
        $region36: #{down_transition_forward.7} parent=31 // pred_fallthru
          _
        // Predicated region
        $region37: #{down_transition_forward.7} parent=31 // pred_check
          %p414 = pneg %p149
        $region38: #{down_transition_forward.7} parent=31 // pred_check_branch
          %416 = sbr.rel (%p414) target = $region40
        $region39: #{down_transition_forward.7} parent=31 // pred_region
          %s418 = ssub.s32 256, 256
          %419 = vsyncadd %s406, %s418
          %s420 = smul.addr %s24, 4
          %s421 = smul.addr %s23, 16
          %s422 = sadd.s32 %s420, %s421
          %s423 = smul.addr %s422, 64
          %s424 = scalar_lea.hbm %s4, %s423
          %s425 = sshll.u32 %s409, 4
          %s426 = int_to_ptr.vmem [resolvable:$true] %s425
          %431 = dma.vmem_to_hbm [thread:$0]  %s426, 256, %s424, %s406, 64, 64, 4
        $region40: #{down_transition_forward.7} parent=31 // pred_fallthru
          _
      $region32: #{down_transition_forward.7} parent=5 // pred_fallthru
        _
      %p432 = scmp.le.s32.totalorder 2, %s14
      // Predicated region
      $region41: #{down_transition_forward.7} parent=5 // pred_check
        %p433 = pneg %p432
      $region42: #{down_transition_forward.7} parent=5 // pred_check_branch
        %435 = sbr.rel (%p433) target = $region44
      $region43: #{down_transition_forward.7} parent=5 // pred_region
        %s436 = ssub.s32 %s14, 2
        // Predicated region
        $region45: #{down_transition_forward.7} parent=43 // pred_check
          %p437 = pneg %p127
        $region46: #{down_transition_forward.7} parent=43 // pred_check_branch
          %439 = sbr.rel (%p437) target = $region48
        $region47: #{down_transition_forward.7} parent=43 // pred_region
          %s440 = smul.u32 2, %s26
          %p441 = scmp.lt.s32.totalorder %s25, 1
          %s442 = scalar_select %p441, %s25, 1
          %p443 = scmp.lt.s32.totalorder %s440, 7
          %s444 = scalar_select %p443, %s440, 7
          %s445 = smul.addr %s444, 8
          %s446 = smul.addr %s442, 64
          %s447 = sadd.s32 %s445, %s446
          %s448 = smul.addr %s447, 4
          %s449 = scalar_lea.vmem %s3, %s448
        $region48: #{down_transition_forward.7} parent=43 // pred_fallthru
          _
        // Predicated region
        $region49: #{down_transition_forward.7} parent=43 // pred_check
          %p450 = pneg %p155
        $region50: #{down_transition_forward.7} parent=43 // pred_check_branch
          %452 = sbr.rel (%p450) target = $region52
        $region51: #{down_transition_forward.7} parent=43 // pred_region
          %s453 = sand.u32 %s140, 1
          %s454 = scalar_lea.sflag [#allocation3], %s453
          %s455 = sand.u32 %s140, 1
          %s456 = smul.addr %s455, 16
          %s457 = scalar_lea.vmem [#allocation2], %s456
          %458 = dma.done %s454, 256
        $region52: #{down_transition_forward.7} parent=43 // pred_fallthru
          _
      $region44: #{down_transition_forward.7} parent=5 // pred_fallthru
        _
    $region6: #{down_transition_forward.7} parent=1 // loop_footer
      %s18 = sadd.s32 1, %s14
    $region7: #{down_transition_forward.7} parent=1 // loop_footer_branch
      %13 = sbr.rel target = $region3
    $region8: #{down_transition_forward.7} parent=1 // loop_exit
      _
    %459 = vsyncpa [#allocation3], 1
    %s460 = scalar_lea.sflag [#allocation3], 1
    %461 = vsyncpa %s460, 1

</llo_original>
